<compile_context>
chip_gen: v7x
topology: tpu7x:2x2x1
jax: 0.10.0
libtpu: 0.0.40
codegen_flags: <defaults>
</compile_context>

<pallas_src>
import functools

import jax
import jax.numpy as jnp
from jax import lax
from jax.experimental import pallas as pl
from jax.experimental.pallas import tpu as pltpu

_VMEM = pl.BlockSpec(memory_space=pltpu.MemorySpace.VMEM)
_BN_EPS = 1e-5          # torch.nn.BatchNorm2d default
_MXU_DTYPE = jnp.bfloat16


# ----------------------------- Pallas kernels ------------------------------

def _skip_block_kernel(p_ref,
                       w1_ref, g1_ref, be1_ref,
                       w2_ref, g2_ref, be2_ref,
                       ws_ref, gs_ref, bes_ref,
                       out_ref, *, c0, c2, eps):
    """One whole SkipConnection block, fully fused.

    p_ref  : (9*c0, M) bf16  im2col patches of the block input
             (M = N*Ho*Wo; columns ordered (n, ho, wo); rows ordered (tap, cin)).
    out_ref: (2, c2, M) f32  slice 0 = relu(bn2(conv2(relu(bn1(conv1(x)))))),
             slice 1 = relu(bn_s(conv_s(x))).  torch.cat((out, shortcut), 1)
             is a free row-major reshape outside the kernel.

    Conv biases are omitted: with training-mode (batch-stats) BatchNorm a
    per-channel bias cancels exactly against the subtracted batch mean.
    """

    def bn_relu(y, g_ref, be_ref):
        # Training-mode BatchNorm2d: per-channel batch stats over the full
        # N*H*W extent (axis 1), biased variance -- torch's train() path.
        mean = jnp.mean(y, axis=1, keepdims=True)
        var = jnp.mean(jnp.square(y - mean), axis=1, keepdims=True)
        scale = g_ref[...] * lax.rsqrt(var + eps)       # (c, 1)
        shift = be_ref[...] - mean * scale              # (c, 1)
        # relu(cat(a, b)) == cat(relu(a), relu(b)); relu after bn1 is explicit
        # in the reference, so every path gets its ReLU fused here.
        return jnp.maximum(y * scale + shift, 0.0)

    # conv1: 3x3 stride-2 pad-1 as one (c1, 9*c0) x (9*c0, M) MXU matmul,
    # bf16 operands, f32 accumulation.
    # TODO(synk): for block1 (K=9, c1=5) this could also be a VPU tap-sum.
    a = jnp.dot(w1_ref[...], p_ref[...], preferred_element_type=jnp.float32)
    a = bn_relu(a, g1_ref, be1_ref)

    # conv2: 1x1 stride-1.
    b = jnp.dot(w2_ref[...], a.astype(_MXU_DTYPE),
                preferred_element_type=jnp.float32)
    b = bn_relu(b, g2_ref, be2_ref)

    # shortcut conv: 1x1 stride-2.  Its input at every output position equals
    # the centre tap (kh=kw=1) of the 3x3/stride-2 patches -> rows [4*c0, 5*c0).
    xs = p_ref[4 * c0:5 * c0, :]
    if c0 == 1:
        # K=1 contraction: f32 broadcast multiply on the VPU instead of a
        # 1-deep MXU matmul (cheaper on v6e/v7x, f32-only VPU on v5e).
        s = ws_ref[...].astype(jnp.float32) * xs.astype(jnp.float32)
    else:
        s = jnp.dot(ws_ref[...], xs, preferred_element_type=jnp.float32)
    s = bn_relu(s, gs_ref, bes_ref)

    # Two tile-aligned full-slice stores (no mid-tile masked vst.msk).
    out_ref[0] = b
    out_ref[1] = s


def _linear_softmax_kernel(x_ref, w_ref, b_ref, o_ref):
    # x: (N, F) bf16, w: (num_classes, F) bf16 lane-dense, b: (1, num_classes) f32.
    logits = lax.dot_general(
        x_ref[...], w_ref[...],
        dimension_numbers=(((1,), (1,)), ((), ())),
        preferred_element_type=jnp.float32) + b_ref[...]
    m = jnp.max(logits, axis=1, keepdims=True)
    e = jnp.exp(logits - m)
    # Exact divide (NOT approx reciprocal): rows sum to 1 to f32 rounding.
    o_ref[...] = e / jnp.sum(e, axis=1, keepdims=True)


# ------------------------------ kernel wrappers -----------------------------

def skip_block(patches, bp):
    c0 = patches.shape[0] // 9
    c2 = bp["w2"].shape[0]
    m = patches.shape[1]
    kernel = functools.partial(_skip_block_kernel, c0=c0, c2=c2, eps=_BN_EPS)
    out = pl.pallas_call(
        kernel,
        out_shape=jax.ShapeDtypeStruct((2, c2, m), jnp.float32),
        in_specs=[_VMEM] * 10,
        out_specs=_VMEM,
    )(patches,
      bp["w1"], bp["g1"], bp["be1"],
      bp["w2"], bp["g2"], bp["be2"],
      bp["ws"], bp["gs"], bp["bes"])
    # torch.cat((out, shortcut), dim=1): free row-major reshape in XLA.
    return out.reshape(2 * c2, m)


def linear_softmax(x, w, b):
    n, feat = x.shape
    nc = w.shape[0]
    cost = pl.CostEstimate(
        flops=2 * n * feat * nc,
        transcendentals=n * nc,
        bytes_accessed=(n * feat + nc * feat) * 2 + (n * nc + nc) * 4,
    )
    return pl.pallas_call(
        _linear_softmax_kernel,
        out_shape=jax.ShapeDtypeStruct((n, nc), jnp.float32),
        in_specs=[_VMEM] * 3,
        out_specs=_VMEM,
        cost_estimate=cost,
    )(x, w, b)


# ------------------------------- layout glue --------------------------------

def im2col_3x3_s2_p1(x_cnhw):
    """(C, N, H, W) -> (9*C, N*(H//2)*(W//2)) patches.

    Rows ordered (tap, c) with tap = kh*3 + kw; columns ordered (n, ho, wo).
    Pure layout glue -- stays outside the Pallas kernels.
    """
    c, n, h, w = x_cnhw.shape
    ho, wo = h // 2, w // 2
    xp = jnp.pad(x_cnhw, ((0, 0), (0, 0), (1, 1), (1, 1)))
    taps = []
    for kh in range(3):
        for kw in range(3):
            taps.append(
                xp[:, :, kh:kh + h:2, kw:kw + w:2].reshape(c, n * ho * wo))
    return jnp.concatenate(taps, axis=0)


# ------------------------------ model forward --------------------------------

def convnet_forward(x_nchw, prep):
    n = x_nchw.shape[0]
    x = jnp.transpose(x_nchw, (1, 0, 2, 3))                    # (C0, N, H, W)

    # bf16 at the kernel boundary halves the patch DMA bytes (same cast, hoisted).
    p1 = im2col_3x3_s2_p1(x).astype(_MXU_DTYPE)                # (9, N*256) bf16
    o1 = skip_block(p1, prep["block1"])                        # (20, N*256) f32
    o1_cnhw = o1.reshape(20, n, 16, 16)
    out1 = jnp.transpose(o1_cnhw, (1, 0, 2, 3))                # (N, 20, 16, 16)

    p2 = im2col_3x3_s2_p1(o1_cnhw).astype(_MXU_DTYPE)          # (180, N*64) bf16
    o2 = skip_block(p2, prep["block2"])                        # (120, N*64) f32
    out2 = jnp.transpose(o2.reshape(120, n, 8, 8), (1, 0, 2, 3))   # (N,120,8,8)

    # .view(-1, 120*8*8) in NCHW order: per sample, features ordered (c, h, w).
    flat = jnp.transpose(o2.reshape(120, n, 64), (1, 0, 2)).reshape(n, 120 * 64)
    probas = linear_softmax(flat.astype(_MXU_DTYPE), prep["wlin"], prep["blin"])
    return out1, out2, probas


# ------------------------------ parameter init --------------------------------

def init_params(key, num_classes):
    keys = iter(jax.random.split(key, 16))

    def conv(cout, cin, k):
        w = 0.1 * jax.random.normal(next(keys), (cout, cin, k, k), jnp.float32)
        b = 0.1 * jax.random.normal(next(keys), (cout,), jnp.float32)
        return w, b

    def block(c0, c1, c2):
        w1, b1 = conv(c1, c0, 3)
        w2, b2 = conv(c2, c1, 1)
        ws, bs = conv(c2, c0, 1)
        return dict(
            w1=w1, b1=b1, g1=jnp.ones((c1,), jnp.float32), be1=jnp.zeros((c1,), jnp.float32),
            w2=w2, b2=b2, g2=jnp.ones((c2,), jnp.float32), be2=jnp.zeros((c2,), jnp.float32),
            ws=ws, bs=bs, gs=jnp.ones((c2,), jnp.float32), bes=jnp.zeros((c2,), jnp.float32),
        )

    params = dict(block1=block(1, 5, 10), block2=block(20, 40, 60))
    # torch.nn.Linear layout: weight (out_features, in_features).
    params["wlin"] = 0.01 * jax.random.normal(
        next(keys), (num_classes, 120 * 8 * 8), jnp.float32)
    params["blin"] = jnp.zeros((num_classes,), jnp.float32)
    return params


def prepare_params(params):
    """One-time (outside jit) weight reshapes/transposes/casts for the kernels.

    Conv biases (b1/b2/bs) are intentionally NOT forwarded: training-mode
    BatchNorm subtracts the per-channel batch mean, so they cancel exactly.
    (If eval/running-stats mode is ever supported, the biases must come back.)
    """
    def col(v):
        return v.reshape(-1, 1).astype(jnp.float32)

    def prep_block(bp):
        c1, c0 = bp["w1"].shape[0], bp["w1"].shape[1]
        c2 = bp["w2"].shape[0]
        return dict(
            # (Cout, Cin, 3, 3) -> (Cout, kh, kw, Cin) -> (Cout, 9*Cin): matches
            # the (tap, cin) row order of the patches matrix.
            w1=jnp.transpose(bp["w1"], (0, 2, 3, 1)).reshape(c1, 9 * c0).astype(_MXU_DTYPE),
            g1=col(bp["g1"]), be1=col(bp["be1"]),
            w2=bp["w2"].reshape(c2, c1).astype(_MXU_DTYPE),
            g2=col(bp["g2"]), be2=col(bp["be2"]),
            ws=bp["ws"].reshape(c2, c0).astype(_MXU_DTYPE),
            gs=col(bp["gs"]), bes=col(bp["bes"]),
        )

    return dict(
        block1=prep_block(params["block1"]),
        block2=prep_block(params["block2"]),
        # Lane-dense linear weight: (num_classes, 7680) keeps 7680 on lanes.
        wlin=params["wlin"].astype(_MXU_DTYPE),
        blin=params["blin"].reshape(1, -1).astype(jnp.float32),
    )


# ----------------------------------- main -------------------------------------

if __name__ == "__main__":
    num_classes = 10
    key = jax.random.PRNGKey(0)
    xkey, pkey = jax.random.split(key)
    # Spatial size 32, 1 channel so that out2 is 120x8x8 (as Linear(120*8*8) requires).
    x = jax.random.normal(xkey, (2, 1, 32, 32), jnp.float32)
    prep = prepare_params(init_params(pkey, num_classes))

    out1, out2, probas = jax.jit(convnet_forward)(x, prep)
    jax.block_until_ready((out1, out2, probas))

    assert out1.shape == (2, 20, 16, 16)
    assert out2.shape == (2, 120, 8, 8)
    assert probas.shape == (2, num_classes)
    # Block outputs are post-ReLU.
    assert bool(jnp.all(out1 >= 0.0)) and bool(jnp.all(out2 >= 0.0))
    # Exact-division softmax: rows sum to 1 to f32 rounding.
    assert bool(jnp.allclose(jnp.sum(probas, axis=1), 1.0, atol=1e-3))
    print("KERNEL_OK")
</pallas_src>

<mosaic_0001>
module attributes {stable_mosaic.version = 11 : i64} {
  func.func @_skip_block_kernel(%arg0: memref<9x512xbf16, #tpu.memory_space<vmem>>, %arg1: memref<5x9xbf16, #tpu.memory_space<vmem>>, %arg2: memref<5x1xf32, #tpu.memory_space<vmem>>, %arg3: memref<5x1xf32, #tpu.memory_space<vmem>>, %arg4: memref<10x5xbf16, #tpu.memory_space<vmem>>, %arg5: memref<10x1xf32, #tpu.memory_space<vmem>>, %arg6: memref<10x1xf32, #tpu.memory_space<vmem>>, %arg7: memref<10x1xbf16, #tpu.memory_space<vmem>>, %arg8: memref<10x1xf32, #tpu.memory_space<vmem>>, %arg9: memref<10x1xf32, #tpu.memory_space<vmem>>, %arg10: memref<2x10x512xf32, #tpu.memory_space<vmem>>) attributes {dimension_semantics = [], scalar_prefetch = 0 : i64, scratch_operands = 0 : i64, tpu.core_type = #tpu.core_type<tc>} {
    %c0 = arith.constant 0 : index
    %c0_0 = arith.constant 0 : index
    %0 = vector.load %arg1[%c0, %c0_0] : memref<5x9xbf16, #tpu.memory_space<vmem>>, vector<5x9xbf16>
    %c0_1 = arith.constant 0 : index
    %c0_2 = arith.constant 0 : index
    %1 = vector.load %arg0[%c0_1, %c0_2] : memref<9x512xbf16, #tpu.memory_space<vmem>>, vector<9x512xbf16>
    %cst = arith.constant dense<0.000000e+00> : vector<5x512xf32>
    %2 = tpu.matmul %0, %1, %cst {dimension_numbers = #tpu.dot_dimension_numbers<[1], [0], [0], [1], [0, 0, 1, 1], [], []>} : vector<5x9xbf16>, vector<9x512xbf16>, vector<5x512xf32> -> vector<5x512xf32>
    %cst_3 = arith.constant dense<0.000000e+00> : vector<5xf32>
    %3 = vector.multi_reduction <add>, %2, %cst_3 [1] : vector<5x512xf32> to vector<5xf32>
    %4 = vector.shape_cast %3 : vector<5xf32> to vector<5x1xf32>
    %cst_4 = arith.constant 5.120000e+02 : f32
    %5 = vector.broadcast %cst_4 : f32 to vector<5x1xf32>
    %6 = arith.divf %4, %5 : vector<5x1xf32>
    %7 = vector.broadcast %6 : vector<5x1xf32> to vector<5x512xf32>
    %8 = arith.subf %2, %7 : vector<5x512xf32>
    %9 = arith.mulf %8, %8 : vector<5x512xf32>
    %cst_5 = arith.constant dense<0.000000e+00> : vector<5xf32>
    %10 = vector.multi_reduction <add>, %9, %cst_5 [1] : vector<5x512xf32> to vector<5xf32>
    %11 = vector.shape_cast %10 : vector<5xf32> to vector<5x1xf32>
    %cst_6 = arith.constant 5.120000e+02 : f32
    %12 = vector.broadcast %cst_6 : f32 to vector<5x1xf32>
    %13 = arith.divf %11, %12 : vector<5x1xf32>
    %c0_7 = arith.constant 0 : index
    %c0_8 = arith.constant 0 : index
    %14 = vector.load %arg2[%c0_7, %c0_8] : memref<5x1xf32, #tpu.memory_space<vmem>>, vector<5x1xf32>
    %cst_9 = arith.constant 9.99999974E-6 : f32
    %15 = vector.broadcast %cst_9 : f32 to vector<5x1xf32>
    %16 = arith.addf %13, %15 : vector<5x1xf32>
    %17 = math.rsqrt %16 : vector<5x1xf32>
    %18 = arith.mulf %14, %17 : vector<5x1xf32>
    %c0_10 = arith.constant 0 : index
    %c0_11 = arith.constant 0 : index
    %19 = vector.load %arg3[%c0_10, %c0_11] : memref<5x1xf32, #tpu.memory_space<vmem>>, vector<5x1xf32>
    %20 = arith.mulf %6, %18 : vector<5x1xf32>
    %21 = arith.subf %19, %20 : vector<5x1xf32>
    %22 = vector.broadcast %18 : vector<5x1xf32> to vector<5x512xf32>
    %23 = arith.mulf %2, %22 : vector<5x512xf32>
    %24 = vector.broadcast %21 : vector<5x1xf32> to vector<5x512xf32>
    %25 = arith.addf %23, %24 : vector<5x512xf32>
    %cst_12 = arith.constant 0.000000e+00 : f32
    %26 = vector.broadcast %cst_12 : f32 to vector<5x512xf32>
    %27 = arith.maximumf %25, %26 : vector<5x512xf32>
    %c0_13 = arith.constant 0 : index
    %c0_14 = arith.constant 0 : index
    %28 = vector.load %arg4[%c0_13, %c0_14] : memref<10x5xbf16, #tpu.memory_space<vmem>>, vector<10x5xbf16>
    %29 = arith.truncf %27 : vector<5x512xf32> to vector<5x512xbf16>
    %cst_15 = arith.constant dense<0.000000e+00> : vector<10x512xf32>
    %30 = tpu.matmul %28, %29, %cst_15 {dimension_numbers = #tpu.dot_dimension_numbers<[1], [0], [0], [1], [0, 0, 1, 1], [], []>} : vector<10x5xbf16>, vector<5x512xbf16>, vector<10x512xf32> -> vector<10x512xf32>
    %cst_16 = arith.constant dense<0.000000e+00> : vector<10xf32>
    %31 = vector.multi_reduction <add>, %30, %cst_16 [1] : vector<10x512xf32> to vector<10xf32>
    %32 = vector.shape_cast %31 : vector<10xf32> to vector<10x1xf32>
    %cst_17 = arith.constant 5.120000e+02 : f32
    %33 = vector.broadcast %cst_17 : f32 to vector<10x1xf32>
    %34 = arith.divf %32, %33 : vector<10x1xf32>
    %35 = vector.broadcast %34 : vector<10x1xf32> to vector<10x512xf32>
    %36 = arith.subf %30, %35 : vector<10x512xf32>
    %37 = arith.mulf %36, %36 : vector<10x512xf32>
    %cst_18 = arith.constant dense<0.000000e+00> : vector<10xf32>
    %38 = vector.multi_reduction <add>, %37, %cst_18 [1] : vector<10x512xf32> to vector<10xf32>
    %39 = vector.shape_cast %38 : vector<10xf32> to vector<10x1xf32>
    %cst_19 = arith.constant 5.120000e+02 : f32
    %40 = vector.broadcast %cst_19 : f32 to vector<10x1xf32>
    %41 = arith.divf %39, %40 : vector<10x1xf32>
    %c0_20 = arith.constant 0 : index
    %c0_21 = arith.constant 0 : index
    %42 = vector.load %arg5[%c0_20, %c0_21] : memref<10x1xf32, #tpu.memory_space<vmem>>, vector<10x1xf32>
    %cst_22 = arith.constant 9.99999974E-6 : f32
    %43 = vector.broadcast %cst_22 : f32 to vector<10x1xf32>
    %44 = arith.addf %41, %43 : vector<10x1xf32>
    %45 = math.rsqrt %44 : vector<10x1xf32>
    %46 = arith.mulf %42, %45 : vector<10x1xf32>
    %c0_23 = arith.constant 0 : index
    %c0_24 = arith.constant 0 : index
    %47 = vector.load %arg6[%c0_23, %c0_24] : memref<10x1xf32, #tpu.memory_space<vmem>>, vector<10x1xf32>
    %48 = arith.mulf %34, %46 : vector<10x1xf32>
    %49 = arith.subf %47, %48 : vector<10x1xf32>
    %50 = vector.broadcast %46 : vector<10x1xf32> to vector<10x512xf32>
    %51 = arith.mulf %30, %50 : vector<10x512xf32>
    %52 = vector.broadcast %49 : vector<10x1xf32> to vector<10x512xf32>
    %53 = arith.addf %51, %52 : vector<10x512xf32>
    %cst_25 = arith.constant 0.000000e+00 : f32
    %54 = vector.broadcast %cst_25 : f32 to vector<10x512xf32>
    %55 = arith.maximumf %53, %54 : vector<10x512xf32>
    %c4 = arith.constant 4 : index
    %c0_26 = arith.constant 0 : index
    %56 = vector.load %arg0[%c4, %c0_26] : memref<9x512xbf16, #tpu.memory_space<vmem>>, vector<1x512xbf16>
    %c0_27 = arith.constant 0 : index
    %c0_28 = arith.constant 0 : index
    %57 = vector.load %arg7[%c0_27, %c0_28] : memref<10x1xbf16, #tpu.memory_space<vmem>>, vector<10x1xbf16>
    %58 = arith.extf %57 : vector<10x1xbf16> to vector<10x1xf32>
    %59 = arith.extf %56 : vector<1x512xbf16> to vector<1x512xf32>
    %60 = vector.broadcast %58 : vector<10x1xf32> to vector<10x512xf32>
    %61 = vector.broadcast %59 : vector<1x512xf32> to vector<10x512xf32>
    %62 = arith.mulf %60, %61 : vector<10x512xf32>
    %cst_29 = arith.constant dense<0.000000e+00> : vector<10xf32>
    %63 = vector.multi_reduction <add>, %62, %cst_29 [1] : vector<10x512xf32> to vector<10xf32>
    %64 = vector.shape_cast %63 : vector<10xf32> to vector<10x1xf32>
    %cst_30 = arith.constant 5.120000e+02 : f32
    %65 = vector.broadcast %cst_30 : f32 to vector<10x1xf32>
    %66 = arith.divf %64, %65 : vector<10x1xf32>
    %67 = vector.broadcast %66 : vector<10x1xf32> to vector<10x512xf32>
    %68 = arith.subf %62, %67 : vector<10x512xf32>
    %69 = arith.mulf %68, %68 : vector<10x512xf32>
    %cst_31 = arith.constant dense<0.000000e+00> : vector<10xf32>
    %70 = vector.multi_reduction <add>, %69, %cst_31 [1] : vector<10x512xf32> to vector<10xf32>
    %71 = vector.shape_cast %70 : vector<10xf32> to vector<10x1xf32>
    %cst_32 = arith.constant 5.120000e+02 : f32
    %72 = vector.broadcast %cst_32 : f32 to vector<10x1xf32>
    %73 = arith.divf %71, %72 : vector<10x1xf32>
    %c0_33 = arith.constant 0 : index
    %c0_34 = arith.constant 0 : index
    %74 = vector.load %arg8[%c0_33, %c0_34] : memref<10x1xf32, #tpu.memory_space<vmem>>, vector<10x1xf32>
    %cst_35 = arith.constant 9.99999974E-6 : f32
    %75 = vector.broadcast %cst_35 : f32 to vector<10x1xf32>
    %76 = arith.addf %73, %75 : vector<10x1xf32>
    %77 = math.rsqrt %76 : vector<10x1xf32>
    %78 = arith.mulf %74, %77 : vector<10x1xf32>
    %c0_36 = arith.constant 0 : index
    %c0_37 = arith.constant 0 : index
    %79 = vector.load %arg9[%c0_36, %c0_37] : memref<10x1xf32, #tpu.memory_space<vmem>>, vector<10x1xf32>
    %80 = arith.mulf %66, %78 : vector<10x1xf32>
    %81 = arith.subf %79, %80 : vector<10x1xf32>
    %82 = vector.broadcast %78 : vector<10x1xf32> to vector<10x512xf32>
    %83 = arith.mulf %62, %82 : vector<10x512xf32>
    %84 = vector.broadcast %81 : vector<10x1xf32> to vector<10x512xf32>
    %85 = arith.addf %83, %84 : vector<10x512xf32>
    %cst_38 = arith.constant 0.000000e+00 : f32
    %86 = vector.broadcast %cst_38 : f32 to vector<10x512xf32>
    %87 = arith.maximumf %85, %86 : vector<10x512xf32>
    %c0_39 = arith.constant 0 : index
    %c0_40 = arith.constant 0 : index
    %c0_41 = arith.constant 0 : index
    %88 = vector.load %arg10[%c0_39, %c0_40, %c0_41] : memref<2x10x512xf32, #tpu.memory_space<vmem>>, vector<1x10x512xf32>
    %89 = vector.shape_cast %88 : vector<1x10x512xf32> to vector<10x512xf32>
    %90 = vector.shape_cast %55 : vector<10x512xf32> to vector<1x10x512xf32>
    tpu.vector_store %arg10[%c0_39, %c0_40, %c0_41], %90 {strides = array<i32>} : memref<2x10x512xf32, #tpu.memory_space<vmem>>, vector<1x10x512xf32>,
    %c1 = arith.constant 1 : index
    %c0_42 = arith.constant 0 : index
    %c0_43 = arith.constant 0 : index
    %91 = vector.load %arg10[%c1, %c0_42, %c0_43] : memref<2x10x512xf32, #tpu.memory_space<vmem>>, vector<1x10x512xf32>
    %92 = vector.shape_cast %91 : vector<1x10x512xf32> to vector<10x512xf32>
    %93 = vector.shape_cast %87 : vector<10x512xf32> to vector<1x10x512xf32>
    tpu.vector_store %arg10[%c1, %c0_42, %c0_43], %93 {strides = array<i32>} : memref<2x10x512xf32, #tpu.memory_space<vmem>>, vector<1x10x512xf32>,
    return
  }
}

module attributes {stable_mosaic.version = 11 : i64} {
  func.func @_skip_block_kernel(%arg0: memref<180x128xbf16, #tpu.memory_space<vmem>>, %arg1: memref<40x180xbf16, #tpu.memory_space<vmem>>, %arg2: memref<40x1xf32, #tpu.memory_space<vmem>>, %arg3: memref<40x1xf32, #tpu.memory_space<vmem>>, %arg4: memref<60x40xbf16, #tpu.memory_space<vmem>>, %arg5: memref<60x1xf32, #tpu.memory_space<vmem>>, %arg6: memref<60x1xf32, #tpu.memory_space<vmem>>, %arg7: memref<60x20xbf16, #tpu.memory_space<vmem>>, %arg8: memref<60x1xf32, #tpu.memory_space<vmem>>, %arg9: memref<60x1xf32, #tpu.memory_space<vmem>>, %arg10: memref<2x60x128xf32, #tpu.memory_space<vmem>>) attributes {dimension_semantics = [], scalar_prefetch = 0 : i64, scratch_operands = 0 : i64, tpu.core_type = #tpu.core_type<tc>} {
    %c0 = arith.constant 0 : index
    %c0_0 = arith.constant 0 : index
    %0 = vector.load %arg1[%c0, %c0_0] : memref<40x180xbf16, #tpu.memory_space<vmem>>, vector<40x180xbf16>
    %c0_1 = arith.constant 0 : index
    %c0_2 = arith.constant 0 : index
    %1 = vector.load %arg0[%c0_1, %c0_2] : memref<180x128xbf16, #tpu.memory_space<vmem>>, vector<180x128xbf16>
    %cst = arith.constant dense<0.000000e+00> : vector<40x128xf32>
    %2 = tpu.matmul %0, %1, %cst {dimension_numbers = #tpu.dot_dimension_numbers<[1], [0], [0], [1], [0, 0, 1, 1], [], []>} : vector<40x180xbf16>, vector<180x128xbf16>, vector<40x128xf32> -> vector<40x128xf32>
    %cst_3 = arith.constant dense<0.000000e+00> : vector<40xf32>
    %3 = vector.multi_reduction <add>, %2, %cst_3 [1] : vector<40x128xf32> to vector<40xf32>
    %4 = vector.shape_cast %3 : vector<40xf32> to vector<40x1xf32>
    %cst_4 = arith.constant 1.280000e+02 : f32
    %5 = vector.broadcast %cst_4 : f32 to vector<40x1xf32>
    %6 = arith.divf %4, %5 : vector<40x1xf32>
    %7 = vector.broadcast %6 : vector<40x1xf32> to vector<40x128xf32>
    %8 = arith.subf %2, %7 : vector<40x128xf32>
    %9 = arith.mulf %8, %8 : vector<40x128xf32>
    %cst_5 = arith.constant dense<0.000000e+00> : vector<40xf32>
    %10 = vector.multi_reduction <add>, %9, %cst_5 [1] : vector<40x128xf32> to vector<40xf32>
    %11 = vector.shape_cast %10 : vector<40xf32> to vector<40x1xf32>
    %cst_6 = arith.constant 1.280000e+02 : f32
    %12 = vector.broadcast %cst_6 : f32 to vector<40x1xf32>
    %13 = arith.divf %11, %12 : vector<40x1xf32>
    %c0_7 = arith.constant 0 : index
    %c0_8 = arith.constant 0 : index
    %14 = vector.load %arg2[%c0_7, %c0_8] : memref<40x1xf32, #tpu.memory_space<vmem>>, vector<40x1xf32>
    %cst_9 = arith.constant 9.99999974E-6 : f32
    %15 = vector.broadcast %cst_9 : f32 to vector<40x1xf32>
    %16 = arith.addf %13, %15 : vector<40x1xf32>
    %17 = math.rsqrt %16 : vector<40x1xf32>
    %18 = arith.mulf %14, %17 : vector<40x1xf32>
    %c0_10 = arith.constant 0 : index
    %c0_11 = arith.constant 0 : index
    %19 = vector.load %arg3[%c0_10, %c0_11] : memref<40x1xf32, #tpu.memory_space<vmem>>, vector<40x1xf32>
    %20 = arith.mulf %6, %18 : vector<40x1xf32>
    %21 = arith.subf %19, %20 : vector<40x1xf32>
    %22 = vector.broadcast %18 : vector<40x1xf32> to vector<40x128xf32>
    %23 = arith.mulf %2, %22 : vector<40x128xf32>
    %24 = vector.broadcast %21 : vector<40x1xf32> to vector<40x128xf32>
    %25 = arith.addf %23, %24 : vector<40x128xf32>
    %cst_12 = arith.constant 0.000000e+00 : f32
    %26 = vector.broadcast %cst_12 : f32 to vector<40x128xf32>
    %27 = arith.maximumf %25, %26 : vector<40x128xf32>
    %c0_13 = arith.constant 0 : index
    %c0_14 = arith.constant 0 : index
    %28 = vector.load %arg4[%c0_13, %c0_14] : memref<60x40xbf16, #tpu.memory_space<vmem>>, vector<60x40xbf16>
    %29 = arith.truncf %27 : vector<40x128xf32> to vector<40x128xbf16>
    %cst_15 = arith.constant dense<0.000000e+00> : vector<60x128xf32>
    %30 = tpu.matmul %28, %29, %cst_15 {dimension_numbers = #tpu.dot_dimension_numbers<[1], [0], [0], [1], [0, 0, 1, 1], [], []>} : vector<60x40xbf16>, vector<40x128xbf16>, vector<60x128xf32> -> vector<60x128xf32>
    %cst_16 = arith.constant dense<0.000000e+00> : vector<60xf32>
    %31 = vector.multi_reduction <add>, %30, %cst_16 [1] : vector<60x128xf32> to vector<60xf32>
    %32 = vector.shape_cast %31 : vector<60xf32> to vector<60x1xf32>
    %cst_17 = arith.constant 1.280000e+02 : f32
    %33 = vector.broadcast %cst_17 : f32 to vector<60x1xf32>
    %34 = arith.divf %32, %33 : vector<60x1xf32>
    %35 = vector.broadcast %34 : vector<60x1xf32> to vector<60x128xf32>
    %36 = arith.subf %30, %35 : vector<60x128xf32>
    %37 = arith.mulf %36, %36 : vector<60x128xf32>
    %cst_18 = arith.constant dense<0.000000e+00> : vector<60xf32>
    %38 = vector.multi_reduction <add>, %37, %cst_18 [1] : vector<60x128xf32> to vector<60xf32>
    %39 = vector.shape_cast %38 : vector<60xf32> to vector<60x1xf32>
    %cst_19 = arith.constant 1.280000e+02 : f32
    %40 = vector.broadcast %cst_19 : f32 to vector<60x1xf32>
    %41 = arith.divf %39, %40 : vector<60x1xf32>
    %c0_20 = arith.constant 0 : index
    %c0_21 = arith.constant 0 : index
    %42 = vector.load %arg5[%c0_20, %c0_21] : memref<60x1xf32, #tpu.memory_space<vmem>>, vector<60x1xf32>
    %cst_22 = arith.constant 9.99999974E-6 : f32
    %43 = vector.broadcast %cst_22 : f32 to vector<60x1xf32>
    %44 = arith.addf %41, %43 : vector<60x1xf32>
    %45 = math.rsqrt %44 : vector<60x1xf32>
    %46 = arith.mulf %42, %45 : vector<60x1xf32>
    %c0_23 = arith.constant 0 : index
    %c0_24 = arith.constant 0 : index
    %47 = vector.load %arg6[%c0_23, %c0_24] : memref<60x1xf32, #tpu.memory_space<vmem>>, vector<60x1xf32>
    %48 = arith.mulf %34, %46 : vector<60x1xf32>
    %49 = arith.subf %47, %48 : vector<60x1xf32>
    %50 = vector.broadcast %46 : vector<60x1xf32> to vector<60x128xf32>
    %51 = arith.mulf %30, %50 : vector<60x128xf32>
    %52 = vector.broadcast %49 : vector<60x1xf32> to vector<60x128xf32>
    %53 = arith.addf %51, %52 : vector<60x128xf32>
    %cst_25 = arith.constant 0.000000e+00 : f32
    %54 = vector.broadcast %cst_25 : f32 to vector<60x128xf32>
    %55 = arith.maximumf %53, %54 : vector<60x128xf32>
    %c80 = arith.constant 80 : index
    %c0_26 = arith.constant 0 : index
    %56 = vector.load %arg0[%c80, %c0_26] : memref<180x128xbf16, #tpu.memory_space<vmem>>, vector<20x128xbf16>
    %c0_27 = arith.constant 0 : index
    %c0_28 = arith.constant 0 : index
    %57 = vector.load %arg7[%c0_27, %c0_28] : memref<60x20xbf16, #tpu.memory_space<vmem>>, vector<60x20xbf16>
    %cst_29 = arith.constant dense<0.000000e+00> : vector<60x128xf32>
    %58 = tpu.matmul %57, %56, %cst_29 {dimension_numbers = #tpu.dot_dimension_numbers<[1], [0], [0], [1], [0, 0, 1, 1], [], []>} : vector<60x20xbf16>, vector<20x128xbf16>, vector<60x128xf32> -> vector<60x128xf32>
    %cst_30 = arith.constant dense<0.000000e+00> : vector<60xf32>
    %59 = vector.multi_reduction <add>, %58, %cst_30 [1] : vector<60x128xf32> to vector<60xf32>
    %60 = vector.shape_cast %59 : vector<60xf32> to vector<60x1xf32>
    %cst_31 = arith.constant 1.280000e+02 : f32
    %61 = vector.broadcast %cst_31 : f32 to vector<60x1xf32>
    %62 = arith.divf %60, %61 : vector<60x1xf32>
    %63 = vector.broadcast %62 : vector<60x1xf32> to vector<60x128xf32>
    %64 = arith.subf %58, %63 : vector<60x128xf32>
    %65 = arith.mulf %64, %64 : vector<60x128xf32>
    %cst_32 = arith.constant dense<0.000000e+00> : vector<60xf32>
    %66 = vector.multi_reduction <add>, %65, %cst_32 [1] : vector<60x128xf32> to vector<60xf32>
    %67 = vector.shape_cast %66 : vector<60xf32> to vector<60x1xf32>
    %cst_33 = arith.constant 1.280000e+02 : f32
    %68 = vector.broadcast %cst_33 : f32 to vector<60x1xf32>
    %69 = arith.divf %67, %68 : vector<60x1xf32>
    %c0_34 = arith.constant 0 : index
    %c0_35 = arith.constant 0 : index
    %70 = vector.load %arg8[%c0_34, %c0_35] : memref<60x1xf32, #tpu.memory_space<vmem>>, vector<60x1xf32>
    %cst_36 = arith.constant 9.99999974E-6 : f32
    %71 = vector.broadcast %cst_36 : f32 to vector<60x1xf32>
    %72 = arith.addf %69, %71 : vector<60x1xf32>
    %73 = math.rsqrt %72 : vector<60x1xf32>
    %74 = arith.mulf %70, %73 : vector<60x1xf32>
    %c0_37 = arith.constant 0 : index
    %c0_38 = arith.constant 0 : index
    %75 = vector.load %arg9[%c0_37, %c0_38] : memref<60x1xf32, #tpu.memory_space<vmem>>, vector<60x1xf32>
    %76 = arith.mulf %62, %74 : vector<60x1xf32>
    %77 = arith.subf %75, %76 : vector<60x1xf32>
    %78 = vector.broadcast %74 : vector<60x1xf32> to vector<60x128xf32>
    %79 = arith.mulf %58, %78 : vector<60x128xf32>
    %80 = vector.broadcast %77 : vector<60x1xf32> to vector<60x128xf32>
    %81 = arith.addf %79, %80 : vector<60x128xf32>
    %cst_39 = arith.constant 0.000000e+00 : f32
    %82 = vector.broadcast %cst_39 : f32 to vector<60x128xf32>
    %83 = arith.maximumf %81, %82 : vector<60x128xf32>
    %c0_40 = arith.constant 0 : index
    %c0_41 = arith.constant 0 : index
    %c0_42 = arith.constant 0 : index
    %84 = vector.load %arg10[%c0_40, %c0_41, %c0_42] : memref<2x60x128xf32, #tpu.memory_space<vmem>>, vector<1x60x128xf32>
    %85 = vector.shape_cast %84 : vector<1x60x128xf32> to vector<60x128xf32>
    %86 = vector.shape_cast %55 : vector<60x128xf32> to vector<1x60x128xf32>
    tpu.vector_store %arg10[%c0_40, %c0_41, %c0_42], %86 {strides = array<i32>} : memref<2x60x128xf32, #tpu.memory_space<vmem>>, vector<1x60x128xf32>,
    %c1 = arith.constant 1 : index
    %c0_43 = arith.constant 0 : index
    %c0_44 = arith.constant 0 : index
    %87 = vector.load %arg10[%c1, %c0_43, %c0_44] : memref<2x60x128xf32, #tpu.memory_space<vmem>>, vector<1x60x128xf32>
    %88 = vector.shape_cast %87 : vector<1x60x128xf32> to vector<60x128xf32>
    %89 = vector.shape_cast %83 : vector<60x128xf32> to vector<1x60x128xf32>
    tpu.vector_store %arg10[%c1, %c0_43, %c0_44], %89 {strides = array<i32>} : memref<2x60x128xf32, #tpu.memory_space<vmem>>, vector<1x60x128xf32>,
    return
  }
}

module attributes {stable_mosaic.version = 11 : i64} {
  func.func @_linear_softmax_kernel(%arg0: memref<2x7680xbf16, #tpu.memory_space<vmem>>, %arg1: memref<10x7680xbf16, #tpu.memory_space<vmem>>, %arg2: memref<1x10xf32, #tpu.memory_space<vmem>>, %arg3: memref<2x10xf32, #tpu.memory_space<vmem>>) attributes {dimension_semantics = [], scalar_prefetch = 0 : i64, scratch_operands = 0 : i64, tpu.core_type = #tpu.core_type<tc>} {
    %c0 = arith.constant 0 : index
    %c0_0 = arith.constant 0 : index
    %0 = vector.load %arg0[%c0, %c0_0] : memref<2x7680xbf16, #tpu.memory_space<vmem>>, vector<2x7680xbf16>
    %c0_1 = arith.constant 0 : index
    %c0_2 = arith.constant 0 : index
    %1 = vector.load %arg1[%c0_1, %c0_2] : memref<10x7680xbf16, #tpu.memory_space<vmem>>, vector<10x7680xbf16>
    %cst = arith.constant dense<0.000000e+00> : vector<2x10xf32>
    %2 = tpu.matmul %0, %1, %cst {dimension_numbers = #tpu.dot_dimension_numbers<[1], [1], [0], [0], [0, 0, 1, 0], [], []>} : vector<2x7680xbf16>, vector<10x7680xbf16>, vector<2x10xf32> -> vector<2x10xf32>
    %c0_3 = arith.constant 0 : index
    %c0_4 = arith.constant 0 : index
    %3 = vector.load %arg2[%c0_3, %c0_4] : memref<1x10xf32, #tpu.memory_space<vmem>>, vector<1x10xf32>
    %4 = vector.broadcast %3 : vector<1x10xf32> to vector<2x10xf32>
    %5 = arith.addf %2, %4 : vector<2x10xf32>
    %cst_5 = arith.constant dense<0xFF800000> : vector<2xf32>
    %6 = vector.multi_reduction <maximumf>, %5, %cst_5 [1] : vector<2x10xf32> to vector<2xf32>
    %7 = vector.shape_cast %6 : vector<2xf32> to vector<2x1xf32>
    %8 = vector.broadcast %7 : vector<2x1xf32> to vector<2x10xf32>
    %9 = arith.subf %5, %8 : vector<2x10xf32>
    %10 = math.exp %9 : vector<2x10xf32>
    %cst_6 = arith.constant dense<0.000000e+00> : vector<2xf32>
    %11 = vector.multi_reduction <add>, %10, %cst_6 [1] : vector<2x10xf32> to vector<2xf32>
    %12 = vector.shape_cast %11 : vector<2xf32> to vector<2x1xf32>
    %13 = vector.broadcast %12 : vector<2x1xf32> to vector<2x10xf32>
    %14 = arith.divf %10, %13 : vector<2x10xf32>
    %c0_7 = arith.constant 0 : index
    %c0_8 = arith.constant 0 : index
    %15 = vector.load %arg3[%c0_7, %c0_8] : memref<2x10xf32, #tpu.memory_space<vmem>>, vector<2x10xf32>
    tpu.vector_store %arg3[%c0_7, %c0_8], %14 {strides = array<i32>} : memref<2x10xf32, #tpu.memory_space<vmem>>, vector<2x10xf32>,
    return
  }
}

</mosaic_0001>

<llo_original>
// kernel: convnet_forward.3
$region0: #{convnet_forward.3}
  #allocation0 [shape = 'u32[]', space=smem, size = 0x4, offset = 0x4, fixed_abs, tag = 'smem constant byte address 0x4 - core index']
  #allocation1 [shape = 'u32[144,128]{1,0:T(1,128)}', space=vmem, size = 0x12000, scoped, tag = 'internal scratch']
  %s0 = inlined_call_operand.vmem [shape: bf16[9,512], index: 0, kind: input, shape index: {}]
  %s1 = inlined_call_operand.vmem [shape: bf16[5,9], index: 1, kind: input, shape index: {}]
  %s2 = inlined_call_operand.vmem [shape: f32[5,1], index: 2, kind: input, shape index: {}]
  %s3 = inlined_call_operand.vmem [shape: f32[5,1], index: 3, kind: input, shape index: {}]
  %s4 = inlined_call_operand.vmem [shape: bf16[10,5], index: 4, kind: input, shape index: {}]
  %s5 = inlined_call_operand.vmem [shape: f32[10,1], index: 5, kind: input, shape index: {}]
  %s6 = inlined_call_operand.vmem [shape: f32[10,1], index: 6, kind: input, shape index: {}]
  %s7 = inlined_call_operand.vmem [shape: bf16[10,1], index: 7, kind: input, shape index: {}]
  %s8 = inlined_call_operand.vmem [shape: f32[10,1], index: 8, kind: input, shape index: {}]
  %s9 = inlined_call_operand.vmem [shape: f32[10,1], index: 9, kind: input, shape index: {}]
  %s10 = inlined_call_operand.vmem [shape: f32[2,10,512], index: 10, kind: output, shape index: {}]
  %s11 = sld [smem:[#allocation0]]
  $region50: #{convnet_forward.3} parent=0
    _
  %s13 = ssub.s32 1, %s11
  %s14 = scalar_select 0, %s13, %s11
  // Predicated region
  $region2: #{convnet_forward.3} parent=0 // pred_check
    _
  $region3: #{convnet_forward.3} parent=0 // pred_check_branch
    %16 = sbr.rel (0) target = $region5
  $region4: #{convnet_forward.3} parent=0 // pred_region
    _
  $region5: #{convnet_forward.3} parent=0 // pred_fallthru
    _
  // Predicated region
  $region6: #{convnet_forward.3} parent=0 // pred_check
    _
  $region7: #{convnet_forward.3} parent=0 // pred_check_branch
    %18 = sbr.rel (0) target = $region9
  $region8: #{convnet_forward.3} parent=0 // pred_region
    _
  $region9: #{convnet_forward.3} parent=0 // pred_fallthru
    _
  // Predicated region
  $region10: #{convnet_forward.3} parent=0 // pred_check
    _
  $region11: #{convnet_forward.3} parent=0 // pred_check_branch
    %20 = sbr.rel (0) target = $region13
  $region12: #{convnet_forward.3} parent=0 // pred_region
    _
  $region13: #{convnet_forward.3} parent=0 // pred_fallthru
    _
  // Predicated region
  $region14: #{convnet_forward.3} parent=0 // pred_check
    _
  $region15: #{convnet_forward.3} parent=0 // pred_check_branch
    %22 = sbr.rel (0) target = $region17
  $region16: #{convnet_forward.3} parent=0 // pred_region
    _
  $region17: #{convnet_forward.3} parent=0 // pred_fallthru
    _
  // Predicated region
  $region18: #{convnet_forward.3} parent=0 // pred_check
    _
  $region19: #{convnet_forward.3} parent=0 // pred_check_branch
    %24 = sbr.rel (0) target = $region21
  $region20: #{convnet_forward.3} parent=0 // pred_region
    _
  $region21: #{convnet_forward.3} parent=0 // pred_fallthru
    _
  // Predicated region
  $region22: #{convnet_forward.3} parent=0 // pred_check
    _
  $region23: #{convnet_forward.3} parent=0 // pred_check_branch
    %26 = sbr.rel (0) target = $region25
  $region24: #{convnet_forward.3} parent=0 // pred_region
    _
  $region25: #{convnet_forward.3} parent=0 // pred_fallthru
    _
  // Predicated region
  $region26: #{convnet_forward.3} parent=0 // pred_check
    _
  $region27: #{convnet_forward.3} parent=0 // pred_check_branch
    %28 = sbr.rel (0) target = $region29
  $region28: #{convnet_forward.3} parent=0 // pred_region
    _
  $region29: #{convnet_forward.3} parent=0 // pred_fallthru
    _
  // Predicated region
  $region30: #{convnet_forward.3} parent=0 // pred_check
    _
  $region31: #{convnet_forward.3} parent=0 // pred_check_branch
    %30 = sbr.rel (0) target = $region33
  $region32: #{convnet_forward.3} parent=0 // pred_region
    _
  $region33: #{convnet_forward.3} parent=0 // pred_fallthru
    _
  // Predicated region
  $region34: #{convnet_forward.3} parent=0 // pred_check
    _
  $region35: #{convnet_forward.3} parent=0 // pred_check_branch
    %32 = sbr.rel (0) target = $region37
  $region36: #{convnet_forward.3} parent=0 // pred_region
    _
  $region37: #{convnet_forward.3} parent=0 // pred_fallthru
    _
  // Predicated region
  $region38: #{convnet_forward.3} parent=0 // pred_check
    _
  $region39: #{convnet_forward.3} parent=0 // pred_check_branch
    %34 = sbr.rel (0) target = $region41
  $region40: #{convnet_forward.3} parent=0 // pred_region
    _
  $region41: #{convnet_forward.3} parent=0 // pred_fallthru
    _
  %v36 = vld [vmem:[%s1] sm:$0x7]
  %v37 = vld [vmem:[%s0] sm:$0xff]
  %v38 = vld [vmem:[%s0 + $0x8] sm:$0xff]
  %v39 = vld [vmem:[%s0 + $0x10] sm:$0x11]
  %v40 = vld [vmem:[%s0 + $0x18] sm:$0x11]
  %v45 = vunpack.c.l.b16 %v37
  %v46 = vunpack.c.h.b16 %v37
  %v47 = vunpack.c.l.b16 %v38
  %v48 = vunpack.c.h.b16 %v38
  %v49 = vunpack.c.l.b16 %v39
  %v50 = vunpack.c.h.b16 %v39
  %v51 = vunpack.c.l.b16 %v40
  %v52 = vunpack.c.h.b16 %v40
  %v53 = vpack.c.b16 %v49, %v45
  %v54 = vpack.c.b16 %v50, %v46
  %v55 = vpack.c.b16 %v51, %v47
  %v56 = vpack.c.b16 %v52, %v48
  %vm57 = vcmask 72704
  %v59 = vsel %vm57, %v36, 0
  %vm61 = vcmask 1043456
  %vm62 = vcmask 1044480
  %v63 = vsel %vm61, 4294967295, 65535
  %v64 = vsel %vm62, %v63, 0
  %v66 = vand.u32 %v53, %v64
  %v69 = vand.u32 %v54, %v64
  %v72 = vand.u32 %v55, %v64
  %v75 = vand.u32 %v56, %v64
  %77 = vmatprep.subr.bf16.mxu0 %v69
  %78 = vmatpush1.bf16.msra.mxu0 %v66
  %79 = vmatprep.subr.bf16.mxu0 0
  %80 = vmatpush1.bf16.msra.mxu0 0
  %81 = vmatprep.subr.bf16.mxu0 0
  %82 = vmatpush1.bf16.msra.mxu0 0
  %83 = vmatprep.subr.bf16.mxu0 0
  %84 = vmatpush1.bf16.msra.mxu0 0
  %85 = vmatprep.subr.bf16.mxu0 0
  %86 = vmatpush1.bf16.msra.mxu0 0
  %87 = vmatprep.subr.bf16.mxu0 0
  %88 = vmatpush1.bf16.msra.mxu0 0
  %89 = vmatprep.subr.bf16.mxu0 0
  %90 = vmatpush1.bf16.msra.mxu0 0
  %91 = vmatprep.subr.bf16.mxu0 0
  %92 = vmatpush1.bf16.msra.mxu0 0
  %93 = vmatprep.subr.bf16.mxu0 0
  %94 = vmatpush1.bf16.msra.mxu0 0
  %95 = vmatprep.subr.bf16.mxu0 0
  %96 = vmatpush1.bf16.msra.mxu0 0
  %97 = vmatprep.subr.bf16.mxu0 0
  %98 = vmatpush1.bf16.msra.mxu0 0
  %99 = vmatprep.subr.bf16.mxu0 0
  %100 = vmatpush1.bf16.msra.mxu0 0
  %101 = vmatprep.subr.bf16.mxu0 0
  %102 = vmatpush1.bf16.msra.mxu0 0
  %103 = vmatprep.subr.bf16.mxu0 0
  %104 = vmatpush1.bf16.msra.mxu0 0
  %105 = vmatprep.subr.bf16.mxu0 0
  %106 = vmatpush1.bf16.msra.mxu0 0
  %107 = vmatprep.subr.bf16.mxu0 0
  %108 = vmatpush1.bf16.msra.mxu0 0
  %109 = vmatprep.mubr.bf16.mxu0 0
  %110 = vmatmul.mubr.bf16.gmra.mrb[0].mxu0 %v59
  %v111 = vpop.f32.mrb[0].mxu0
  %v112 = vadd.f32 0.0, %v111
  %v113 = vpop.f32.mrb[0].mxu0
  %v114 = vadd.f32 0.0, %v113
  %v115 = vpop.f32.mrb[0].mxu0
  %v116 = vpop.f32.mrb[0].mxu0
  %117 = vdwg.mxu0
  %118 = vmatprep.subr.bf16.mxu0 %v75
  %119 = vmatpush1.bf16.msra.mxu0 %v72
  %120 = vmatprep.subr.bf16.mxu0 0
  %121 = vmatpush1.bf16.msra.mxu0 0
  %122 = vmatprep.subr.bf16.mxu0 0
  %123 = vmatpush1.bf16.msra.mxu0 0
  %124 = vmatprep.subr.bf16.mxu0 0
  %125 = vmatpush1.bf16.msra.mxu0 0
  %126 = vmatprep.subr.bf16.mxu0 0
  %127 = vmatpush1.bf16.msra.mxu0 0
  %128 = vmatprep.subr.bf16.mxu0 0
  %129 = vmatpush1.bf16.msra.mxu0 0
  %130 = vmatprep.subr.bf16.mxu0 0
  %131 = vmatpush1.bf16.msra.mxu0 0
  %132 = vmatprep.subr.bf16.mxu0 0
  %133 = vmatpush1.bf16.msra.mxu0 0
  %134 = vmatprep.subr.bf16.mxu0 0
  %135 = vmatpush1.bf16.msra.mxu0 0
  %136 = vmatprep.subr.bf16.mxu0 0
  %137 = vmatpush1.bf16.msra.mxu0 0
  %138 = vmatprep.subr.bf16.mxu0 0
  %139 = vmatpush1.bf16.msra.mxu0 0
  %140 = vmatprep.subr.bf16.mxu0 0
  %141 = vmatpush1.bf16.msra.mxu0 0
  %142 = vmatprep.subr.bf16.mxu0 0
  %143 = vmatpush1.bf16.msra.mxu0 0
  %144 = vmatprep.subr.bf16.mxu0 0
  %145 = vmatpush1.bf16.msra.mxu0 0
  %146 = vmatprep.subr.bf16.mxu0 0
  %147 = vmatpush1.bf16.msra.mxu0 0
  %148 = vmatprep.subr.bf16.mxu0 0
  %149 = vmatpush1.bf16.msra.mxu0 0
  %150 = vmatprep.mubr.bf16.mxu0 0
  %151 = vmatmul.mubr.bf16.gmra.mrb[0].mxu0 %v59
  %v152 = vpop.f32.mrb[0].mxu0
  %v153 = vadd.f32 0.0, %v152
  %v154 = vpop.f32.mrb[0].mxu0
  %v155 = vadd.f32 0.0, %v154
  %v156 = vpop.f32.mrb[0].mxu0
  %v157 = vpop.f32.mrb[0].mxu0
  %158 = vdwg.mxu0
  %v159 = vsel %vm62, %v112, 0.0
  %v160 = vsel %vm62, %v114, 0.0
  %v161 = vadd.f32 %v159, %v160
  %v162 = vsel %vm62, %v153, 0.0
  %v163 = vadd.f32 %v161, %v162
  %v164 = vsel %vm62, %v155, 0.0
  %v165 = vadd.f32 %v163, %v164
  %166 = vadd.xlane.f32.xlu0 %v165
  %v167 = vpop.xlane.xlu0 %166
  %v168 = vrcp.pop 512.0
  %v169 = vmul.f32 %v167, %v168
  %v170 = vsub.f32 %v112, %v169
  %v171 = vsub.f32 %v114, %v169
  %v172 = vsub.f32 %v153, %v169
  %v173 = vsub.f32 %v155, %v169
  %v174 = vmul.f32 %v170, %v170
  %v175 = vmul.f32 %v171, %v171
  %v176 = vmul.f32 %v172, %v172
  %v177 = vmul.f32 %v173, %v173
  %v178 = vsel %vm62, %v174, 0.0
  %v179 = vsel %vm62, %v175, 0.0
  %v180 = vadd.f32 %v178, %v179
  %v181 = vsel %vm62, %v176, 0.0
  %v182 = vadd.f32 %v180, %v181
  %v183 = vsel %vm62, %v177, 0.0
  %v184 = vadd.f32 %v182, %v183
  %185 = vadd.xlane.f32.xlu0 %v184
  %v186 = vpop.xlane.xlu0 %185
  %v187 = vmul.f32 %v186, %v168
  %v188 = vld [vmem:[%s2] sm:$0x1f]
  %v189 = vadd.f32 %v187, 1e-05
  %v190 = vrsqrt.pop %v189
  %v191 = vmul.f32 %v188, %v190
  %v192 = vld [vmem:[%s3] sm:$0x1f]
  %v193 = vmul.f32 %v169, %v191
  %v194 = vsub.f32 %v192, %v193
  %196 = vset.pattern.permute.xlu0 0
  %197 = vperm.xlu0 %196, %v191
  %v198 = vpop.permute.xlu0 %197
  %v200 = vmul.f32 %v112, %v198
  %v201 = vmul.f32 %v114, %v198
  %v202 = vmul.f32 %v153, %v198
  %v203 = vmul.f32 %v155, %v198
  %205 = vset.pattern.permute.xlu0 0
  %206 = vperm.xlu0 %205, %v194
  %v207 = vpop.permute.xlu0 %206
  %v209 = vadd.f32 %v200, %v207
  %v210 = vadd.f32 %v201, %v207
  %v211 = vadd.f32 %v202, %v207
  %v212 = vadd.f32 %v203, %v207
  %v213 = vmax.f32 %v209, 0.0
  %v214 = vmax.f32 %v210, 0.0
  %v215 = vmax.f32 %v211, 0.0
  %v216 = vmax.f32 %v212, 0.0
  %v217 = vld [vmem:[%s4] sm:$0xf]
  %v218 = vld [vmem:[%s4 + $0x4] sm:$0x1]
  %v219 = vpack.c.bf16 %v213, %v213
  %v220 = vpack.c.bf16 %v214, %v214
  %v221 = vpack.c.bf16 %v215, %v215
  %v222 = vpack.c.bf16 %v216, %v216
  %v225 = vunpack.c.l.b16 %v217
  %v226 = vunpack.c.l.b16 %v218
  %v227 = vpack.c.b16 %v226, %v225
  %vm228 = vcmask 39936
  %v230 = vsel %vm228, %v227, 0
  %vm232 = vcmask 1041408
  %vm233 = vcmask 1042432
  %v234 = vsel %vm232, 4294967295, 65535
  %v235 = vsel %vm233, %v234, 0
  %v237 = vand.u32 %v219, %v235
  %v240 = vand.u32 %v220, %v235
  %v243 = vand.u32 %v221, %v235
  %v246 = vand.u32 %v222, %v235
  %248 = vmatprep.subr.bf16.mxu0 %v240
  %249 = vmatpush1.bf16.msra.mxu0 %v237
  %250 = vmatprep.subr.bf16.mxu0 0
  %251 = vmatpush1.bf16.msra.mxu0 0
  %252 = vmatprep.subr.bf16.mxu0 0
  %253 = vmatpush1.bf16.msra.mxu0 0
  %254 = vmatprep.subr.bf16.mxu0 0
  %255 = vmatpush1.bf16.msra.mxu0 0
  %256 = vmatprep.subr.bf16.mxu0 0
  %257 = vmatpush1.bf16.msra.mxu0 0
  %258 = vmatprep.subr.bf16.mxu0 0
  %259 = vmatpush1.bf16.msra.mxu0 0
  %260 = vmatprep.subr.bf16.mxu0 0
  %261 = vmatpush1.bf16.msra.mxu0 0
  %262 = vmatprep.subr.bf16.mxu0 0
  %263 = vmatpush1.bf16.msra.mxu0 0
  %264 = vmatprep.subr.bf16.mxu0 0
  %265 = vmatpush1.bf16.msra.mxu0 0
  %266 = vmatprep.subr.bf16.mxu0 0
  %267 = vmatpush1.bf16.msra.mxu0 0
  %268 = vmatprep.subr.bf16.mxu0 0
  %269 = vmatpush1.bf16.msra.mxu0 0
  %270 = vmatprep.subr.bf16.mxu0 0
  %271 = vmatpush1.bf16.msra.mxu0 0
  %272 = vmatprep.subr.bf16.mxu0 0
  %273 = vmatpush1.bf16.msra.mxu0 0
  %274 = vmatprep.subr.bf16.mxu0 0
  %275 = vmatpush1.bf16.msra.mxu0 0
  %276 = vmatprep.subr.bf16.mxu0 0
  %277 = vmatpush1.bf16.msra.mxu0 0
  %278 = vmatprep.subr.bf16.mxu0 0
  %279 = vmatpush1.bf16.msra.mxu0 0
  %280 = vmatprep.mubr.bf16.mxu0 0
  %281 = vmatmul.mubr.bf16.gmra.mrb[0].mxu0 %v230
  %v282 = vpop.f32.mrb[0].mxu0
  %v283 = vadd.f32 0.0, %v282
  %v284 = vpop.f32.mrb[0].mxu0
  %v285 = vadd.f32 0.0, %v284
  %v286 = vpop.f32.mrb[0].mxu0
  %v287 = vadd.f32 0.0, %v286
  %v288 = vpop.f32.mrb[0].mxu0
  %v289 = vadd.f32 0.0, %v288
  %290 = vdwg.mxu0
  %291 = vmatprep.subr.bf16.mxu0 %v246
  %292 = vmatpush1.bf16.msra.mxu0 %v243
  %293 = vmatprep.subr.bf16.mxu0 0
  %294 = vmatpush1.bf16.msra.mxu0 0
  %295 = vmatprep.subr.bf16.mxu0 0
  %296 = vmatpush1.bf16.msra.mxu0 0
  %297 = vmatprep.subr.bf16.mxu0 0
  %298 = vmatpush1.bf16.msra.mxu0 0
  %299 = vmatprep.subr.bf16.mxu0 0
  %300 = vmatpush1.bf16.msra.mxu0 0
  %301 = vmatprep.subr.bf16.mxu0 0
  %302 = vmatpush1.bf16.msra.mxu0 0
  %303 = vmatprep.subr.bf16.mxu0 0
  %304 = vmatpush1.bf16.msra.mxu0 0
  %305 = vmatprep.subr.bf16.mxu0 0
  %306 = vmatpush1.bf16.msra.mxu0 0
  %307 = vmatprep.subr.bf16.mxu0 0
  %308 = vmatpush1.bf16.msra.mxu0 0
  %309 = vmatprep.subr.bf16.mxu0 0
  %310 = vmatpush1.bf16.msra.mxu0 0
  %311 = vmatprep.subr.bf16.mxu0 0
  %312 = vmatpush1.bf16.msra.mxu0 0
  %313 = vmatprep.subr.bf16.mxu0 0
  %314 = vmatpush1.bf16.msra.mxu0 0
  %315 = vmatprep.subr.bf16.mxu0 0
  %316 = vmatpush1.bf16.msra.mxu0 0
  %317 = vmatprep.subr.bf16.mxu0 0
  %318 = vmatpush1.bf16.msra.mxu0 0
  %319 = vmatprep.subr.bf16.mxu0 0
  %320 = vmatpush1.bf16.msra.mxu0 0
  %321 = vmatprep.subr.bf16.mxu0 0
  %322 = vmatpush1.bf16.msra.mxu0 0
  %323 = vmatprep.mubr.bf16.mxu0 0
  %324 = vmatmul.mubr.bf16.gmra.mrb[0].mxu0 %v230
  %v325 = vpop.f32.mrb[0].mxu0
  %v326 = vadd.f32 0.0, %v325
  %v327 = vpop.f32.mrb[0].mxu0
  %v328 = vadd.f32 0.0, %v327
  %v329 = vpop.f32.mrb[0].mxu0
  %v330 = vadd.f32 0.0, %v329
  %v331 = vpop.f32.mrb[0].mxu0
  %v332 = vadd.f32 0.0, %v331
  %333 = vdwg.mxu0
  %v334 = vadd.f32 %v283, %v285
  %v335 = vadd.f32 %v334, %v326
  %v336 = vadd.f32 %v335, %v328
  %337 = vadd.xlane.f32.xlu0 %v336
  %v338 = vpop.xlane.xlu0 %337
  %v339 = vsel %vm232, %v287, 0.0
  %v340 = vsel %vm232, %v289, 0.0
  %v341 = vadd.f32 %v339, %v340
  %v342 = vsel %vm232, %v330, 0.0
  %v343 = vadd.f32 %v341, %v342
  %v344 = vsel %vm232, %v332, 0.0
  %v345 = vadd.f32 %v343, %v344
  %346 = vadd.xlane.f32.xlu0 %v345
  %v347 = vpop.xlane.xlu0 %346
  %v348 = vmul.f32 %v338, %v168
  %v349 = vmul.f32 %v347, %v168
  %v350 = vsub.f32 %v283, %v348
  %v351 = vsub.f32 %v285, %v348
  %v352 = vsub.f32 %v326, %v348
  %v353 = vsub.f32 %v328, %v348
  %v354 = vsub.f32 %v287, %v349
  %v355 = vsub.f32 %v289, %v349
  %v356 = vsub.f32 %v330, %v349
  %v357 = vsub.f32 %v332, %v349
  %v358 = vmul.f32 %v350, %v350
  %v359 = vmul.f32 %v351, %v351
  %v360 = vmul.f32 %v352, %v352
  %v361 = vmul.f32 %v353, %v353
  %v362 = vmul.f32 %v354, %v354
  %v363 = vmul.f32 %v355, %v355
  %v364 = vmul.f32 %v356, %v356
  %v365 = vmul.f32 %v357, %v357
  %v366 = vadd.f32 %v358, %v359
  %v367 = vadd.f32 %v366, %v360
  %v368 = vadd.f32 %v367, %v361
  %369 = vadd.xlane.f32.xlu0 %v368
  %v370 = vpop.xlane.xlu0 %369
  %v371 = vsel %vm232, %v362, 0.0
  %v372 = vsel %vm232, %v363, 0.0
  %v373 = vadd.f32 %v371, %v372
  %v374 = vsel %vm232, %v364, 0.0
  %v375 = vadd.f32 %v373, %v374
  %v376 = vsel %vm232, %v365, 0.0
  %v377 = vadd.f32 %v375, %v376
  %378 = vadd.xlane.f32.xlu0 %v377
  %v379 = vpop.xlane.xlu0 %378
  %v380 = vmul.f32 %v370, %v168
  %v381 = vmul.f32 %v379, %v168
  %v382 = vld [vmem:[%s5] sm:$0xff]
  %v383 = vld [vmem:[%s5 + $0x8] sm:$0x3]
  %v384 = vadd.f32 %v380, 1e-05
  %v385 = vadd.f32 %v381, 1e-05
  %v386 = vrsqrt.pop %v384
  %v387 = vrsqrt.pop %v385
  %v388 = vmul.f32 %v382, %v386
  %v389 = vmul.f32 %v383, %v387
  %v390 = vld [vmem:[%s6] sm:$0xff]
  %v391 = vld [vmem:[%s6 + $0x8] sm:$0x3]
  %v392 = vmul.f32 %v348, %v388
  %v393 = vmul.f32 %v349, %v389
  %v394 = vsub.f32 %v390, %v392
  %v395 = vsub.f32 %v391, %v393
  %397 = vset.pattern.permute.xlu0 0
  %398 = vperm.xlu0 %397, %v388
  %v399 = vpop.permute.xlu0 %398
  %402 = vset.pattern.permute.xlu0 0
  %403 = vperm.xlu0 %402, %v389
  %v404 = vpop.permute.xlu0 %403
  %v406 = vmul.f32 %v283, %v399
  %v407 = vmul.f32 %v285, %v399
  %v408 = vmul.f32 %v326, %v399
  %v409 = vmul.f32 %v328, %v399
  %v410 = vmul.f32 %v287, %v404
  %v411 = vmul.f32 %v289, %v404
  %v412 = vmul.f32 %v330, %v404
  %v413 = vmul.f32 %v332, %v404
  %415 = vset.pattern.permute.xlu0 0
  %416 = vperm.xlu0 %415, %v394
  %v417 = vpop.permute.xlu0 %416
  %420 = vset.pattern.permute.xlu0 0
  %421 = vperm.xlu0 %420, %v395
  %v422 = vpop.permute.xlu0 %421
  %v424 = vadd.f32 %v406, %v417
  %v425 = vadd.f32 %v407, %v417
  %v426 = vadd.f32 %v408, %v417
  %v427 = vadd.f32 %v409, %v417
  %v428 = vadd.f32 %v410, %v422
  %v429 = vadd.f32 %v411, %v422
  %v430 = vadd.f32 %v412, %v422
  %v431 = vadd.f32 %v413, %v422
  %v432 = vmax.f32 %v424, 0.0
  %v433 = vmax.f32 %v425, 0.0
  %v434 = vmax.f32 %v426, 0.0
  %v435 = vmax.f32 %v427, 0.0
  %v436 = vmax.f32 %v428, 0.0
  %v437 = vmax.f32 %v429, 0.0
  %v438 = vmax.f32 %v430, 0.0
  %v439 = vmax.f32 %v431, 0.0
  %v440 = vld [vmem:[%s0] sm:$0x44]
  %v441 = vld [vmem:[%s0 + $0x8] sm:$0x44]
  %v442 = vld [vmem:[%s7] sm:$0xf]
  %v443 = vld [vmem:[%s7 + $0x4] sm:$0x1]
  %v444 = vunpack.c.l.bf16 %v442
  %v445 = vunpack.c.l.bf16 %v443
  %v446 = vunpack.c.l.bf16 %v440
  %v447 = vunpack.c.h.bf16 %v440
  %v448 = vunpack.c.l.bf16 %v441
  %v449 = vunpack.c.h.bf16 %v441
  %451 = vset.pattern.permute.xlu0 0
  %452 = vperm.xlu0 %451, %v444
  %v453 = vpop.permute.xlu0 %452
  %456 = vset.pattern.permute.xlu0 0
  %457 = vperm.xlu0 %456, %v445
  %v458 = vpop.permute.xlu0 %457
  %v460 = vlaneseq
  %v461 = vshrl.u32 %v460, 7
  %v462 = vsub.s32 4, %v461
  %v463 = vrot.slane %v446, %v462
  %v464 = vlaneseq
  %v465 = vshrl.u32 %v464, 7
  %v466 = vsub.s32 4, %v465
  %v467 = vrot.slane %v447, %v466
  %v468 = vlaneseq
  %v469 = vshrl.u32 %v468, 7
  %v470 = vsub.s32 4, %v469
  %v471 = vrot.slane %v448, %v470
  %v472 = vlaneseq
  %v473 = vshrl.u32 %v472, 7
  %v474 = vsub.s32 4, %v473
  %v475 = vrot.slane %v449, %v474
  %v476 = vmul.f32 %v453, %v463
  %v477 = vmul.f32 %v453, %v467
  %v478 = vmul.f32 %v453, %v471
  %v479 = vmul.f32 %v453, %v475
  %v480 = vmul.f32 %v458, %v463
  %v481 = vmul.f32 %v458, %v467
  %v482 = vmul.f32 %v458, %v471
  %v483 = vmul.f32 %v458, %v475
  %v484 = vadd.f32 %v476, %v477
  %v485 = vadd.f32 %v484, %v478
  %v486 = vadd.f32 %v485, %v479
  %487 = vadd.xlane.f32.xlu0 %v486
  %v488 = vpop.xlane.xlu0 %487
  %v489 = vsel %vm232, %v480, 0.0
  %v490 = vsel %vm232, %v481, 0.0
  %v491 = vadd.f32 %v489, %v490
  %v492 = vsel %vm232, %v482, 0.0
  %v493 = vadd.f32 %v491, %v492
  %v494 = vsel %vm232, %v483, 0.0
  %v495 = vadd.f32 %v493, %v494
  %496 = vadd.xlane.f32.xlu0 %v495
  %v497 = vpop.xlane.xlu0 %496
  %v498 = vmul.f32 %v488, %v168
  %v499 = vmul.f32 %v497, %v168
  %v500 = vsub.f32 %v476, %v498
  %v501 = vsub.f32 %v477, %v498
  %v502 = vsub.f32 %v478, %v498
  %v503 = vsub.f32 %v479, %v498
  %v504 = vsub.f32 %v480, %v499
  %v505 = vsub.f32 %v481, %v499
  %v506 = vsub.f32 %v482, %v499
  %v507 = vsub.f32 %v483, %v499
  %v508 = vmul.f32 %v500, %v500
  %v509 = vmul.f32 %v501, %v501
  %v510 = vmul.f32 %v502, %v502
  %v511 = vmul.f32 %v503, %v503
  %v512 = vmul.f32 %v504, %v504
  %v513 = vmul.f32 %v505, %v505
  %v514 = vmul.f32 %v506, %v506
  %v515 = vmul.f32 %v507, %v507
  %v516 = vadd.f32 %v508, %v509
  %v517 = vadd.f32 %v516, %v510
  %v518 = vadd.f32 %v517, %v511
  %519 = vadd.xlane.f32.xlu0 %v518
  %v520 = vpop.xlane.xlu0 %519
  %v521 = vsel %vm232, %v512, 0.0
  %v522 = vsel %vm232, %v513, 0.0
  %v523 = vadd.f32 %v521, %v522
  %v524 = vsel %vm232, %v514, 0.0
  %v525 = vadd.f32 %v523, %v524
  %v526 = vsel %vm232, %v515, 0.0
  %v527 = vadd.f32 %v525, %v526
  %528 = vadd.xlane.f32.xlu0 %v527
  %v529 = vpop.xlane.xlu0 %528
  %v530 = vmul.f32 %v520, %v168
  %v531 = vmul.f32 %v529, %v168
  %v532 = vld [vmem:[%s8] sm:$0xff]
  %v533 = vld [vmem:[%s8 + $0x8] sm:$0x3]
  %v534 = vadd.f32 %v530, 1e-05
  %v535 = vadd.f32 %v531, 1e-05
  %v536 = vrsqrt.pop %v534
  %v537 = vrsqrt.pop %v535
  %v538 = vmul.f32 %v532, %v536
  %v539 = vmul.f32 %v533, %v537
  %v540 = vld [vmem:[%s9] sm:$0xff]
  %v541 = vld [vmem:[%s9 + $0x8] sm:$0x3]
  %v542 = vmul.f32 %v498, %v538
  %v543 = vmul.f32 %v499, %v539
  %v544 = vsub.f32 %v540, %v542
  %v545 = vsub.f32 %v541, %v543
  %547 = vset.pattern.permute.xlu0 0
  %548 = vperm.xlu0 %547, %v538
  %v549 = vpop.permute.xlu0 %548
  %552 = vset.pattern.permute.xlu0 0
  %553 = vperm.xlu0 %552, %v539
  %v554 = vpop.permute.xlu0 %553
  %v556 = vmul.f32 %v476, %v549
  %v557 = vmul.f32 %v477, %v549
  %v558 = vmul.f32 %v478, %v549
  %v559 = vmul.f32 %v479, %v549
  %v560 = vmul.f32 %v480, %v554
  %v561 = vmul.f32 %v481, %v554
  %v562 = vmul.f32 %v482, %v554
  %v563 = vmul.f32 %v483, %v554
  %565 = vset.pattern.permute.xlu0 0
  %566 = vperm.xlu0 %565, %v544
  %v567 = vpop.permute.xlu0 %566
  %570 = vset.pattern.permute.xlu0 0
  %571 = vperm.xlu0 %570, %v545
  %v572 = vpop.permute.xlu0 %571
  %v574 = vadd.f32 %v556, %v567
  %v575 = vadd.f32 %v557, %v567
  %v576 = vadd.f32 %v558, %v567
  %v577 = vadd.f32 %v559, %v567
  %v578 = vadd.f32 %v560, %v572
  %v579 = vadd.f32 %v561, %v572
  %v580 = vadd.f32 %v562, %v572
  %v581 = vadd.f32 %v563, %v572
  %v582 = vmax.f32 %v574, 0.0
  %v583 = vmax.f32 %v575, 0.0
  %v584 = vmax.f32 %v576, 0.0
  %v585 = vmax.f32 %v577, 0.0
  %v586 = vmax.f32 %v578, 0.0
  %v587 = vmax.f32 %v579, 0.0
  %v588 = vmax.f32 %v580, 0.0
  %v589 = vmax.f32 %v581, 0.0
  %590 = vst [vmem:[%s10] sm:$0xff] %v432
  %591 = vst [vmem:[%s10 + $0x8] sm:$0xff] %v433
  %592 = vst [vmem:[%s10 + $0x10] sm:$0xff] %v434
  %593 = vst [vmem:[%s10 + $0x18] sm:$0xff] %v435
  %594 = vst [vmem:[%s10 + $0x20] sm:$0x3] %v436
  %595 = vst [vmem:[%s10 + $0x28] sm:$0x3] %v437
  %596 = vst [vmem:[%s10 + $0x30] sm:$0x3] %v438
  %597 = vst [vmem:[%s10 + $0x38] sm:$0x3] %v439
  %s598 = scalar_lea.vmem %s10, 64
  %599 = vst [vmem:[%s598] sm:$0xff] %v582
  %600 = vst [vmem:[%s598 + $0x8] sm:$0xff] %v583
  %601 = vst [vmem:[%s598 + $0x10] sm:$0xff] %v584
  %602 = vst [vmem:[%s598 + $0x18] sm:$0xff] %v585
  %603 = vst [vmem:[%s598 + $0x20] sm:$0x3] %v586
  %604 = vst [vmem:[%s598 + $0x28] sm:$0x3] %v587
  %605 = vst [vmem:[%s598 + $0x30] sm:$0x3] %v588
  %606 = vst [vmem:[%s598 + $0x38] sm:$0x3] %v589
  // Predicated region
  $region42: #{convnet_forward.3} parent=0 // pred_check
    _
  $region43: #{convnet_forward.3} parent=0 // pred_check_branch
    %608 = sbr.rel (0) target = $region45
  $region44: #{convnet_forward.3} parent=0 // pred_region
    _
  $region45: #{convnet_forward.3} parent=0 // pred_fallthru
    _
  // Predicated region
  $region46: #{convnet_forward.3} parent=0 // pred_check
    _
  $region47: #{convnet_forward.3} parent=0 // pred_check_branch
    %610 = sbr.rel (0) target = $region49
  $region48: #{convnet_forward.3} parent=0 // pred_region
    _
  $region49: #{convnet_forward.3} parent=0 // pred_fallthru
    _

// kernel: convnet_forward.4
$region0: #{convnet_forward.4}
  #allocation0 [shape = 'u32[]', space=smem, size = 0x4, offset = 0x4, fixed_abs, tag = 'smem constant byte address 0x4 - core index']
  #allocation1 [shape = 'u32[144,128]{1,0:T(1,128)}', space=vmem, size = 0x12000, scoped, tag = 'internal scratch']
  %s0 = inlined_call_operand.vmem [shape: bf16[180,128], index: 0, kind: input, shape index: {}]
  %s1 = inlined_call_operand.vmem [shape: bf16[40,180], index: 1, kind: input, shape index: {}]
  %s2 = inlined_call_operand.vmem [shape: f32[40,1], index: 2, kind: input, shape index: {}]
  %s3 = inlined_call_operand.vmem [shape: f32[40,1], index: 3, kind: input, shape index: {}]
  %s4 = inlined_call_operand.vmem [shape: bf16[60,40], index: 4, kind: input, shape index: {}]
  %s5 = inlined_call_operand.vmem [shape: f32[60,1], index: 5, kind: input, shape index: {}]
  %s6 = inlined_call_operand.vmem [shape: f32[60,1], index: 6, kind: input, shape index: {}]
  %s7 = inlined_call_operand.vmem [shape: bf16[60,20], index: 7, kind: input, shape index: {}]
  %s8 = inlined_call_operand.vmem [shape: f32[60,1], index: 8, kind: input, shape index: {}]
  %s9 = inlined_call_operand.vmem [shape: f32[60,1], index: 9, kind: input, shape index: {}]
  %s10 = inlined_call_operand.vmem [shape: f32[2,60,128], index: 10, kind: output, shape index: {}]
  %s11 = sld [smem:[#allocation0]]
  $region50: #{convnet_forward.4} parent=0
    _
  %s13 = ssub.s32 1, %s11
  %s14 = scalar_select 0, %s13, %s11
  // Predicated region
  $region2: #{convnet_forward.4} parent=0 // pred_check
    _
  $region3: #{convnet_forward.4} parent=0 // pred_check_branch
    %16 = sbr.rel (0) target = $region5
  $region4: #{convnet_forward.4} parent=0 // pred_region
    _
  $region5: #{convnet_forward.4} parent=0 // pred_fallthru
    _
  // Predicated region
  $region6: #{convnet_forward.4} parent=0 // pred_check
    _
  $region7: #{convnet_forward.4} parent=0 // pred_check_branch
    %18 = sbr.rel (0) target = $region9
  $region8: #{convnet_forward.4} parent=0 // pred_region
    _
  $region9: #{convnet_forward.4} parent=0 // pred_fallthru
    _
  // Predicated region
  $region10: #{convnet_forward.4} parent=0 // pred_check
    _
  $region11: #{convnet_forward.4} parent=0 // pred_check_branch
    %20 = sbr.rel (0) target = $region13
  $region12: #{convnet_forward.4} parent=0 // pred_region
    _
  $region13: #{convnet_forward.4} parent=0 // pred_fallthru
    _
  // Predicated region
  $region14: #{convnet_forward.4} parent=0 // pred_check
    _
  $region15: #{convnet_forward.4} parent=0 // pred_check_branch
    %22 = sbr.rel (0) target = $region17
  $region16: #{convnet_forward.4} parent=0 // pred_region
    _
  $region17: #{convnet_forward.4} parent=0 // pred_fallthru
    _
  // Predicated region
  $region18: #{convnet_forward.4} parent=0 // pred_check
    _
  $region19: #{convnet_forward.4} parent=0 // pred_check_branch
    %24 = sbr.rel (0) target = $region21
  $region20: #{convnet_forward.4} parent=0 // pred_region
    _
  $region21: #{convnet_forward.4} parent=0 // pred_fallthru
    _
  // Predicated region
  $region22: #{convnet_forward.4} parent=0 // pred_check
    _
  $region23: #{convnet_forward.4} parent=0 // pred_check_branch
    %26 = sbr.rel (0) target = $region25
  $region24: #{convnet_forward.4} parent=0 // pred_region
    _
  $region25: #{convnet_forward.4} parent=0 // pred_fallthru
    _
  // Predicated region
  $region26: #{convnet_forward.4} parent=0 // pred_check
    _
  $region27: #{convnet_forward.4} parent=0 // pred_check_branch
    %28 = sbr.rel (0) target = $region29
  $region28: #{convnet_forward.4} parent=0 // pred_region
    _
  $region29: #{convnet_forward.4} parent=0 // pred_fallthru
    _
  // Predicated region
  $region30: #{convnet_forward.4} parent=0 // pred_check
    _
  $region31: #{convnet_forward.4} parent=0 // pred_check_branch
    %30 = sbr.rel (0) target = $region33
  $region32: #{convnet_forward.4} parent=0 // pred_region
    _
  $region33: #{convnet_forward.4} parent=0 // pred_fallthru
    _
  // Predicated region
  $region34: #{convnet_forward.4} parent=0 // pred_check
    _
  $region35: #{convnet_forward.4} parent=0 // pred_check_branch
    %32 = sbr.rel (0) target = $region37
  $region36: #{convnet_forward.4} parent=0 // pred_region
    _
  $region37: #{convnet_forward.4} parent=0 // pred_fallthru
    _
  // Predicated region
  $region38: #{convnet_forward.4} parent=0 // pred_check
    _
  $region39: #{convnet_forward.4} parent=0 // pred_check_branch
    %34 = sbr.rel (0) target = $region41
  $region40: #{convnet_forward.4} parent=0 // pred_region
    _
  $region41: #{convnet_forward.4} parent=0 // pred_fallthru
    _
  %v36 = vld [vmem:[%s1] sm:$0xff]
  %v37 = vld [vmem:[%s1 + $0x8] sm:$0xff]
  %v38 = vld [vmem:[%s1 + $0x10] sm:$0xff]
  %v39 = vld [vmem:[%s1 + $0x18] sm:$0xff]
  %v40 = vld [vmem:[%s1 + $0x20] sm:$0xff]
  %v41 = vld [vmem:[%s0] sm:$0xf]
  %v42 = vld [vmem:[%s0 + $0x4] sm:$0xf]
  %v43 = vld [vmem:[%s0 + $0x8] sm:$0xf]
  %v44 = vld [vmem:[%s0 + $0xc] sm:$0xf]
  %v45 = vld [vmem:[%s0 + $0x10] sm:$0xf]
  %v46 = vld [vmem:[%s0 + $0x14] sm:$0xf]
  %v47 = vld [vmem:[%s0 + $0x18] sm:$0xf]
  %v48 = vld [vmem:[%s0 + $0x1c] sm:$0xf]
  %v49 = vld [vmem:[%s0 + $0x20] sm:$0xf]
  %v50 = vld [vmem:[%s0 + $0x24] sm:$0xf]
  %v51 = vld [vmem:[%s0 + $0x28] sm:$0xf]
  %v52 = vld [vmem:[%s0 + $0x2c] sm:$0xf]
  %v53 = vld [vmem:[%s0 + $0x30] sm:$0xf]
  %v54 = vld [vmem:[%s0 + $0x34] sm:$0xf]
  %v55 = vld [vmem:[%s0 + $0x38] sm:$0xf]
  %v56 = vld [vmem:[%s0 + $0x3c] sm:$0xf]
  %v57 = vld [vmem:[%s0 + $0x40] sm:$0xf]
  %v58 = vld [vmem:[%s0 + $0x44] sm:$0xf]
  %v59 = vld [vmem:[%s0 + $0x48] sm:$0xf]
  %v60 = vld [vmem:[%s0 + $0x4c] sm:$0xf]
  %v61 = vld [vmem:[%s0 + $0x50] sm:$0xf]
  %v62 = vld [vmem:[%s0 + $0x54] sm:$0xf]
  %v63 = vld [vmem:[%s0 + $0x58] sm:$0x3]
  %v69 = vunpack.c.l.b16 %v36
  %v70 = vunpack.c.h.b16 %v36
  %v71 = vunpack.c.l.b16 %v37
  %v72 = vunpack.c.h.b16 %v37
  %v73 = vunpack.c.l.b16 %v38
  %v74 = vunpack.c.h.b16 %v38
  %v75 = vunpack.c.l.b16 %v39
  %v76 = vunpack.c.h.b16 %v39
  %v77 = vunpack.c.l.b16 %v40
  %v78 = vunpack.c.h.b16 %v40
  %v79 = vpack.c.b16 %v71, %v69
  %v80 = vpack.c.b16 %v72, %v70
  %v81 = vpack.c.b16 %v75, %v73
  %v82 = vpack.c.b16 %v76, %v74
  %v83 = vpack.c.b16 %v77, %v77
  %v84 = vpack.c.b16 %v78, %v78
  %v111 = vunpack.c.l.b16 %v41
  %v112 = vunpack.c.l.b16 %v42
  %v113 = vunpack.c.l.b16 %v43
  %v114 = vunpack.c.l.b16 %v44
  %v115 = vunpack.c.l.b16 %v45
  %v116 = vunpack.c.l.b16 %v46
  %v117 = vunpack.c.l.b16 %v47
  %v118 = vunpack.c.l.b16 %v48
  %v119 = vunpack.c.l.b16 %v49
  %v120 = vunpack.c.l.b16 %v50
  %v121 = vunpack.c.l.b16 %v51
  %v122 = vunpack.c.l.b16 %v52
  %v123 = vunpack.c.l.b16 %v53
  %v124 = vunpack.c.l.b16 %v54
  %v125 = vunpack.c.l.b16 %v55
  %v126 = vunpack.c.l.b16 %v56
  %v127 = vunpack.c.l.b16 %v57
  %v128 = vunpack.c.l.b16 %v58
  %v129 = vunpack.c.l.b16 %v59
  %v130 = vunpack.c.l.b16 %v60
  %v131 = vunpack.c.l.b16 %v61
  %v132 = vunpack.c.l.b16 %v62
  %v133 = vunpack.c.l.b16 %v63
  %v134 = vpack.c.b16 %v112, %v111
  %v135 = vpack.c.b16 %v114, %v113
  %v136 = vpack.c.b16 %v116, %v115
  %v137 = vpack.c.b16 %v118, %v117
  %v138 = vpack.c.b16 %v120, %v119
  %v139 = vpack.c.b16 %v122, %v121
  %v140 = vpack.c.b16 %v124, %v123
  %v141 = vpack.c.b16 %v126, %v125
  %v142 = vpack.c.b16 %v128, %v127
  %v143 = vpack.c.b16 %v130, %v129
  %v144 = vpack.c.b16 %v132, %v131
  %v145 = vpack.c.b16 %v133, %v133
  %vm157 = vcmask 424960
  %v159 = vsel %vm157, %v80, 0
  %v162 = vsel %vm157, %v82, 0
  %v165 = vsel %vm157, %v84, 0
  %vm167 = vcmask 1041408
  %v169 = vsel %vm167, %v145, 0
  %171 = vmatprep.subr.bf16.mxu0 0
  %172 = vmatpush1.bf16.msra.mxu0 %v134
  %173 = vmatprep.subr.bf16.mxu0 0
  %174 = vmatpush1.bf16.msra.mxu0 %v135
  %175 = vmatprep.subr.bf16.mxu0 0
  %176 = vmatpush1.bf16.msra.mxu0 %v136
  %177 = vmatprep.subr.bf16.mxu0 0
  %178 = vmatpush1.bf16.msra.mxu0 %v137
  %179 = vmatprep.subr.bf16.mxu0 0
  %180 = vmatpush1.bf16.msra.mxu0 %v138
  %181 = vmatprep.subr.bf16.mxu0 0
  %182 = vmatpush1.bf16.msra.mxu0 %v139
  %183 = vmatprep.subr.bf16.mxu0 0
  %184 = vmatpush1.bf16.msra.mxu0 %v140
  %185 = vmatprep.subr.bf16.mxu0 0
  %186 = vmatpush1.bf16.msra.mxu0 %v141
  %187 = vmatprep.subr.bf16.mxu0 0
  %188 = vmatpush1.bf16.msra.mxu0 %v142
  %189 = vmatprep.subr.bf16.mxu0 0
  %190 = vmatpush1.bf16.msra.mxu0 %v143
  %191 = vmatprep.subr.bf16.mxu0 0
  %192 = vmatpush1.bf16.msra.mxu0 %v144
  %193 = vmatprep.subr.bf16.mxu0 0
  %194 = vmatpush1.bf16.msra.mxu0 %v169
  %195 = vmatprep.subr.bf16.mxu0 0
  %196 = vmatpush1.bf16.msra.mxu0 0
  %197 = vmatprep.subr.bf16.mxu0 0
  %198 = vmatpush1.bf16.msra.mxu0 0
  %199 = vmatprep.subr.bf16.mxu0 0
  %200 = vmatpush1.bf16.msra.mxu0 0
  %201 = vmatprep.subr.bf16.mxu0 0
  %202 = vmatpush1.bf16.msra.mxu0 0
  %203 = vmatprep.mubr.bf16.mxu0 %v159
  %204 = vmatmul.mubr.bf16.gmra.mrb[0].mxu0 %v79
  %v205 = vpop.f32.mrb[0].mxu0
  %v206 = vadd.f32 0.0, %v205
  %v207 = vpop.f32.mrb[0].mxu0
  %v208 = vpop.f32.mrb[0].mxu0
  %v209 = vadd.f32 0.0, %v208
  %v210 = vpop.f32.mrb[0].mxu0
  %211 = vmatprep.mubr.bf16.mxu0 %v162
  %212 = vmatmul.mubr.bf16.gmra.mrb[0].mxu0 %v81
  %v213 = vpop.f32.mrb[0].mxu0
  %v214 = vadd.f32 0.0, %v213
  %v215 = vpop.f32.mrb[0].mxu0
  %v216 = vpop.f32.mrb[0].mxu0
  %v217 = vadd.f32 0.0, %v216
  %v218 = vpop.f32.mrb[0].mxu0
  %219 = vmatprep.mubr.bf16.mxu0 %v165
  %220 = vmatmul.mubr.bf16.gmra.mrb[0].mxu0 %v83
  %v221 = vpop.f32.mrb[0].mxu0
  %v222 = vadd.f32 0.0, %v221
  %v223 = vpop.f32.mrb[0].mxu0
  %v224 = vpop.f32.mrb[0].mxu0
  %v225 = vpop.f32.mrb[0].mxu0
  %226 = vdwg.mxu0
  %227 = vadd.xlane.f32.xlu0 %v206
  %v228 = vpop.xlane.xlu0 %227
  %229 = vadd.xlane.f32.xlu0 %v209
  %v230 = vpop.xlane.xlu0 %229
  %231 = vadd.xlane.f32.xlu0 %v214
  %v232 = vpop.xlane.xlu0 %231
  %233 = vadd.xlane.f32.xlu0 %v217
  %v234 = vpop.xlane.xlu0 %233
  %235 = vadd.xlane.f32.xlu0 %v222
  %v236 = vpop.xlane.xlu0 %235
  %v237 = vrcp.pop 128.0
  %v238 = vmul.f32 %v228, %v237
  %v239 = vmul.f32 %v230, %v237
  %v240 = vmul.f32 %v232, %v237
  %v241 = vmul.f32 %v234, %v237
  %v242 = vmul.f32 %v236, %v237
  %v243 = vsub.f32 %v206, %v238
  %v244 = vsub.f32 %v209, %v239
  %v245 = vsub.f32 %v214, %v240
  %v246 = vsub.f32 %v217, %v241
  %v247 = vsub.f32 %v222, %v242
  %v248 = vmul.f32 %v243, %v243
  %v249 = vmul.f32 %v244, %v244
  %v250 = vmul.f32 %v245, %v245
  %v251 = vmul.f32 %v246, %v246
  %v252 = vmul.f32 %v247, %v247
  %253 = vadd.xlane.f32.xlu0 %v248
  %v254 = vpop.xlane.xlu0 %253
  %255 = vadd.xlane.f32.xlu0 %v249
  %v256 = vpop.xlane.xlu0 %255
  %257 = vadd.xlane.f32.xlu0 %v250
  %v258 = vpop.xlane.xlu0 %257
  %259 = vadd.xlane.f32.xlu0 %v251
  %v260 = vpop.xlane.xlu0 %259
  %261 = vadd.xlane.f32.xlu0 %v252
  %v262 = vpop.xlane.xlu0 %261
  %v263 = vmul.f32 %v254, %v237
  %v264 = vmul.f32 %v256, %v237
  %v265 = vmul.f32 %v258, %v237
  %v266 = vmul.f32 %v260, %v237
  %v267 = vmul.f32 %v262, %v237
  %v268 = vld [vmem:[%s2] sm:$0xff]
  %v269 = vld [vmem:[%s2 + $0x8] sm:$0xff]
  %v270 = vld [vmem:[%s2 + $0x10] sm:$0xff]
  %v271 = vld [vmem:[%s2 + $0x18] sm:$0xff]
  %v272 = vld [vmem:[%s2 + $0x20] sm:$0xff]
  %v273 = vadd.f32 %v263, 1e-05
  %v274 = vadd.f32 %v264, 1e-05
  %v275 = vadd.f32 %v265, 1e-05
  %v276 = vadd.f32 %v266, 1e-05
  %v277 = vadd.f32 %v267, 1e-05
  %v278 = vrsqrt.pop %v273
  %v279 = vrsqrt.pop %v274
  %v280 = vrsqrt.pop %v275
  %v281 = vrsqrt.pop %v276
  %v282 = vrsqrt.pop %v277
  %v283 = vmul.f32 %v268, %v278
  %v284 = vmul.f32 %v269, %v279
  %v285 = vmul.f32 %v270, %v280
  %v286 = vmul.f32 %v271, %v281
  %v287 = vmul.f32 %v272, %v282
  %v288 = vld [vmem:[%s3] sm:$0xff]
  %v289 = vld [vmem:[%s3 + $0x8] sm:$0xff]
  %v290 = vld [vmem:[%s3 + $0x10] sm:$0xff]
  %v291 = vld [vmem:[%s3 + $0x18] sm:$0xff]
  %v292 = vld [vmem:[%s3 + $0x20] sm:$0xff]
  %v293 = vmul.f32 %v238, %v283
  %v294 = vmul.f32 %v239, %v284
  %v295 = vmul.f32 %v240, %v285
  %v296 = vmul.f32 %v241, %v286
  %v297 = vmul.f32 %v242, %v287
  %v298 = vsub.f32 %v288, %v293
  %v299 = vsub.f32 %v289, %v294
  %v300 = vsub.f32 %v290, %v295
  %v301 = vsub.f32 %v291, %v296
  %v302 = vsub.f32 %v292, %v297
  %304 = vset.pattern.permute.xlu0 0
  %305 = vperm.xlu0 %304, %v283
  %v306 = vpop.permute.xlu0 %305
  %309 = vset.pattern.permute.xlu0 0
  %310 = vperm.xlu0 %309, %v284
  %v311 = vpop.permute.xlu0 %310
  %314 = vset.pattern.permute.xlu0 0
  %315 = vperm.xlu0 %314, %v285
  %v316 = vpop.permute.xlu0 %315
  %319 = vset.pattern.permute.xlu0 0
  %320 = vperm.xlu0 %319, %v286
  %v321 = vpop.permute.xlu0 %320
  %324 = vset.pattern.permute.xlu0 0
  %325 = vperm.xlu0 %324, %v287
  %v326 = vpop.permute.xlu0 %325
  %v328 = vmul.f32 %v206, %v306
  %v329 = vmul.f32 %v209, %v311
  %v330 = vmul.f32 %v214, %v316
  %v331 = vmul.f32 %v217, %v321
  %v332 = vmul.f32 %v222, %v326
  %334 = vset.pattern.permute.xlu0 0
  %335 = vperm.xlu0 %334, %v298
  %v336 = vpop.permute.xlu0 %335
  %339 = vset.pattern.permute.xlu0 0
  %340 = vperm.xlu0 %339, %v299
  %v341 = vpop.permute.xlu0 %340
  %344 = vset.pattern.permute.xlu0 0
  %345 = vperm.xlu0 %344, %v300
  %v346 = vpop.permute.xlu0 %345
  %349 = vset.pattern.permute.xlu0 0
  %350 = vperm.xlu0 %349, %v301
  %v351 = vpop.permute.xlu0 %350
  %354 = vset.pattern.permute.xlu0 0
  %355 = vperm.xlu0 %354, %v302
  %v356 = vpop.permute.xlu0 %355
  %v358 = vadd.f32 %v328, %v336
  %v359 = vadd.f32 %v329, %v341
  %v360 = vadd.f32 %v330, %v346
  %v361 = vadd.f32 %v331, %v351
  %v362 = vadd.f32 %v332, %v356
  %v363 = vmax.f32 %v358, 0.0
  %v364 = vmax.f32 %v359, 0.0
  %v365 = vmax.f32 %v360, 0.0
  %v366 = vmax.f32 %v361, 0.0
  %v367 = vmax.f32 %v362, 0.0
  %v368 = vld [vmem:[%s4] sm:$0xf]
  %v369 = vld [vmem:[%s4 + $0x4] sm:$0xf]
  %v370 = vld [vmem:[%s4 + $0x8] sm:$0xf]
  %v371 = vld [vmem:[%s4 + $0xc] sm:$0xf]
  %v372 = vld [vmem:[%s4 + $0x10] sm:$0xf]
  %v373 = vld [vmem:[%s4 + $0x14] sm:$0xf]
  %v374 = vld [vmem:[%s4 + $0x18] sm:$0xf]
  %v375 = vld [vmem:[%s4 + $0x1c] sm:$0x3]
  %v376 = vpack.c.bf16 %v364, %v363
  %v377 = vpack.c.bf16 %v366, %v365
  %v378 = vpack.c.bf16 %v367, %v367
  %v387 = vunpack.c.l.b16 %v368
  %v388 = vunpack.c.l.b16 %v369
  %v389 = vunpack.c.l.b16 %v370
  %v390 = vunpack.c.l.b16 %v371
  %v391 = vunpack.c.l.b16 %v372
  %v392 = vunpack.c.l.b16 %v373
  %v393 = vunpack.c.l.b16 %v374
  %v394 = vunpack.c.l.b16 %v375
  %v395 = vpack.c.b16 %v388, %v387
  %v396 = vpack.c.b16 %v390, %v389
  %v397 = vpack.c.b16 %v392, %v391
  %v398 = vpack.c.b16 %v394, %v393
  %vm399 = vcmask 326656
  %v401 = vsel %vm399, %v395, 0
  %v404 = vsel %vm399, %v396, 0
  %v407 = vsel %vm399, %v397, 0
  %v410 = vsel %vm399, %v398, 0
  %vm412 = vcmask 1043456
  %v414 = vsel %vm412, %v378, 0
  %416 = vmatprep.subr.bf16.mxu0 0
  %417 = vmatpush1.bf16.msra.mxu0 %v376
  %418 = vmatprep.subr.bf16.mxu0 0
  %419 = vmatpush1.bf16.msra.mxu0 %v377
  %420 = vmatprep.subr.bf16.mxu0 0
  %421 = vmatpush1.bf16.msra.mxu0 %v414
  %422 = vmatprep.subr.bf16.mxu0 0
  %423 = vmatpush1.bf16.msra.mxu0 0
  %424 = vmatprep.subr.bf16.mxu0 0
  %425 = vmatpush1.bf16.msra.mxu0 0
  %426 = vmatprep.subr.bf16.mxu0 0
  %427 = vmatpush1.bf16.msra.mxu0 0
  %428 = vmatprep.subr.bf16.mxu0 0
  %429 = vmatpush1.bf16.msra.mxu0 0
  %430 = vmatprep.subr.bf16.mxu0 0
  %431 = vmatpush1.bf16.msra.mxu0 0
  %432 = vmatprep.subr.bf16.mxu0 0
  %433 = vmatpush1.bf16.msra.mxu0 0
  %434 = vmatprep.subr.bf16.mxu0 0
  %435 = vmatpush1.bf16.msra.mxu0 0
  %436 = vmatprep.subr.bf16.mxu0 0
  %437 = vmatpush1.bf16.msra.mxu0 0
  %438 = vmatprep.subr.bf16.mxu0 0
  %439 = vmatpush1.bf16.msra.mxu0 0
  %440 = vmatprep.subr.bf16.mxu0 0
  %441 = vmatpush1.bf16.msra.mxu0 0
  %442 = vmatprep.subr.bf16.mxu0 0
  %443 = vmatpush1.bf16.msra.mxu0 0
  %444 = vmatprep.subr.bf16.mxu0 0
  %445 = vmatpush1.bf16.msra.mxu0 0
  %446 = vmatprep.subr.bf16.mxu0 0
  %447 = vmatpush1.bf16.msra.mxu0 0
  %448 = vmatprep.mubr.bf16.mxu0 0
  %449 = vmatmul.mubr.bf16.gmra.mrb[0].mxu0 %v401
  %v450 = vpop.f32.mrb[0].mxu0
  %v451 = vadd.f32 0.0, %v450
  %v452 = vpop.f32.mrb[0].mxu0
  %v453 = vpop.f32.mrb[0].mxu0
  %v454 = vadd.f32 0.0, %v453
  %v455 = vpop.f32.mrb[0].mxu0
  %456 = vmatprep.mubr.bf16.mxu0 0
  %457 = vmatmul.mubr.bf16.gmra.mrb[0].mxu0 %v404
  %v458 = vpop.f32.mrb[0].mxu0
  %v459 = vadd.f32 0.0, %v458
  %v460 = vpop.f32.mrb[0].mxu0
  %v461 = vpop.f32.mrb[0].mxu0
  %v462 = vadd.f32 0.0, %v461
  %v463 = vpop.f32.mrb[0].mxu0
  %464 = vmatprep.mubr.bf16.mxu0 0
  %465 = vmatmul.mubr.bf16.gmra.mrb[0].mxu0 %v407
  %v466 = vpop.f32.mrb[0].mxu0
  %v467 = vadd.f32 0.0, %v466
  %v468 = vpop.f32.mrb[0].mxu0
  %v469 = vpop.f32.mrb[0].mxu0
  %v470 = vadd.f32 0.0, %v469
  %v471 = vpop.f32.mrb[0].mxu0
  %472 = vmatprep.mubr.bf16.mxu0 0
  %473 = vmatmul.mubr.bf16.gmra.mrb[0].mxu0 %v410
  %v474 = vpop.f32.mrb[0].mxu0
  %v475 = vadd.f32 0.0, %v474
  %v476 = vpop.f32.mrb[0].mxu0
  %v477 = vpop.f32.mrb[0].mxu0
  %v478 = vadd.f32 0.0, %v477
  %v479 = vpop.f32.mrb[0].mxu0
  %480 = vdwg.mxu0
  %481 = vadd.xlane.f32.xlu0 %v451
  %v482 = vpop.xlane.xlu0 %481
  %483 = vadd.xlane.f32.xlu0 %v454
  %v484 = vpop.xlane.xlu0 %483
  %485 = vadd.xlane.f32.xlu0 %v459
  %v486 = vpop.xlane.xlu0 %485
  %487 = vadd.xlane.f32.xlu0 %v462
  %v488 = vpop.xlane.xlu0 %487
  %489 = vadd.xlane.f32.xlu0 %v467
  %v490 = vpop.xlane.xlu0 %489
  %491 = vadd.xlane.f32.xlu0 %v470
  %v492 = vpop.xlane.xlu0 %491
  %493 = vadd.xlane.f32.xlu0 %v475
  %v494 = vpop.xlane.xlu0 %493
  %v495 = vsel %vm412, %v478, 0.0
  %496 = vadd.xlane.f32.xlu0 %v495
  %v497 = vpop.xlane.xlu0 %496
  %v498 = vmul.f32 %v482, %v237
  %v499 = vmul.f32 %v484, %v237
  %v500 = vmul.f32 %v486, %v237
  %v501 = vmul.f32 %v488, %v237
  %v502 = vmul.f32 %v490, %v237
  %v503 = vmul.f32 %v492, %v237
  %v504 = vmul.f32 %v494, %v237
  %v505 = vmul.f32 %v497, %v237
  %v506 = vsub.f32 %v451, %v498
  %v507 = vsub.f32 %v454, %v499
  %v508 = vsub.f32 %v459, %v500
  %v509 = vsub.f32 %v462, %v501
  %v510 = vsub.f32 %v467, %v502
  %v511 = vsub.f32 %v470, %v503
  %v512 = vsub.f32 %v475, %v504
  %v513 = vsub.f32 %v478, %v505
  %v514 = vmul.f32 %v506, %v506
  %v515 = vmul.f32 %v507, %v507
  %v516 = vmul.f32 %v508, %v508
  %v517 = vmul.f32 %v509, %v509
  %v518 = vmul.f32 %v510, %v510
  %v519 = vmul.f32 %v511, %v511
  %v520 = vmul.f32 %v512, %v512
  %v521 = vmul.f32 %v513, %v513
  %522 = vadd.xlane.f32.xlu0 %v514
  %v523 = vpop.xlane.xlu0 %522
  %524 = vadd.xlane.f32.xlu0 %v515
  %v525 = vpop.xlane.xlu0 %524
  %526 = vadd.xlane.f32.xlu0 %v516
  %v527 = vpop.xlane.xlu0 %526
  %528 = vadd.xlane.f32.xlu0 %v517
  %v529 = vpop.xlane.xlu0 %528
  %530 = vadd.xlane.f32.xlu0 %v518
  %v531 = vpop.xlane.xlu0 %530
  %532 = vadd.xlane.f32.xlu0 %v519
  %v533 = vpop.xlane.xlu0 %532
  %534 = vadd.xlane.f32.xlu0 %v520
  %v535 = vpop.xlane.xlu0 %534
  %v536 = vsel %vm412, %v521, 0.0
  %537 = vadd.xlane.f32.xlu0 %v536
  %v538 = vpop.xlane.xlu0 %537
  %v539 = vmul.f32 %v523, %v237
  %v540 = vmul.f32 %v525, %v237
  %v541 = vmul.f32 %v527, %v237
  %v542 = vmul.f32 %v529, %v237
  %v543 = vmul.f32 %v531, %v237
  %v544 = vmul.f32 %v533, %v237
  %v545 = vmul.f32 %v535, %v237
  %v546 = vmul.f32 %v538, %v237
  %v547 = vld [vmem:[%s5] sm:$0xff]
  %v548 = vld [vmem:[%s5 + $0x8] sm:$0xff]
  %v549 = vld [vmem:[%s5 + $0x10] sm:$0xff]
  %v550 = vld [vmem:[%s5 + $0x18] sm:$0xff]
  %v551 = vld [vmem:[%s5 + $0x20] sm:$0xff]
  %v552 = vld [vmem:[%s5 + $0x28] sm:$0xff]
  %v553 = vld [vmem:[%s5 + $0x30] sm:$0xff]
  %v554 = vld [vmem:[%s5 + $0x38] sm:$0xf]
  %v555 = vadd.f32 %v539, 1e-05
  %v556 = vadd.f32 %v540, 1e-05
  %v557 = vadd.f32 %v541, 1e-05
  %v558 = vadd.f32 %v542, 1e-05
  %v559 = vadd.f32 %v543, 1e-05
  %v560 = vadd.f32 %v544, 1e-05
  %v561 = vadd.f32 %v545, 1e-05
  %v562 = vadd.f32 %v546, 1e-05
  %v563 = vrsqrt.pop %v555
  %v564 = vrsqrt.pop %v556
  %v565 = vrsqrt.pop %v557
  %v566 = vrsqrt.pop %v558
  %v567 = vrsqrt.pop %v559
  %v568 = vrsqrt.pop %v560
  %v569 = vrsqrt.pop %v561
  %v570 = vrsqrt.pop %v562
  %v571 = vmul.f32 %v547, %v563
  %v572 = vmul.f32 %v548, %v564
  %v573 = vmul.f32 %v549, %v565
  %v574 = vmul.f32 %v550, %v566
  %v575 = vmul.f32 %v551, %v567
  %v576 = vmul.f32 %v552, %v568
  %v577 = vmul.f32 %v553, %v569
  %v578 = vmul.f32 %v554, %v570
  %v579 = vld [vmem:[%s6] sm:$0xff]
  %v580 = vld [vmem:[%s6 + $0x8] sm:$0xff]
  %v581 = vld [vmem:[%s6 + $0x10] sm:$0xff]
  %v582 = vld [vmem:[%s6 + $0x18] sm:$0xff]
  %v583 = vld [vmem:[%s6 + $0x20] sm:$0xff]
  %v584 = vld [vmem:[%s6 + $0x28] sm:$0xff]
  %v585 = vld [vmem:[%s6 + $0x30] sm:$0xff]
  %v586 = vld [vmem:[%s6 + $0x38] sm:$0xf]
  %v587 = vmul.f32 %v498, %v571
  %v588 = vmul.f32 %v499, %v572
  %v589 = vmul.f32 %v500, %v573
  %v590 = vmul.f32 %v501, %v574
  %v591 = vmul.f32 %v502, %v575
  %v592 = vmul.f32 %v503, %v576
  %v593 = vmul.f32 %v504, %v577
  %v594 = vmul.f32 %v505, %v578
  %v595 = vsub.f32 %v579, %v587
  %v596 = vsub.f32 %v580, %v588
  %v597 = vsub.f32 %v581, %v589
  %v598 = vsub.f32 %v582, %v590
  %v599 = vsub.f32 %v583, %v591
  %v600 = vsub.f32 %v584, %v592
  %v601 = vsub.f32 %v585, %v593
  %v602 = vsub.f32 %v586, %v594
  %604 = vset.pattern.permute.xlu0 0
  %605 = vperm.xlu0 %604, %v571
  %v606 = vpop.permute.xlu0 %605
  %609 = vset.pattern.permute.xlu0 0
  %610 = vperm.xlu0 %609, %v572
  %v611 = vpop.permute.xlu0 %610
  %614 = vset.pattern.permute.xlu0 0
  %615 = vperm.xlu0 %614, %v573
  %v616 = vpop.permute.xlu0 %615
  %619 = vset.pattern.permute.xlu0 0
  %620 = vperm.xlu0 %619, %v574
  %v621 = vpop.permute.xlu0 %620
  %624 = vset.pattern.permute.xlu0 0
  %625 = vperm.xlu0 %624, %v575
  %v626 = vpop.permute.xlu0 %625
  %629 = vset.pattern.permute.xlu0 0
  %630 = vperm.xlu0 %629, %v576
  %v631 = vpop.permute.xlu0 %630
  %634 = vset.pattern.permute.xlu0 0
  %635 = vperm.xlu0 %634, %v577
  %v636 = vpop.permute.xlu0 %635
  %639 = vset.pattern.permute.xlu0 0
  %640 = vperm.xlu0 %639, %v578
  %v641 = vpop.permute.xlu0 %640
  %v643 = vmul.f32 %v451, %v606
  %v644 = vmul.f32 %v454, %v611
  %v645 = vmul.f32 %v459, %v616
  %v646 = vmul.f32 %v462, %v621
  %v647 = vmul.f32 %v467, %v626
  %v648 = vmul.f32 %v470, %v631
  %v649 = vmul.f32 %v475, %v636
  %v650 = vmul.f32 %v478, %v641
  %652 = vset.pattern.permute.xlu0 0
  %653 = vperm.xlu0 %652, %v595
  %v654 = vpop.permute.xlu0 %653
  %657 = vset.pattern.permute.xlu0 0
  %658 = vperm.xlu0 %657, %v596
  %v659 = vpop.permute.xlu0 %658
  %662 = vset.pattern.permute.xlu0 0
  %663 = vperm.xlu0 %662, %v597
  %v664 = vpop.permute.xlu0 %663
  %667 = vset.pattern.permute.xlu0 0
  %668 = vperm.xlu0 %667, %v598
  %v669 = vpop.permute.xlu0 %668
  %672 = vset.pattern.permute.xlu0 0
  %673 = vperm.xlu0 %672, %v599
  %v674 = vpop.permute.xlu0 %673
  %677 = vset.pattern.permute.xlu0 0
  %678 = vperm.xlu0 %677, %v600
  %v679 = vpop.permute.xlu0 %678
  %682 = vset.pattern.permute.xlu0 0
  %683 = vperm.xlu0 %682, %v601
  %v684 = vpop.permute.xlu0 %683
  %687 = vset.pattern.permute.xlu0 0
  %688 = vperm.xlu0 %687, %v602
  %v689 = vpop.permute.xlu0 %688
  %v691 = vadd.f32 %v643, %v654
  %v692 = vadd.f32 %v644, %v659
  %v693 = vadd.f32 %v645, %v664
  %v694 = vadd.f32 %v646, %v669
  %v695 = vadd.f32 %v647, %v674
  %v696 = vadd.f32 %v648, %v679
  %v697 = vadd.f32 %v649, %v684
  %v698 = vadd.f32 %v650, %v689
  %v699 = vmax.f32 %v691, 0.0
  %v700 = vmax.f32 %v692, 0.0
  %v701 = vmax.f32 %v693, 0.0
  %v702 = vmax.f32 %v694, 0.0
  %v703 = vmax.f32 %v695, 0.0
  %v704 = vmax.f32 %v696, 0.0
  %v705 = vmax.f32 %v697, 0.0
  %v706 = vmax.f32 %v698, 0.0
  %v707 = vld [vmem:[%s0 + $0x28] sm:$0xf]
  %v708 = vld [vmem:[%s0 + $0x2c] sm:$0xf]
  %v709 = vld [vmem:[%s0 + $0x30] sm:$0x3]
  %v710 = vld [vmem:[%s7] sm:$0xf]
  %v711 = vld [vmem:[%s7 + $0x4] sm:$0xf]
  %v712 = vld [vmem:[%s7 + $0x8] sm:$0xf]
  %v713 = vld [vmem:[%s7 + $0xc] sm:$0xf]
  %v714 = vld [vmem:[%s7 + $0x10] sm:$0xf]
  %v715 = vld [vmem:[%s7 + $0x14] sm:$0xf]
  %v716 = vld [vmem:[%s7 + $0x18] sm:$0xf]
  %v717 = vld [vmem:[%s7 + $0x1c] sm:$0x3]
  %v726 = vunpack.c.l.b16 %v710
  %v727 = vunpack.c.l.b16 %v711
  %v728 = vunpack.c.l.b16 %v712
  %v729 = vunpack.c.l.b16 %v713
  %v730 = vunpack.c.l.b16 %v714
  %v731 = vunpack.c.l.b16 %v715
  %v732 = vunpack.c.l.b16 %v716
  %v733 = vunpack.c.l.b16 %v717
  %v734 = vpack.c.b16 %v727, %v726
  %v735 = vpack.c.b16 %v729, %v728
  %v736 = vpack.c.b16 %v731, %v730
  %v737 = vpack.c.b16 %v733, %v732
  %v741 = vunpack.c.l.b16 %v707
  %v742 = vunpack.c.l.b16 %v708
  %v743 = vunpack.c.l.b16 %v709
  %v744 = vpack.c.b16 %v742, %v741
  %v745 = vpack.c.b16 %v743, %v743
  %vm747 = vcmask 162816
  %v749 = vsel %vm747, %v734, 0
  %v752 = vsel %vm747, %v735, 0
  %v755 = vsel %vm747, %v736, 0
  %v758 = vsel %vm747, %v737, 0
  %v761 = vsel %vm167, %v745, 0
  %763 = vmatprep.subr.bf16.mxu0 0
  %764 = vmatpush1.bf16.msra.mxu0 %v744
  %765 = vmatprep.subr.bf16.mxu0 0
  %766 = vmatpush1.bf16.msra.mxu0 %v761
  %767 = vmatprep.subr.bf16.mxu0 0
  %768 = vmatpush1.bf16.msra.mxu0 0
  %769 = vmatprep.subr.bf16.mxu0 0
  %770 = vmatpush1.bf16.msra.mxu0 0
  %771 = vmatprep.subr.bf16.mxu0 0
  %772 = vmatpush1.bf16.msra.mxu0 0
  %773 = vmatprep.subr.bf16.mxu0 0
  %774 = vmatpush1.bf16.msra.mxu0 0
  %775 = vmatprep.subr.bf16.mxu0 0
  %776 = vmatpush1.bf16.msra.mxu0 0
  %777 = vmatprep.subr.bf16.mxu0 0
  %778 = vmatpush1.bf16.msra.mxu0 0
  %779 = vmatprep.subr.bf16.mxu0 0
  %780 = vmatpush1.bf16.msra.mxu0 0
  %781 = vmatprep.subr.bf16.mxu0 0
  %782 = vmatpush1.bf16.msra.mxu0 0
  %783 = vmatprep.subr.bf16.mxu0 0
  %784 = vmatpush1.bf16.msra.mxu0 0
  %785 = vmatprep.subr.bf16.mxu0 0
  %786 = vmatpush1.bf16.msra.mxu0 0
  %787 = vmatprep.subr.bf16.mxu0 0
  %788 = vmatpush1.bf16.msra.mxu0 0
  %789 = vmatprep.subr.bf16.mxu0 0
  %790 = vmatpush1.bf16.msra.mxu0 0
  %791 = vmatprep.subr.bf16.mxu0 0
  %792 = vmatpush1.bf16.msra.mxu0 0
  %793 = vmatprep.subr.bf16.mxu0 0
  %794 = vmatpush1.bf16.msra.mxu0 0
  %795 = vmatprep.mubr.bf16.mxu0 0
  %796 = vmatmul.mubr.bf16.gmra.mrb[0].mxu0 %v749
  %v797 = vpop.f32.mrb[0].mxu0
  %v798 = vadd.f32 0.0, %v797
  %v799 = vpop.f32.mrb[0].mxu0
  %v800 = vpop.f32.mrb[0].mxu0
  %v801 = vadd.f32 0.0, %v800
  %v802 = vpop.f32.mrb[0].mxu0
  %803 = vmatprep.mubr.bf16.mxu0 0
  %804 = vmatmul.mubr.bf16.gmra.mrb[0].mxu0 %v752
  %v805 = vpop.f32.mrb[0].mxu0
  %v806 = vadd.f32 0.0, %v805
  %v807 = vpop.f32.mrb[0].mxu0
  %v808 = vpop.f32.mrb[0].mxu0
  %v809 = vadd.f32 0.0, %v808
  %v810 = vpop.f32.mrb[0].mxu0
  %811 = vmatprep.mubr.bf16.mxu0 0
  %812 = vmatmul.mubr.bf16.gmra.mrb[0].mxu0 %v755
  %v813 = vpop.f32.mrb[0].mxu0
  %v814 = vadd.f32 0.0, %v813
  %v815 = vpop.f32.mrb[0].mxu0
  %v816 = vpop.f32.mrb[0].mxu0
  %v817 = vadd.f32 0.0, %v816
  %v818 = vpop.f32.mrb[0].mxu0
  %819 = vmatprep.mubr.bf16.mxu0 0
  %820 = vmatmul.mubr.bf16.gmra.mrb[0].mxu0 %v758
  %v821 = vpop.f32.mrb[0].mxu0
  %v822 = vadd.f32 0.0, %v821
  %v823 = vpop.f32.mrb[0].mxu0
  %v824 = vpop.f32.mrb[0].mxu0
  %v825 = vadd.f32 0.0, %v824
  %v826 = vpop.f32.mrb[0].mxu0
  %827 = vdwg.mxu0
  %828 = vadd.xlane.f32.xlu0 %v798
  %v829 = vpop.xlane.xlu0 %828
  %830 = vadd.xlane.f32.xlu0 %v801
  %v831 = vpop.xlane.xlu0 %830
  %832 = vadd.xlane.f32.xlu0 %v806
  %v833 = vpop.xlane.xlu0 %832
  %834 = vadd.xlane.f32.xlu0 %v809
  %v835 = vpop.xlane.xlu0 %834
  %836 = vadd.xlane.f32.xlu0 %v814
  %v837 = vpop.xlane.xlu0 %836
  %838 = vadd.xlane.f32.xlu0 %v817
  %v839 = vpop.xlane.xlu0 %838
  %840 = vadd.xlane.f32.xlu0 %v822
  %v841 = vpop.xlane.xlu0 %840
  %v842 = vsel %vm412, %v825, 0.0
  %843 = vadd.xlane.f32.xlu0 %v842
  %v844 = vpop.xlane.xlu0 %843
  %v845 = vmul.f32 %v829, %v237
  %v846 = vmul.f32 %v831, %v237
  %v847 = vmul.f32 %v833, %v237
  %v848 = vmul.f32 %v835, %v237
  %v849 = vmul.f32 %v837, %v237
  %v850 = vmul.f32 %v839, %v237
  %v851 = vmul.f32 %v841, %v237
  %v852 = vmul.f32 %v844, %v237
  %v853 = vsub.f32 %v798, %v845
  %v854 = vsub.f32 %v801, %v846
  %v855 = vsub.f32 %v806, %v847
  %v856 = vsub.f32 %v809, %v848
  %v857 = vsub.f32 %v814, %v849
  %v858 = vsub.f32 %v817, %v850
  %v859 = vsub.f32 %v822, %v851
  %v860 = vsub.f32 %v825, %v852
  %v861 = vmul.f32 %v853, %v853
  %v862 = vmul.f32 %v854, %v854
  %v863 = vmul.f32 %v855, %v855
  %v864 = vmul.f32 %v856, %v856
  %v865 = vmul.f32 %v857, %v857
  %v866 = vmul.f32 %v858, %v858
  %v867 = vmul.f32 %v859, %v859
  %v868 = vmul.f32 %v860, %v860
  %869 = vadd.xlane.f32.xlu0 %v861
  %v870 = vpop.xlane.xlu0 %869
  %871 = vadd.xlane.f32.xlu0 %v862
  %v872 = vpop.xlane.xlu0 %871
  %873 = vadd.xlane.f32.xlu0 %v863
  %v874 = vpop.xlane.xlu0 %873
  %875 = vadd.xlane.f32.xlu0 %v864
  %v876 = vpop.xlane.xlu0 %875
  %877 = vadd.xlane.f32.xlu0 %v865
  %v878 = vpop.xlane.xlu0 %877
  %879 = vadd.xlane.f32.xlu0 %v866
  %v880 = vpop.xlane.xlu0 %879
  %881 = vadd.xlane.f32.xlu0 %v867
  %v882 = vpop.xlane.xlu0 %881
  %v883 = vsel %vm412, %v868, 0.0
  %884 = vadd.xlane.f32.xlu0 %v883
  %v885 = vpop.xlane.xlu0 %884
  %v886 = vmul.f32 %v870, %v237
  %v887 = vmul.f32 %v872, %v237
  %v888 = vmul.f32 %v874, %v237
  %v889 = vmul.f32 %v876, %v237
  %v890 = vmul.f32 %v878, %v237
  %v891 = vmul.f32 %v880, %v237
  %v892 = vmul.f32 %v882, %v237
  %v893 = vmul.f32 %v885, %v237
  %v894 = vld [vmem:[%s8] sm:$0xff]
  %v895 = vld [vmem:[%s8 + $0x8] sm:$0xff]
  %v896 = vld [vmem:[%s8 + $0x10] sm:$0xff]
  %v897 = vld [vmem:[%s8 + $0x18] sm:$0xff]
  %v898 = vld [vmem:[%s8 + $0x20] sm:$0xff]
  %v899 = vld [vmem:[%s8 + $0x28] sm:$0xff]
  %v900 = vld [vmem:[%s8 + $0x30] sm:$0xff]
  %v901 = vld [vmem:[%s8 + $0x38] sm:$0xf]
  %v902 = vadd.f32 %v886, 1e-05
  %v903 = vadd.f32 %v887, 1e-05
  %v904 = vadd.f32 %v888, 1e-05
  %v905 = vadd.f32 %v889, 1e-05
  %v906 = vadd.f32 %v890, 1e-05
  %v907 = vadd.f32 %v891, 1e-05
  %v908 = vadd.f32 %v892, 1e-05
  %v909 = vadd.f32 %v893, 1e-05
  %v910 = vrsqrt.pop %v902
  %v911 = vrsqrt.pop %v903
  %v912 = vrsqrt.pop %v904
  %v913 = vrsqrt.pop %v905
  %v914 = vrsqrt.pop %v906
  %v915 = vrsqrt.pop %v907
  %v916 = vrsqrt.pop %v908
  %v917 = vrsqrt.pop %v909
  %v918 = vmul.f32 %v894, %v910
  %v919 = vmul.f32 %v895, %v911
  %v920 = vmul.f32 %v896, %v912
  %v921 = vmul.f32 %v897, %v913
  %v922 = vmul.f32 %v898, %v914
  %v923 = vmul.f32 %v899, %v915
  %v924 = vmul.f32 %v900, %v916
  %v925 = vmul.f32 %v901, %v917
  %v926 = vld [vmem:[%s9] sm:$0xff]
  %v927 = vld [vmem:[%s9 + $0x8] sm:$0xff]
  %v928 = vld [vmem:[%s9 + $0x10] sm:$0xff]
  %v929 = vld [vmem:[%s9 + $0x18] sm:$0xff]
  %v930 = vld [vmem:[%s9 + $0x20] sm:$0xff]
  %v931 = vld [vmem:[%s9 + $0x28] sm:$0xff]
  %v932 = vld [vmem:[%s9 + $0x30] sm:$0xff]
  %v933 = vld [vmem:[%s9 + $0x38] sm:$0xf]
  %v934 = vmul.f32 %v845, %v918
  %v935 = vmul.f32 %v846, %v919
  %v936 = vmul.f32 %v847, %v920
  %v937 = vmul.f32 %v848, %v921
  %v938 = vmul.f32 %v849, %v922
  %v939 = vmul.f32 %v850, %v923
  %v940 = vmul.f32 %v851, %v924
  %v941 = vmul.f32 %v852, %v925
  %v942 = vsub.f32 %v926, %v934
  %v943 = vsub.f32 %v927, %v935
  %v944 = vsub.f32 %v928, %v936
  %v945 = vsub.f32 %v929, %v937
  %v946 = vsub.f32 %v930, %v938
  %v947 = vsub.f32 %v931, %v939
  %v948 = vsub.f32 %v932, %v940
  %v949 = vsub.f32 %v933, %v941
  %951 = vset.pattern.permute.xlu0 0
  %952 = vperm.xlu0 %951, %v918
  %v953 = vpop.permute.xlu0 %952
  %956 = vset.pattern.permute.xlu0 0
  %957 = vperm.xlu0 %956, %v919
  %v958 = vpop.permute.xlu0 %957
  %961 = vset.pattern.permute.xlu0 0
  %962 = vperm.xlu0 %961, %v920
  %v963 = vpop.permute.xlu0 %962
  %966 = vset.pattern.permute.xlu0 0
  %967 = vperm.xlu0 %966, %v921
  %v968 = vpop.permute.xlu0 %967
  %971 = vset.pattern.permute.xlu0 0
  %972 = vperm.xlu0 %971, %v922
  %v973 = vpop.permute.xlu0 %972
  %976 = vset.pattern.permute.xlu0 0
  %977 = vperm.xlu0 %976, %v923
  %v978 = vpop.permute.xlu0 %977
  %981 = vset.pattern.permute.xlu0 0
  %982 = vperm.xlu0 %981, %v924
  %v983 = vpop.permute.xlu0 %982
  %986 = vset.pattern.permute.xlu0 0
  %987 = vperm.xlu0 %986, %v925
  %v988 = vpop.permute.xlu0 %987
  %v990 = vmul.f32 %v798, %v953
  %v991 = vmul.f32 %v801, %v958
  %v992 = vmul.f32 %v806, %v963
  %v993 = vmul.f32 %v809, %v968
  %v994 = vmul.f32 %v814, %v973
  %v995 = vmul.f32 %v817, %v978
  %v996 = vmul.f32 %v822, %v983
  %v997 = vmul.f32 %v825, %v988
  %999 = vset.pattern.permute.xlu0 0
  %1000 = vperm.xlu0 %999, %v942
  %v1001 = vpop.permute.xlu0 %1000
  %1004 = vset.pattern.permute.xlu0 0
  %1005 = vperm.xlu0 %1004, %v943
  %v1006 = vpop.permute.xlu0 %1005
  %1009 = vset.pattern.permute.xlu0 0
  %1010 = vperm.xlu0 %1009, %v944
  %v1011 = vpop.permute.xlu0 %1010
  %1014 = vset.pattern.permute.xlu0 0
  %1015 = vperm.xlu0 %1014, %v945
  %v1016 = vpop.permute.xlu0 %1015
  %1019 = vset.pattern.permute.xlu0 0
  %1020 = vperm.xlu0 %1019, %v946
  %v1021 = vpop.permute.xlu0 %1020
  %1024 = vset.pattern.permute.xlu0 0
  %1025 = vperm.xlu0 %1024, %v947
  %v1026 = vpop.permute.xlu0 %1025
  %1029 = vset.pattern.permute.xlu0 0
  %1030 = vperm.xlu0 %1029, %v948
  %v1031 = vpop.permute.xlu0 %1030
  %1034 = vset.pattern.permute.xlu0 0
  %1035 = vperm.xlu0 %1034, %v949
  %v1036 = vpop.permute.xlu0 %1035
  %v1038 = vadd.f32 %v990, %v1001
  %v1039 = vadd.f32 %v991, %v1006
  %v1040 = vadd.f32 %v992, %v1011
  %v1041 = vadd.f32 %v993, %v1016
  %v1042 = vadd.f32 %v994, %v1021
  %v1043 = vadd.f32 %v995, %v1026
  %v1044 = vadd.f32 %v996, %v1031
  %v1045 = vadd.f32 %v997, %v1036
  %v1046 = vmax.f32 %v1038, 0.0
  %v1047 = vmax.f32 %v1039, 0.0
  %v1048 = vmax.f32 %v1040, 0.0
  %v1049 = vmax.f32 %v1041, 0.0
  %v1050 = vmax.f32 %v1042, 0.0
  %v1051 = vmax.f32 %v1043, 0.0
  %v1052 = vmax.f32 %v1044, 0.0
  %v1053 = vmax.f32 %v1045, 0.0
  %1054 = vst [vmem:[%s10] sm:$0xff] %v699
  %1055 = vst [vmem:[%s10 + $0x8] sm:$0xff] %v700
  %1056 = vst [vmem:[%s10 + $0x10] sm:$0xff] %v701
  %1057 = vst [vmem:[%s10 + $0x18] sm:$0xff] %v702
  %1058 = vst [vmem:[%s10 + $0x20] sm:$0xff] %v703
  %1059 = vst [vmem:[%s10 + $0x28] sm:$0xff] %v704
  %1060 = vst [vmem:[%s10 + $0x30] sm:$0xff] %v705
  %1061 = vst [vmem:[%s10 + $0x38] sm:$0xf] %v706
  %s1062 = scalar_lea.vmem %s10, 64
  %1063 = vst [vmem:[%s1062] sm:$0xff] %v1046
  %1064 = vst [vmem:[%s1062 + $0x8] sm:$0xff] %v1047
  %1065 = vst [vmem:[%s1062 + $0x10] sm:$0xff] %v1048
  %1066 = vst [vmem:[%s1062 + $0x18] sm:$0xff] %v1049
  %1067 = vst [vmem:[%s1062 + $0x20] sm:$0xff] %v1050
  %1068 = vst [vmem:[%s1062 + $0x28] sm:$0xff] %v1051
  %1069 = vst [vmem:[%s1062 + $0x30] sm:$0xff] %v1052
  %1070 = vst [vmem:[%s1062 + $0x38] sm:$0xf] %v1053
  // Predicated region
  $region42: #{convnet_forward.4} parent=0 // pred_check
    _
  $region43: #{convnet_forward.4} parent=0 // pred_check_branch
    %1072 = sbr.rel (0) target = $region45
  $region44: #{convnet_forward.4} parent=0 // pred_region
    _
  $region45: #{convnet_forward.4} parent=0 // pred_fallthru
    _
  // Predicated region
  $region46: #{convnet_forward.4} parent=0 // pred_check
    _
  $region47: #{convnet_forward.4} parent=0 // pred_check_branch
    %1074 = sbr.rel (0) target = $region49
  $region48: #{convnet_forward.4} parent=0 // pred_region
    _
  $region49: #{convnet_forward.4} parent=0 // pred_fallthru
    _

// kernel: convnet_forward.5
$region0: #{convnet_forward.5}
  #allocation0 [shape = 'u32[]', space=smem, size = 0x4, offset = 0x4, fixed_abs, tag = 'smem constant byte address 0x4 - core index']
  #allocation1 [shape = 'u32[144,128]{1,0:T(1,128)}', space=vmem, size = 0x12000, scoped, tag = 'internal scratch']
  %s0 = inlined_call_operand.vmem [shape: bf16[2,7680], index: 0, kind: input, shape index: {}]
  %s1 = inlined_call_operand.vmem [shape: bf16[10,7680], index: 1, kind: input, shape index: {}]
  %s2 = inlined_call_operand.vmem [shape: f32[1,10], index: 2, kind: input, shape index: {}]
  %s3 = inlined_call_operand.hbm [shape: f32[2,10], index: 3, kind: output, shape index: {}]
  %s4 = sld [smem:[#allocation0]]
  $region22: #{convnet_forward.5} parent=0
    _
  %s6 = ssub.s32 1, %s4
  %s7 = scalar_select 0, %s6, %s4
  $region1: #{convnet_forward.5} parent=0
    #allocation2 [shape = 'u8[1024]{0}', space=vmem, size = 0x400, scoped, tag = 'output window, operand 0, single buffered']
    #allocation3 [shape = 's32[1]{0}', space=sflag, size = 0x4, scoped, tag = 'scoped memory for convnet_forward.5']
    %8 = vsyncpa [#allocation3], 0
    // Predicated region
    $region2: #{convnet_forward.5} parent=1 // pred_check
      _
    $region3: #{convnet_forward.5} parent=1 // pred_check_branch
      %10 = sbr.rel (0) target = $region5
    $region4: #{convnet_forward.5} parent=1 // pred_region
      _
    $region5: #{convnet_forward.5} parent=1 // pred_fallthru
      _
    // Predicated region
    $region6: #{convnet_forward.5} parent=1 // pred_check
      _
    $region7: #{convnet_forward.5} parent=1 // pred_check_branch
      %12 = sbr.rel (0) target = $region9
    $region8: #{convnet_forward.5} parent=1 // pred_region
      _
    $region9: #{convnet_forward.5} parent=1 // pred_fallthru
      _
    // Predicated region
    $region10: #{convnet_forward.5} parent=1 // pred_check
      _
    $region11: #{convnet_forward.5} parent=1 // pred_check_branch
      %14 = sbr.rel (0) target = $region13
    $region12: #{convnet_forward.5} parent=1 // pred_region
      _
    $region13: #{convnet_forward.5} parent=1 // pred_fallthru
      _
    %v16 = vld [vmem:[%s0] sm:$0xff]
    %v17 = vld [vmem:[%s0 + $0x8] sm:$0xff]
    %v18 = vld [vmem:[%s0 + $0x10] sm:$0xff]
    %v19 = vld [vmem:[%s0 + $0x18] sm:$0xff]
    %v20 = vld [vmem:[%s0 + $0x20] sm:$0xff]
    %v21 = vld [vmem:[%s0 + $0x28] sm:$0xff]
    %v22 = vld [vmem:[%s0 + $0x30] sm:$0xff]
    %v23 = vld [vmem:[%s0 + $0x38] sm:$0xf]
    %v24 = vld [vmem:[%s1] sm:$0xff]
    %v25 = vld [vmem:[%s1 + $0x8] sm:$0xff]
    %v26 = vld [vmem:[%s1 + $0x10] sm:$0xff]
    %v27 = vld [vmem:[%s1 + $0x18] sm:$0xff]
    %v28 = vld [vmem:[%s1 + $0x20] sm:$0xff]
    %v29 = vld [vmem:[%s1 + $0x28] sm:$0xff]
    %v30 = vld [vmem:[%s1 + $0x30] sm:$0xff]
    %v31 = vld [vmem:[%s1 + $0x38] sm:$0xff]
    %v32 = vld [vmem:[%s1 + $0x40] sm:$0xff]
    %v33 = vld [vmem:[%s1 + $0x48] sm:$0xff]
    %v34 = vld [vmem:[%s1 + $0x50] sm:$0xff]
    %v35 = vld [vmem:[%s1 + $0x58] sm:$0xff]
    %v36 = vld [vmem:[%s1 + $0x60] sm:$0xff]
    %v37 = vld [vmem:[%s1 + $0x68] sm:$0xff]
    %v38 = vld [vmem:[%s1 + $0x70] sm:$0xff]
    %v39 = vld [vmem:[%s1 + $0x78] sm:$0xff]
    %v40 = vld [vmem:[%s1 + $0x80] sm:$0xff]
    %v41 = vld [vmem:[%s1 + $0x88] sm:$0xff]
    %v42 = vld [vmem:[%s1 + $0x90] sm:$0xff]
    %v43 = vld [vmem:[%s1 + $0x98] sm:$0xff]
    %v44 = vld [vmem:[%s1 + $0xa0] sm:$0xff]
    %v45 = vld [vmem:[%s1 + $0xa8] sm:$0xff]
    %v46 = vld [vmem:[%s1 + $0xb0] sm:$0xff]
    %v47 = vld [vmem:[%s1 + $0xb8] sm:$0xff]
    %v48 = vld [vmem:[%s1 + $0xc0] sm:$0xff]
    %v49 = vld [vmem:[%s1 + $0xc8] sm:$0xff]
    %v50 = vld [vmem:[%s1 + $0xd0] sm:$0xff]
    %v51 = vld [vmem:[%s1 + $0xd8] sm:$0xff]
    %v52 = vld [vmem:[%s1 + $0xe0] sm:$0xff]
    %v53 = vld [vmem:[%s1 + $0xe8] sm:$0xff]
    %v54 = vld [vmem:[%s1 + $0xf0] sm:$0x11]
    %v55 = vld [vmem:[%s1 + $0xf8] sm:$0x11]
    %v56 = vld [vmem:[%s1 + $0x100] sm:$0x11]
    %v57 = vld [vmem:[%s1 + $0x108] sm:$0x11]
    %v58 = vld [vmem:[%s1 + $0x110] sm:$0x11]
    %v59 = vld [vmem:[%s1 + $0x118] sm:$0x11]
    %v60 = vld [vmem:[%s1 + $0x120] sm:$0x11]
    %v61 = vld [vmem:[%s1 + $0x128] sm:$0x11]
    %v62 = vld [vmem:[%s1 + $0x130] sm:$0x11]
    %v63 = vld [vmem:[%s1 + $0x138] sm:$0x11]
    %v64 = vld [vmem:[%s1 + $0x140] sm:$0x11]
    %v65 = vld [vmem:[%s1 + $0x148] sm:$0x11]
    %v66 = vld [vmem:[%s1 + $0x150] sm:$0x11]
    %v67 = vld [vmem:[%s1 + $0x158] sm:$0x11]
    %v68 = vld [vmem:[%s1 + $0x160] sm:$0x11]
    %v69 = vld [vmem:[%s1 + $0x168] sm:$0x11]
    %v70 = vld [vmem:[%s1 + $0x170] sm:$0x11]
    %v71 = vld [vmem:[%s1 + $0x178] sm:$0x11]
    %v72 = vld [vmem:[%s1 + $0x180] sm:$0x11]
    %v73 = vld [vmem:[%s1 + $0x188] sm:$0x11]
    %v74 = vld [vmem:[%s1 + $0x190] sm:$0x11]
    %v75 = vld [vmem:[%s1 + $0x198] sm:$0x11]
    %v76 = vld [vmem:[%s1 + $0x1a0] sm:$0x11]
    %v77 = vld [vmem:[%s1 + $0x1a8] sm:$0x11]
    %v78 = vld [vmem:[%s1 + $0x1b0] sm:$0x11]
    %v79 = vld [vmem:[%s1 + $0x1b8] sm:$0x11]
    %v80 = vld [vmem:[%s1 + $0x1c0] sm:$0x11]
    %v81 = vld [vmem:[%s1 + $0x1c8] sm:$0x11]
    %v82 = vld [vmem:[%s1 + $0x1d0] sm:$0x11]
    %v83 = vld [vmem:[%s1 + $0x1d8] sm:$0x11]
    %v84 = vld [vmem:[%s2] sm:$0x1]
    %v86 = vlaneseq
    %v87 = vshrl.u32 %v86, 7
    %v88 = vsub.s32 0, %v87
    %v89 = vrot.slane %v84, %v88
    %v99 = vcombine.high %v16, %v16
    %v101 = vunpack.c.l.s4 1966171168
    %v102 = vunpack.c.0.s8 %v101
    %v103 = vlaneseq
    %v104 = vshrl.u32 %v103, 7
    %v105 = vsub.s32 %v102, %v104
    %v106 = vrot.slane %v16, %v105
    %v108 = vunpack.c.l.s4 1966171168
    %v109 = vunpack.c.0.s8 %v108
    %v110 = vlaneseq
    %v111 = vshrl.u32 %v110, 7
    %v112 = vsub.s32 %v109, %v111
    %v113 = vrot.slane %v99, %v112
    %v114 = vcombine.high %v106, %v106
    %v115 = vcombine.high %v113, %v113
    %v117 = vunpack.c.l.s4 1966171168
    %v118 = vunpack.c.0.s8 %v117
    %v119 = vlaneseq
    %v120 = vshrl.u32 %v119, 7
    %v121 = vsub.s32 %v118, %v120
    %v122 = vrot.slane %v106, %v121
    %v124 = vunpack.c.l.s4 1966171168
    %v125 = vunpack.c.0.s8 %v124
    %v126 = vlaneseq
    %v127 = vshrl.u32 %v126, 7
    %v128 = vsub.s32 %v125, %v127
    %v129 = vrot.slane %v113, %v128
    %v131 = vunpack.c.l.s4 1966171168
    %v132 = vunpack.c.0.s8 %v131
    %v133 = vlaneseq
    %v134 = vshrl.u32 %v133, 7
    %v135 = vsub.s32 %v132, %v134
    %v136 = vrot.slane %v114, %v135
    %v138 = vunpack.c.l.s4 1966171168
    %v139 = vunpack.c.0.s8 %v138
    %v140 = vlaneseq
    %v141 = vshrl.u32 %v140, 7
    %v142 = vsub.s32 %v139, %v141
    %v143 = vrot.slane %v115, %v142
    %v144 = vcombine.high %v122, %v122
    %v145 = vcombine.high %v129, %v129
    %v146 = vcombine.high %v136, %v136
    %v147 = vcombine.high %v143, %v143
    %v148 = vcombine.high %v17, %v17
    %v150 = vunpack.c.l.s4 1966171168
    %v151 = vunpack.c.0.s8 %v150
    %v152 = vlaneseq
    %v153 = vshrl.u32 %v152, 7
    %v154 = vsub.s32 %v151, %v153
    %v155 = vrot.slane %v17, %v154
    %v157 = vunpack.c.l.s4 1966171168
    %v158 = vunpack.c.0.s8 %v157
    %v159 = vlaneseq
    %v160 = vshrl.u32 %v159, 7
    %v161 = vsub.s32 %v158, %v160
    %v162 = vrot.slane %v148, %v161
    %v163 = vcombine.high %v155, %v155
    %v164 = vcombine.high %v162, %v162
    %v166 = vunpack.c.l.s4 1966171168
    %v167 = vunpack.c.0.s8 %v166
    %v168 = vlaneseq
    %v169 = vshrl.u32 %v168, 7
    %v170 = vsub.s32 %v167, %v169
    %v171 = vrot.slane %v155, %v170
    %v173 = vunpack.c.l.s4 1966171168
    %v174 = vunpack.c.0.s8 %v173
    %v175 = vlaneseq
    %v176 = vshrl.u32 %v175, 7
    %v177 = vsub.s32 %v174, %v176
    %v178 = vrot.slane %v162, %v177
    %v180 = vunpack.c.l.s4 1966171168
    %v181 = vunpack.c.0.s8 %v180
    %v182 = vlaneseq
    %v183 = vshrl.u32 %v182, 7
    %v184 = vsub.s32 %v181, %v183
    %v185 = vrot.slane %v163, %v184
    %v187 = vunpack.c.l.s4 1966171168
    %v188 = vunpack.c.0.s8 %v187
    %v189 = vlaneseq
    %v190 = vshrl.u32 %v189, 7
    %v191 = vsub.s32 %v188, %v190
    %v192 = vrot.slane %v164, %v191
    %v193 = vcombine.high %v171, %v171
    %v194 = vcombine.high %v178, %v178
    %v195 = vcombine.high %v185, %v185
    %v196 = vcombine.high %v192, %v192
    %v197 = vcombine.high %v18, %v18
    %v199 = vunpack.c.l.s4 1966171168
    %v200 = vunpack.c.0.s8 %v199
    %v201 = vlaneseq
    %v202 = vshrl.u32 %v201, 7
    %v203 = vsub.s32 %v200, %v202
    %v204 = vrot.slane %v18, %v203
    %v206 = vunpack.c.l.s4 1966171168
    %v207 = vunpack.c.0.s8 %v206
    %v208 = vlaneseq
    %v209 = vshrl.u32 %v208, 7
    %v210 = vsub.s32 %v207, %v209
    %v211 = vrot.slane %v197, %v210
    %v212 = vcombine.high %v204, %v204
    %v213 = vcombine.high %v211, %v211
    %v215 = vunpack.c.l.s4 1966171168
    %v216 = vunpack.c.0.s8 %v215
    %v217 = vlaneseq
    %v218 = vshrl.u32 %v217, 7
    %v219 = vsub.s32 %v216, %v218
    %v220 = vrot.slane %v204, %v219
    %v222 = vunpack.c.l.s4 1966171168
    %v223 = vunpack.c.0.s8 %v222
    %v224 = vlaneseq
    %v225 = vshrl.u32 %v224, 7
    %v226 = vsub.s32 %v223, %v225
    %v227 = vrot.slane %v211, %v226
    %v229 = vunpack.c.l.s4 1966171168
    %v230 = vunpack.c.0.s8 %v229
    %v231 = vlaneseq
    %v232 = vshrl.u32 %v231, 7
    %v233 = vsub.s32 %v230, %v232
    %v234 = vrot.slane %v212, %v233
    %v236 = vunpack.c.l.s4 1966171168
    %v237 = vunpack.c.0.s8 %v236
    %v238 = vlaneseq
    %v239 = vshrl.u32 %v238, 7
    %v240 = vsub.s32 %v237, %v239
    %v241 = vrot.slane %v213, %v240
    %v242 = vcombine.high %v220, %v220
    %v243 = vcombine.high %v227, %v227
    %v244 = vcombine.high %v234, %v234
    %v245 = vcombine.high %v241, %v241
    %v246 = vcombine.high %v19, %v19
    %v248 = vunpack.c.l.s4 1966171168
    %v249 = vunpack.c.0.s8 %v248
    %v250 = vlaneseq
    %v251 = vshrl.u32 %v250, 7
    %v252 = vsub.s32 %v249, %v251
    %v253 = vrot.slane %v19, %v252
    %v255 = vunpack.c.l.s4 1966171168
    %v256 = vunpack.c.0.s8 %v255
    %v257 = vlaneseq
    %v258 = vshrl.u32 %v257, 7
    %v259 = vsub.s32 %v256, %v258
    %v260 = vrot.slane %v246, %v259
    %v261 = vcombine.high %v253, %v253
    %v262 = vcombine.high %v260, %v260
    %v264 = vunpack.c.l.s4 1966171168
    %v265 = vunpack.c.0.s8 %v264
    %v266 = vlaneseq
    %v267 = vshrl.u32 %v266, 7
    %v268 = vsub.s32 %v265, %v267
    %v269 = vrot.slane %v253, %v268
    %v271 = vunpack.c.l.s4 1966171168
    %v272 = vunpack.c.0.s8 %v271
    %v273 = vlaneseq
    %v274 = vshrl.u32 %v273, 7
    %v275 = vsub.s32 %v272, %v274
    %v276 = vrot.slane %v260, %v275
    %v278 = vunpack.c.l.s4 1966171168
    %v279 = vunpack.c.0.s8 %v278
    %v280 = vlaneseq
    %v281 = vshrl.u32 %v280, 7
    %v282 = vsub.s32 %v279, %v281
    %v283 = vrot.slane %v261, %v282
    %v285 = vunpack.c.l.s4 1966171168
    %v286 = vunpack.c.0.s8 %v285
    %v287 = vlaneseq
    %v288 = vshrl.u32 %v287, 7
    %v289 = vsub.s32 %v286, %v288
    %v290 = vrot.slane %v262, %v289
    %v291 = vcombine.high %v269, %v269
    %v292 = vcombine.high %v276, %v276
    %v293 = vcombine.high %v283, %v283
    %v294 = vcombine.high %v290, %v290
    %v295 = vcombine.high %v20, %v20
    %v297 = vunpack.c.l.s4 1966171168
    %v298 = vunpack.c.0.s8 %v297
    %v299 = vlaneseq
    %v300 = vshrl.u32 %v299, 7
    %v301 = vsub.s32 %v298, %v300
    %v302 = vrot.slane %v20, %v301
    %v304 = vunpack.c.l.s4 1966171168
    %v305 = vunpack.c.0.s8 %v304
    %v306 = vlaneseq
    %v307 = vshrl.u32 %v306, 7
    %v308 = vsub.s32 %v305, %v307
    %v309 = vrot.slane %v295, %v308
    %v310 = vcombine.high %v302, %v302
    %v311 = vcombine.high %v309, %v309
    %v313 = vunpack.c.l.s4 1966171168
    %v314 = vunpack.c.0.s8 %v313
    %v315 = vlaneseq
    %v316 = vshrl.u32 %v315, 7
    %v317 = vsub.s32 %v314, %v316
    %v318 = vrot.slane %v302, %v317
    %v320 = vunpack.c.l.s4 1966171168
    %v321 = vunpack.c.0.s8 %v320
    %v322 = vlaneseq
    %v323 = vshrl.u32 %v322, 7
    %v324 = vsub.s32 %v321, %v323
    %v325 = vrot.slane %v309, %v324
    %v327 = vunpack.c.l.s4 1966171168
    %v328 = vunpack.c.0.s8 %v327
    %v329 = vlaneseq
    %v330 = vshrl.u32 %v329, 7
    %v331 = vsub.s32 %v328, %v330
    %v332 = vrot.slane %v310, %v331
    %v334 = vunpack.c.l.s4 1966171168
    %v335 = vunpack.c.0.s8 %v334
    %v336 = vlaneseq
    %v337 = vshrl.u32 %v336, 7
    %v338 = vsub.s32 %v335, %v337
    %v339 = vrot.slane %v311, %v338
    %v340 = vcombine.high %v318, %v318
    %v341 = vcombine.high %v325, %v325
    %v342 = vcombine.high %v332, %v332
    %v343 = vcombine.high %v339, %v339
    %v344 = vcombine.high %v21, %v21
    %v346 = vunpack.c.l.s4 1966171168
    %v347 = vunpack.c.0.s8 %v346
    %v348 = vlaneseq
    %v349 = vshrl.u32 %v348, 7
    %v350 = vsub.s32 %v347, %v349
    %v351 = vrot.slane %v21, %v350
    %v353 = vunpack.c.l.s4 1966171168
    %v354 = vunpack.c.0.s8 %v353
    %v355 = vlaneseq
    %v356 = vshrl.u32 %v355, 7
    %v357 = vsub.s32 %v354, %v356
    %v358 = vrot.slane %v344, %v357
    %v359 = vcombine.high %v351, %v351
    %v360 = vcombine.high %v358, %v358
    %v362 = vunpack.c.l.s4 1966171168
    %v363 = vunpack.c.0.s8 %v362
    %v364 = vlaneseq
    %v365 = vshrl.u32 %v364, 7
    %v366 = vsub.s32 %v363, %v365
    %v367 = vrot.slane %v351, %v366
    %v369 = vunpack.c.l.s4 1966171168
    %v370 = vunpack.c.0.s8 %v369
    %v371 = vlaneseq
    %v372 = vshrl.u32 %v371, 7
    %v373 = vsub.s32 %v370, %v372
    %v374 = vrot.slane %v358, %v373
    %v376 = vunpack.c.l.s4 1966171168
    %v377 = vunpack.c.0.s8 %v376
    %v378 = vlaneseq
    %v379 = vshrl.u32 %v378, 7
    %v380 = vsub.s32 %v377, %v379
    %v381 = vrot.slane %v359, %v380
    %v383 = vunpack.c.l.s4 1966171168
    %v384 = vunpack.c.0.s8 %v383
    %v385 = vlaneseq
    %v386 = vshrl.u32 %v385, 7
    %v387 = vsub.s32 %v384, %v386
    %v388 = vrot.slane %v360, %v387
    %v389 = vcombine.high %v367, %v367
    %v390 = vcombine.high %v374, %v374
    %v391 = vcombine.high %v381, %v381
    %v392 = vcombine.high %v388, %v388
    %v393 = vcombine.high %v22, %v22
    %v395 = vunpack.c.l.s4 1966171168
    %v396 = vunpack.c.0.s8 %v395
    %v397 = vlaneseq
    %v398 = vshrl.u32 %v397, 7
    %v399 = vsub.s32 %v396, %v398
    %v400 = vrot.slane %v22, %v399
    %v402 = vunpack.c.l.s4 1966171168
    %v403 = vunpack.c.0.s8 %v402
    %v404 = vlaneseq
    %v405 = vshrl.u32 %v404, 7
    %v406 = vsub.s32 %v403, %v405
    %v407 = vrot.slane %v393, %v406
    %v408 = vcombine.high %v400, %v400
    %v409 = vcombine.high %v407, %v407
    %v411 = vunpack.c.l.s4 1966171168
    %v412 = vunpack.c.0.s8 %v411
    %v413 = vlaneseq
    %v414 = vshrl.u32 %v413, 7
    %v415 = vsub.s32 %v412, %v414
    %v416 = vrot.slane %v400, %v415
    %v418 = vunpack.c.l.s4 1966171168
    %v419 = vunpack.c.0.s8 %v418
    %v420 = vlaneseq
    %v421 = vshrl.u32 %v420, 7
    %v422 = vsub.s32 %v419, %v421
    %v423 = vrot.slane %v407, %v422
    %v425 = vunpack.c.l.s4 1966171168
    %v426 = vunpack.c.0.s8 %v425
    %v427 = vlaneseq
    %v428 = vshrl.u32 %v427, 7
    %v429 = vsub.s32 %v426, %v428
    %v430 = vrot.slane %v408, %v429
    %v432 = vunpack.c.l.s4 1966171168
    %v433 = vunpack.c.0.s8 %v432
    %v434 = vlaneseq
    %v435 = vshrl.u32 %v434, 7
    %v436 = vsub.s32 %v433, %v435
    %v437 = vrot.slane %v409, %v436
    %v438 = vcombine.high %v416, %v416
    %v439 = vcombine.high %v423, %v423
    %v440 = vcombine.high %v430, %v430
    %v441 = vcombine.high %v437, %v437
    %v443 = vunpack.c.l.s4 1966171168
    %v444 = vunpack.c.0.s8 %v443
    %v445 = vlaneseq
    %v446 = vshrl.u32 %v445, 7
    %v447 = vsub.s32 %v444, %v446
    %v448 = vrot.slane %v23, %v447
    %v449 = vcombine.high %v448, %v448
    %v451 = vunpack.c.l.s4 1966171168
    %v452 = vunpack.c.0.s8 %v451
    %v453 = vlaneseq
    %v454 = vshrl.u32 %v453, 7
    %v455 = vsub.s32 %v452, %v454
    %v456 = vrot.slane %v448, %v455
    %v458 = vunpack.c.l.s4 1966171168
    %v459 = vunpack.c.0.s8 %v458
    %v460 = vlaneseq
    %v461 = vshrl.u32 %v460, 7
    %v462 = vsub.s32 %v459, %v461
    %v463 = vrot.slane %v449, %v462
    %v464 = vcombine.high %v456, %v456
    %v465 = vcombine.high %v463, %v463
    %v586 = vunpack.c.l.b16 %v24
    %v587 = vunpack.c.h.b16 %v24
    %v588 = vunpack.c.l.b16 %v25
    %v589 = vunpack.c.h.b16 %v25
    %v590 = vunpack.c.l.b16 %v26
    %v591 = vunpack.c.h.b16 %v26
    %v592 = vunpack.c.l.b16 %v27
    %v593 = vunpack.c.h.b16 %v27
    %v594 = vunpack.c.l.b16 %v28
    %v595 = vunpack.c.h.b16 %v28
    %v596 = vunpack.c.l.b16 %v29
    %v597 = vunpack.c.h.b16 %v29
    %v598 = vunpack.c.l.b16 %v30
    %v599 = vunpack.c.h.b16 %v30
    %v600 = vunpack.c.l.b16 %v31
    %v601 = vunpack.c.h.b16 %v31
    %v602 = vunpack.c.l.b16 %v32
    %v603 = vunpack.c.h.b16 %v32
    %v604 = vunpack.c.l.b16 %v33
    %v605 = vunpack.c.h.b16 %v33
    %v606 = vunpack.c.l.b16 %v34
    %v607 = vunpack.c.h.b16 %v34
    %v608 = vunpack.c.l.b16 %v35
    %v609 = vunpack.c.h.b16 %v35
    %v610 = vunpack.c.l.b16 %v36
    %v611 = vunpack.c.h.b16 %v36
    %v612 = vunpack.c.l.b16 %v37
    %v613 = vunpack.c.h.b16 %v37
    %v614 = vunpack.c.l.b16 %v38
    %v615 = vunpack.c.h.b16 %v38
    %v616 = vunpack.c.l.b16 %v39
    %v617 = vunpack.c.h.b16 %v39
    %v618 = vunpack.c.l.b16 %v40
    %v619 = vunpack.c.h.b16 %v40
    %v620 = vunpack.c.l.b16 %v41
    %v621 = vunpack.c.h.b16 %v41
    %v622 = vunpack.c.l.b16 %v42
    %v623 = vunpack.c.h.b16 %v42
    %v624 = vunpack.c.l.b16 %v43
    %v625 = vunpack.c.h.b16 %v43
    %v626 = vunpack.c.l.b16 %v44
    %v627 = vunpack.c.h.b16 %v44
    %v628 = vunpack.c.l.b16 %v45
    %v629 = vunpack.c.h.b16 %v45
    %v630 = vunpack.c.l.b16 %v46
    %v631 = vunpack.c.h.b16 %v46
    %v632 = vunpack.c.l.b16 %v47
    %v633 = vunpack.c.h.b16 %v47
    %v634 = vunpack.c.l.b16 %v48
    %v635 = vunpack.c.h.b16 %v48
    %v636 = vunpack.c.l.b16 %v49
    %v637 = vunpack.c.h.b16 %v49
    %v638 = vunpack.c.l.b16 %v50
    %v639 = vunpack.c.h.b16 %v50
    %v640 = vunpack.c.l.b16 %v51
    %v641 = vunpack.c.h.b16 %v51
    %v642 = vunpack.c.l.b16 %v52
    %v643 = vunpack.c.h.b16 %v52
    %v644 = vunpack.c.l.b16 %v53
    %v645 = vunpack.c.h.b16 %v53
    %v646 = vunpack.c.l.b16 %v54
    %v647 = vunpack.c.h.b16 %v54
    %v648 = vunpack.c.l.b16 %v55
    %v649 = vunpack.c.h.b16 %v55
    %v650 = vunpack.c.l.b16 %v56
    %v651 = vunpack.c.h.b16 %v56
    %v652 = vunpack.c.l.b16 %v57
    %v653 = vunpack.c.h.b16 %v57
    %v654 = vunpack.c.l.b16 %v58
    %v655 = vunpack.c.h.b16 %v58
    %v656 = vunpack.c.l.b16 %v59
    %v657 = vunpack.c.h.b16 %v59
    %v658 = vunpack.c.l.b16 %v60
    %v659 = vunpack.c.h.b16 %v60
    %v660 = vunpack.c.l.b16 %v61
    %v661 = vunpack.c.h.b16 %v61
    %v662 = vunpack.c.l.b16 %v62
    %v663 = vunpack.c.h.b16 %v62
    %v664 = vunpack.c.l.b16 %v63
    %v665 = vunpack.c.h.b16 %v63
    %v666 = vunpack.c.l.b16 %v64
    %v667 = vunpack.c.h.b16 %v64
    %v668 = vunpack.c.l.b16 %v65
    %v669 = vunpack.c.h.b16 %v65
    %v670 = vunpack.c.l.b16 %v66
    %v671 = vunpack.c.h.b16 %v66
    %v672 = vunpack.c.l.b16 %v67
    %v673 = vunpack.c.h.b16 %v67
    %v674 = vunpack.c.l.b16 %v68
    %v675 = vunpack.c.h.b16 %v68
    %v676 = vunpack.c.l.b16 %v69
    %v677 = vunpack.c.h.b16 %v69
    %v678 = vunpack.c.l.b16 %v70
    %v679 = vunpack.c.h.b16 %v70
    %v680 = vunpack.c.l.b16 %v71
    %v681 = vunpack.c.h.b16 %v71
    %v682 = vunpack.c.l.b16 %v72
    %v683 = vunpack.c.h.b16 %v72
    %v684 = vunpack.c.l.b16 %v73
    %v685 = vunpack.c.h.b16 %v73
    %v686 = vunpack.c.l.b16 %v74
    %v687 = vunpack.c.h.b16 %v74
    %v688 = vunpack.c.l.b16 %v75
    %v689 = vunpack.c.h.b16 %v75
    %v690 = vunpack.c.l.b16 %v76
    %v691 = vunpack.c.h.b16 %v76
    %v692 = vunpack.c.l.b16 %v77
    %v693 = vunpack.c.h.b16 %v77
    %v694 = vunpack.c.l.b16 %v78
    %v695 = vunpack.c.h.b16 %v78
    %v696 = vunpack.c.l.b16 %v79
    %v697 = vunpack.c.h.b16 %v79
    %v698 = vunpack.c.l.b16 %v80
    %v699 = vunpack.c.h.b16 %v80
    %v700 = vunpack.c.l.b16 %v81
    %v701 = vunpack.c.h.b16 %v81
    %v702 = vunpack.c.l.b16 %v82
    %v703 = vunpack.c.h.b16 %v82
    %v704 = vunpack.c.l.b16 %v83
    %v705 = vunpack.c.h.b16 %v83
    %v706 = vpack.c.b16 %v646, %v586
    %v707 = vpack.c.b16 %v647, %v587
    %v708 = vpack.c.b16 %v648, %v588
    %v709 = vpack.c.b16 %v649, %v589
    %v710 = vpack.c.b16 %v650, %v590
    %v711 = vpack.c.b16 %v651, %v591
    %v712 = vpack.c.b16 %v652, %v592
    %v713 = vpack.c.b16 %v653, %v593
    %v714 = vpack.c.b16 %v654, %v594
    %v715 = vpack.c.b16 %v655, %v595
    %v716 = vpack.c.b16 %v656, %v596
    %v717 = vpack.c.b16 %v657, %v597
    %v718 = vpack.c.b16 %v658, %v598
    %v719 = vpack.c.b16 %v659, %v599
    %v720 = vpack.c.b16 %v660, %v600
    %v721 = vpack.c.b16 %v661, %v601
    %v722 = vpack.c.b16 %v662, %v602
    %v723 = vpack.c.b16 %v663, %v603
    %v724 = vpack.c.b16 %v664, %v604
    %v725 = vpack.c.b16 %v665, %v605
    %v726 = vpack.c.b16 %v666, %v606
    %v727 = vpack.c.b16 %v667, %v607
    %v728 = vpack.c.b16 %v668, %v608
    %v729 = vpack.c.b16 %v669, %v609
    %v730 = vpack.c.b16 %v670, %v610
    %v731 = vpack.c.b16 %v671, %v611
    %v732 = vpack.c.b16 %v672, %v612
    %v733 = vpack.c.b16 %v673, %v613
    %v734 = vpack.c.b16 %v674, %v614
    %v735 = vpack.c.b16 %v675, %v615
    %v736 = vpack.c.b16 %v676, %v616
    %v737 = vpack.c.b16 %v677, %v617
    %v738 = vpack.c.b16 %v678, %v618
    %v739 = vpack.c.b16 %v679, %v619
    %v740 = vpack.c.b16 %v680, %v620
    %v741 = vpack.c.b16 %v681, %v621
    %v742 = vpack.c.b16 %v682, %v622
    %v743 = vpack.c.b16 %v683, %v623
    %v744 = vpack.c.b16 %v684, %v624
    %v745 = vpack.c.b16 %v685, %v625
    %v746 = vpack.c.b16 %v686, %v626
    %v747 = vpack.c.b16 %v687, %v627
    %v748 = vpack.c.b16 %v688, %v628
    %v749 = vpack.c.b16 %v689, %v629
    %v750 = vpack.c.b16 %v690, %v630
    %v751 = vpack.c.b16 %v691, %v631
    %v752 = vpack.c.b16 %v692, %v632
    %v753 = vpack.c.b16 %v693, %v633
    %v754 = vpack.c.b16 %v694, %v634
    %v755 = vpack.c.b16 %v695, %v635
    %v756 = vpack.c.b16 %v696, %v636
    %v757 = vpack.c.b16 %v697, %v637
    %v758 = vpack.c.b16 %v698, %v638
    %v759 = vpack.c.b16 %v699, %v639
    %v760 = vpack.c.b16 %v700, %v640
    %v761 = vpack.c.b16 %v701, %v641
    %v762 = vpack.c.b16 %v702, %v642
    %v763 = vpack.c.b16 %v703, %v643
    %v764 = vpack.c.b16 %v704, %v644
    %v765 = vpack.c.b16 %v705, %v645
    %826 = vmatprep.subr.bf16.mxu0 %v707
    %827 = vmatpush1.bf16.xpose.msra.mxu0 %v706
    %828 = vmatprep.subr.bf16.mxu0 0
    %829 = vmatpush1.bf16.xpose.msra.mxu0 0
    %830 = vmatprep.subr.bf16.mxu0 0
    %831 = vmatpush1.bf16.xpose.msra.mxu0 0
    %832 = vmatprep.subr.bf16.mxu0 0
    %833 = vmatpush1.bf16.xpose.msra.mxu0 0
    %834 = vmatprep.subr.bf16.mxu0 0
    %835 = vmatpush1.bf16.xpose.msra.mxu0 0
    %836 = vmatprep.subr.bf16.mxu0 0
    %837 = vmatpush1.bf16.xpose.msra.mxu0 0
    %838 = vmatprep.subr.bf16.mxu0 0
    %839 = vmatpush1.bf16.xpose.msra.mxu0 0
    %840 = vmatprep.subr.bf16.mxu0 0
    %841 = vmatpush1.bf16.xpose.msra.mxu0 0
    %842 = vmatprep.subr.bf16.mxu0 0
    %843 = vmatpush1.bf16.xpose.msra.mxu0 0
    %844 = vmatprep.subr.bf16.mxu0 0
    %845 = vmatpush1.bf16.xpose.msra.mxu0 0
    %846 = vmatprep.subr.bf16.mxu0 0
    %847 = vmatpush1.bf16.xpose.msra.mxu0 0
    %848 = vmatprep.subr.bf16.mxu0 0
    %849 = vmatpush1.bf16.xpose.msra.mxu0 0
    %850 = vmatprep.subr.bf16.mxu0 0
    %851 = vmatpush1.bf16.xpose.msra.mxu0 0
    %852 = vmatprep.subr.bf16.mxu0 0
    %853 = vmatpush1.bf16.xpose.msra.mxu0 0
    %854 = vmatprep.subr.bf16.mxu0 0
    %855 = vmatpush1.bf16.xpose.msra.mxu0 0
    %856 = vmatprep.subr.bf16.mxu0 0
    %857 = vmatpush1.bf16.xpose.msra.mxu0 0
    %858 = vmatprep.mubr.bf16.mxu0 %v136
    %859 = vmatmul.mubr.bf16.gmra.mrb[0].mxu0 %v122
    %v860 = vpop.f32.mrb[0].mxu0
    %v861 = vadd.f32 %v89, %v860
    %v862 = vpop.f32.mrb[0].mxu0
    %v863 = vpop.f32.mrb[0].mxu0
    %v864 = vpop.f32.mrb[0].mxu0
    %865 = vdwg.mxu0
    %866 = vmatprep.subr.bf16.mxu0 %v709
    %867 = vmatpush1.bf16.xpose.msra.mxu0 %v708
    %868 = vmatprep.subr.bf16.mxu0 0
    %869 = vmatpush1.bf16.xpose.msra.mxu0 0
    %870 = vmatprep.subr.bf16.mxu0 0
    %871 = vmatpush1.bf16.xpose.msra.mxu0 0
    %872 = vmatprep.subr.bf16.mxu0 0
    %873 = vmatpush1.bf16.xpose.msra.mxu0 0
    %874 = vmatprep.subr.bf16.mxu0 0
    %875 = vmatpush1.bf16.xpose.msra.mxu0 0
    %876 = vmatprep.subr.bf16.mxu0 0
    %877 = vmatpush1.bf16.xpose.msra.mxu0 0
    %878 = vmatprep.subr.bf16.mxu0 0
    %879 = vmatpush1.bf16.xpose.msra.mxu0 0
    %880 = vmatprep.subr.bf16.mxu0 0
    %881 = vmatpush1.bf16.xpose.msra.mxu0 0
    %882 = vmatprep.subr.bf16.mxu0 0
    %883 = vmatpush1.bf16.xpose.msra.mxu0 0
    %884 = vmatprep.subr.bf16.mxu0 0
    %885 = vmatpush1.bf16.xpose.msra.mxu0 0
    %886 = vmatprep.subr.bf16.mxu0 0
    %887 = vmatpush1.bf16.xpose.msra.mxu0 0
    %888 = vmatprep.subr.bf16.mxu0 0
    %889 = vmatpush1.bf16.xpose.msra.mxu0 0
    %890 = vmatprep.subr.bf16.mxu0 0
    %891 = vmatpush1.bf16.xpose.msra.mxu0 0
    %892 = vmatprep.subr.bf16.mxu0 0
    %893 = vmatpush1.bf16.xpose.msra.mxu0 0
    %894 = vmatprep.subr.bf16.mxu0 0
    %895 = vmatpush1.bf16.xpose.msra.mxu0 0
    %896 = vmatprep.subr.bf16.mxu0 0
    %897 = vmatpush1.bf16.xpose.msra.mxu0 0
    %898 = vmatprep.mubr.bf16.mxu0 %v146
    %899 = vmatmul.mubr.bf16.gmra.mrb[0].mxu0 %v144
    %v900 = vpop.f32.mrb[0].mxu0
    %v901 = vadd.f32 %v861, %v900
    %v902 = vpop.f32.mrb[0].mxu0
    %v903 = vpop.f32.mrb[0].mxu0
    %v904 = vpop.f32.mrb[0].mxu0
    %905 = vdwg.mxu0
    %906 = vmatprep.subr.bf16.mxu0 %v711
    %907 = vmatpush1.bf16.xpose.msra.mxu0 %v710
    %908 = vmatprep.subr.bf16.mxu0 0
    %909 = vmatpush1.bf16.xpose.msra.mxu0 0
    %910 = vmatprep.subr.bf16.mxu0 0
    %911 = vmatpush1.bf16.xpose.msra.mxu0 0
    %912 = vmatprep.subr.bf16.mxu0 0
    %913 = vmatpush1.bf16.xpose.msra.mxu0 0
    %914 = vmatprep.subr.bf16.mxu0 0
    %915 = vmatpush1.bf16.xpose.msra.mxu0 0
    %916 = vmatprep.subr.bf16.mxu0 0
    %917 = vmatpush1.bf16.xpose.msra.mxu0 0
    %918 = vmatprep.subr.bf16.mxu0 0
    %919 = vmatpush1.bf16.xpose.msra.mxu0 0
    %920 = vmatprep.subr.bf16.mxu0 0
    %921 = vmatpush1.bf16.xpose.msra.mxu0 0
    %922 = vmatprep.subr.bf16.mxu0 0
    %923 = vmatpush1.bf16.xpose.msra.mxu0 0
    %924 = vmatprep.subr.bf16.mxu0 0
    %925 = vmatpush1.bf16.xpose.msra.mxu0 0
    %926 = vmatprep.subr.bf16.mxu0 0
    %927 = vmatpush1.bf16.xpose.msra.mxu0 0
    %928 = vmatprep.subr.bf16.mxu0 0
    %929 = vmatpush1.bf16.xpose.msra.mxu0 0
    %930 = vmatprep.subr.bf16.mxu0 0
    %931 = vmatpush1.bf16.xpose.msra.mxu0 0
    %932 = vmatprep.subr.bf16.mxu0 0
    %933 = vmatpush1.bf16.xpose.msra.mxu0 0
    %934 = vmatprep.subr.bf16.mxu0 0
    %935 = vmatpush1.bf16.xpose.msra.mxu0 0
    %936 = vmatprep.subr.bf16.mxu0 0
    %937 = vmatpush1.bf16.xpose.msra.mxu0 0
    %938 = vmatprep.mubr.bf16.mxu0 %v143
    %939 = vmatmul.mubr.bf16.gmra.mrb[0].mxu0 %v129
    %v940 = vpop.f32.mrb[0].mxu0
    %v941 = vadd.f32 %v901, %v940
    %v942 = vpop.f32.mrb[0].mxu0
    %v943 = vpop.f32.mrb[0].mxu0
    %v944 = vpop.f32.mrb[0].mxu0
    %945 = vdwg.mxu0
    %946 = vmatprep.subr.bf16.mxu0 %v713
    %947 = vmatpush1.bf16.xpose.msra.mxu0 %v712
    %948 = vmatprep.subr.bf16.mxu0 0
    %949 = vmatpush1.bf16.xpose.msra.mxu0 0
    %950 = vmatprep.subr.bf16.mxu0 0
    %951 = vmatpush1.bf16.xpose.msra.mxu0 0
    %952 = vmatprep.subr.bf16.mxu0 0
    %953 = vmatpush1.bf16.xpose.msra.mxu0 0
    %954 = vmatprep.subr.bf16.mxu0 0
    %955 = vmatpush1.bf16.xpose.msra.mxu0 0
    %956 = vmatprep.subr.bf16.mxu0 0
    %957 = vmatpush1.bf16.xpose.msra.mxu0 0
    %958 = vmatprep.subr.bf16.mxu0 0
    %959 = vmatpush1.bf16.xpose.msra.mxu0 0
    %960 = vmatprep.subr.bf16.mxu0 0
    %961 = vmatpush1.bf16.xpose.msra.mxu0 0
    %962 = vmatprep.subr.bf16.mxu0 0
    %963 = vmatpush1.bf16.xpose.msra.mxu0 0
    %964 = vmatprep.subr.bf16.mxu0 0
    %965 = vmatpush1.bf16.xpose.msra.mxu0 0
    %966 = vmatprep.subr.bf16.mxu0 0
    %967 = vmatpush1.bf16.xpose.msra.mxu0 0
    %968 = vmatprep.subr.bf16.mxu0 0
    %969 = vmatpush1.bf16.xpose.msra.mxu0 0
    %970 = vmatprep.subr.bf16.mxu0 0
    %971 = vmatpush1.bf16.xpose.msra.mxu0 0
    %972 = vmatprep.subr.bf16.mxu0 0
    %973 = vmatpush1.bf16.xpose.msra.mxu0 0
    %974 = vmatprep.subr.bf16.mxu0 0
    %975 = vmatpush1.bf16.xpose.msra.mxu0 0
    %976 = vmatprep.subr.bf16.mxu0 0
    %977 = vmatpush1.bf16.xpose.msra.mxu0 0
    %978 = vmatprep.mubr.bf16.mxu0 %v147
    %979 = vmatmul.mubr.bf16.gmra.mrb[0].mxu0 %v145
    %v980 = vpop.f32.mrb[0].mxu0
    %v981 = vadd.f32 %v941, %v980
    %v982 = vpop.f32.mrb[0].mxu0
    %v983 = vpop.f32.mrb[0].mxu0
    %v984 = vpop.f32.mrb[0].mxu0
    %985 = vdwg.mxu0
    %986 = vmatprep.subr.bf16.mxu0 %v715
    %987 = vmatpush1.bf16.xpose.msra.mxu0 %v714
    %988 = vmatprep.subr.bf16.mxu0 0
    %989 = vmatpush1.bf16.xpose.msra.mxu0 0
    %990 = vmatprep.subr.bf16.mxu0 0
    %991 = vmatpush1.bf16.xpose.msra.mxu0 0
    %992 = vmatprep.subr.bf16.mxu0 0
    %993 = vmatpush1.bf16.xpose.msra.mxu0 0
    %994 = vmatprep.subr.bf16.mxu0 0
    %995 = vmatpush1.bf16.xpose.msra.mxu0 0
    %996 = vmatprep.subr.bf16.mxu0 0
    %997 = vmatpush1.bf16.xpose.msra.mxu0 0
    %998 = vmatprep.subr.bf16.mxu0 0
    %999 = vmatpush1.bf16.xpose.msra.mxu0 0
    %1000 = vmatprep.subr.bf16.mxu0 0
    %1001 = vmatpush1.bf16.xpose.msra.mxu0 0
    %1002 = vmatprep.subr.bf16.mxu0 0
    %1003 = vmatpush1.bf16.xpose.msra.mxu0 0
    %1004 = vmatprep.subr.bf16.mxu0 0
    %1005 = vmatpush1.bf16.xpose.msra.mxu0 0
    %1006 = vmatprep.subr.bf16.mxu0 0
    %1007 = vmatpush1.bf16.xpose.msra.mxu0 0
    %1008 = vmatprep.subr.bf16.mxu0 0
    %1009 = vmatpush1.bf16.xpose.msra.mxu0 0
    %1010 = vmatprep.subr.bf16.mxu0 0
    %1011 = vmatpush1.bf16.xpose.msra.mxu0 0
    %1012 = vmatprep.subr.bf16.mxu0 0
    %1013 = vmatpush1.bf16.xpose.msra.mxu0 0
    %1014 = vmatprep.subr.bf16.mxu0 0
    %1015 = vmatpush1.bf16.xpose.msra.mxu0 0
    %1016 = vmatprep.subr.bf16.mxu0 0
    %1017 = vmatpush1.bf16.xpose.msra.mxu0 0
    %1018 = vmatprep.mubr.bf16.mxu0 %v185
    %1019 = vmatmul.mubr.bf16.gmra.mrb[0].mxu0 %v171
    %v1020 = vpop.f32.mrb[0].mxu0
    %v1021 = vadd.f32 %v981, %v1020
    %v1022 = vpop.f32.mrb[0].mxu0
    %v1023 = vpop.f32.mrb[0].mxu0
    %v1024 = vpop.f32.mrb[0].mxu0
    %1025 = vdwg.mxu0
    %1026 = vmatprep.subr.bf16.mxu0 %v717
    %1027 = vmatpush1.bf16.xpose.msra.mxu0 %v716
    %1028 = vmatprep.subr.bf16.mxu0 0
    %1029 = vmatpush1.bf16.xpose.msra.mxu0 0
    %1030 = vmatprep.subr.bf16.mxu0 0
    %1031 = vmatpush1.bf16.xpose.msra.mxu0 0
    %1032 = vmatprep.subr.bf16.mxu0 0
    %1033 = vmatpush1.bf16.xpose.msra.mxu0 0
    %1034 = vmatprep.subr.bf16.mxu0 0
    %1035 = vmatpush1.bf16.xpose.msra.mxu0 0
    %1036 = vmatprep.subr.bf16.mxu0 0
    %1037 = vmatpush1.bf16.xpose.msra.mxu0 0
    %1038 = vmatprep.subr.bf16.mxu0 0
    %1039 = vmatpush1.bf16.xpose.msra.mxu0 0
    %1040 = vmatprep.subr.bf16.mxu0 0
    %1041 = vmatpush1.bf16.xpose.msra.mxu0 0
    %1042 = vmatprep.subr.bf16.mxu0 0
    %1043 = vmatpush1.bf16.xpose.msra.mxu0 0
    %1044 = vmatprep.subr.bf16.mxu0 0
    %1045 = vmatpush1.bf16.xpose.msra.mxu0 0
    %1046 = vmatprep.subr.bf16.mxu0 0
    %1047 = vmatpush1.bf16.xpose.msra.mxu0 0
    %1048 = vmatprep.subr.bf16.mxu0 0
    %1049 = vmatpush1.bf16.xpose.msra.mxu0 0
    %1050 = vmatprep.subr.bf16.mxu0 0
    %1051 = vmatpush1.bf16.xpose.msra.mxu0 0
    %1052 = vmatprep.subr.bf16.mxu0 0
    %1053 = vmatpush1.bf16.xpose.msra.mxu0 0
    %1054 = vmatprep.subr.bf16.mxu0 0
    %1055 = vmatpush1.bf16.xpose.msra.mxu0 0
    %1056 = vmatprep.subr.bf16.mxu0 0
    %1057 = vmatpush1.bf16.xpose.msra.mxu0 0
    %1058 = vmatprep.mubr.bf16.mxu0 %v195
    %1059 = vmatmul.mubr.bf16.gmra.mrb[0].mxu0 %v193
    %v1060 = vpop.f32.mrb[0].mxu0
    %v1061 = vadd.f32 %v1021, %v1060
    %v1062 = vpop.f32.mrb[0].mxu0
    %v1063 = vpop.f32.mrb[0].mxu0
    %v1064 = vpop.f32.mrb[0].mxu0
    %1065 = vdwg.mxu0
    %1066 = vmatprep.subr.bf16.mxu0 %v719
    %1067 = vmatpush1.bf16.xpose.msra.mxu0 %v718
    %1068 = vmatprep.subr.bf16.mxu0 0
    %1069 = vmatpush1.bf16.xpose.msra.mxu0 0
    %1070 = vmatprep.subr.bf16.mxu0 0
    %1071 = vmatpush1.bf16.xpose.msra.mxu0 0
    %1072 = vmatprep.subr.bf16.mxu0 0
    %1073 = vmatpush1.bf16.xpose.msra.mxu0 0
    %1074 = vmatprep.subr.bf16.mxu0 0
    %1075 = vmatpush1.bf16.xpose.msra.mxu0 0
    %1076 = vmatprep.subr.bf16.mxu0 0
    %1077 = vmatpush1.bf16.xpose.msra.mxu0 0
    %1078 = vmatprep.subr.bf16.mxu0 0
    %1079 = vmatpush1.bf16.xpose.msra.mxu0 0
    %1080 = vmatprep.subr.bf16.mxu0 0
    %1081 = vmatpush1.bf16.xpose.msra.mxu0 0
    %1082 = vmatprep.subr.bf16.mxu0 0
    %1083 = vmatpush1.bf16.xpose.msra.mxu0 0
    %1084 = vmatprep.subr.bf16.mxu0 0
    %1085 = vmatpush1.bf16.xpose.msra.mxu0 0
    %1086 = vmatprep.subr.bf16.mxu0 0
    %1087 = vmatpush1.bf16.xpose.msra.mxu0 0
    %1088 = vmatprep.subr.bf16.mxu0 0
    %1089 = vmatpush1.bf16.xpose.msra.mxu0 0
    %1090 = vmatprep.subr.bf16.mxu0 0
    %1091 = vmatpush1.bf16.xpose.msra.mxu0 0
    %1092 = vmatprep.subr.bf16.mxu0 0
    %1093 = vmatpush1.bf16.xpose.msra.mxu0 0
    %1094 = vmatprep.subr.bf16.mxu0 0
    %1095 = vmatpush1.bf16.xpose.msra.mxu0 0
    %1096 = vmatprep.subr.bf16.mxu0 0
    %1097 = vmatpush1.bf16.xpose.msra.mxu0 0
    %1098 = vmatprep.mubr.bf16.mxu0 %v192
    %1099 = vmatmul.mubr.bf16.gmra.mrb[0].mxu0 %v178
    %v1100 = vpop.f32.mrb[0].mxu0
    %v1101 = vadd.f32 %v1061, %v1100
    %v1102 = vpop.f32.mrb[0].mxu0
    %v1103 = vpop.f32.mrb[0].mxu0
    %v1104 = vpop.f32.mrb[0].mxu0
    %1105 = vdwg.mxu0
    %1106 = vmatprep.subr.bf16.mxu0 %v721
    %1107 = vmatpush1.bf16.xpose.msra.mxu0 %v720
    %1108 = vmatprep.subr.bf16.mxu0 0
    %1109 = vmatpush1.bf16.xpose.msra.mxu0 0
    %1110 = vmatprep.subr.bf16.mxu0 0
    %1111 = vmatpush1.bf16.xpose.msra.mxu0 0
    %1112 = vmatprep.subr.bf16.mxu0 0
    %1113 = vmatpush1.bf16.xpose.msra.mxu0 0
    %1114 = vmatprep.subr.bf16.mxu0 0
    %1115 = vmatpush1.bf16.xpose.msra.mxu0 0
    %1116 = vmatprep.subr.bf16.mxu0 0
    %1117 = vmatpush1.bf16.xpose.msra.mxu0 0
    %1118 = vmatprep.subr.bf16.mxu0 0
    %1119 = vmatpush1.bf16.xpose.msra.mxu0 0
    %1120 = vmatprep.subr.bf16.mxu0 0
    %1121 = vmatpush1.bf16.xpose.msra.mxu0 0
    %1122 = vmatprep.subr.bf16.mxu0 0
    %1123 = vmatpush1.bf16.xpose.msra.mxu0 0
    %1124 = vmatprep.subr.bf16.mxu0 0
    %1125 = vmatpush1.bf16.xpose.msra.mxu0 0
    %1126 = vmatprep.subr.bf16.mxu0 0
    %1127 = vmatpush1.bf16.xpose.msra.mxu0 0
    %1128 = vmatprep.subr.bf16.mxu0 0
    %1129 = vmatpush1.bf16.xpose.msra.mxu0 0
    %1130 = vmatprep.subr.bf16.mxu0 0
    %1131 = vmatpush1.bf16.xpose.msra.mxu0 0
    %1132 = vmatprep.subr.bf16.mxu0 0
    %1133 = vmatpush1.bf16.xpose.msra.mxu0 0
    %1134 = vmatprep.subr.bf16.mxu0 0
    %1135 = vmatpush1.bf16.xpose.msra.mxu0 0
    %1136 = vmatprep.subr.bf16.mxu0 0
    %1137 = vmatpush1.bf16.xpose.msra.mxu0 0
    %1138 = vmatprep.mubr.bf16.mxu0 %v196
    %1139 = vmatmul.mubr.bf16.gmra.mrb[0].mxu0 %v194
    %v1140 = vpop.f32.mrb[0].mxu0
    %v1141 = vadd.f32 %v1101, %v1140
    %v1142 = vpop.f32.mrb[0].mxu0
    %v1143 = vpop.f32.mrb[0].mxu0
    %v1144 = vpop.f32.mrb[0].mxu0
    %1145 = vdwg.mxu0
    %1146 = vmatprep.subr.bf16.mxu0 %v723
    %1147 = vmatpush1.bf16.xpose.msra.mxu0 %v722
    %1148 = vmatprep.subr.bf16.mxu0 0
    %1149 = vmatpush1.bf16.xpose.msra.mxu0 0
    %1150 = vmatprep.subr.bf16.mxu0 0
    %1151 = vmatpush1.bf16.xpose.msra.mxu0 0
    %1152 = vmatprep.subr.bf16.mxu0 0
    %1153 = vmatpush1.bf16.xpose.msra.mxu0 0
    %1154 = vmatprep.subr.bf16.mxu0 0
    %1155 = vmatpush1.bf16.xpose.msra.mxu0 0
    %1156 = vmatprep.subr.bf16.mxu0 0
    %1157 = vmatpush1.bf16.xpose.msra.mxu0 0
    %1158 = vmatprep.subr.bf16.mxu0 0
    %1159 = vmatpush1.bf16.xpose.msra.mxu0 0
    %1160 = vmatprep.subr.bf16.mxu0 0
    %1161 = vmatpush1.bf16.xpose.msra.mxu0 0
    %1162 = vmatprep.subr.bf16.mxu0 0
    %1163 = vmatpush1.bf16.xpose.msra.mxu0 0
    %1164 = vmatprep.subr.bf16.mxu0 0
    %1165 = vmatpush1.bf16.xpose.msra.mxu0 0
    %1166 = vmatprep.subr.bf16.mxu0 0
    %1167 = vmatpush1.bf16.xpose.msra.mxu0 0
    %1168 = vmatprep.subr.bf16.mxu0 0
    %1169 = vmatpush1.bf16.xpose.msra.mxu0 0
    %1170 = vmatprep.subr.bf16.mxu0 0
    %1171 = vmatpush1.bf16.xpose.msra.mxu0 0
    %1172 = vmatprep.subr.bf16.mxu0 0
    %1173 = vmatpush1.bf16.xpose.msra.mxu0 0
    %1174 = vmatprep.subr.bf16.mxu0 0
    %1175 = vmatpush1.bf16.xpose.msra.mxu0 0
    %1176 = vmatprep.subr.bf16.mxu0 0
    %1177 = vmatpush1.bf16.xpose.msra.mxu0 0
    %1178 = vmatprep.mubr.bf16.mxu0 %v234
    %1179 = vmatmul.mubr.bf16.gmra.mrb[0].mxu0 %v220
    %v1180 = vpop.f32.mrb[0].mxu0
    %v1181 = vadd.f32 %v1141, %v1180
    %v1182 = vpop.f32.mrb[0].mxu0
    %v1183 = vpop.f32.mrb[0].mxu0
    %v1184 = vpop.f32.mrb[0].mxu0
    %1185 = vdwg.mxu0
    %1186 = vmatprep.subr.bf16.mxu0 %v725
    %1187 = vmatpush1.bf16.xpose.msra.mxu0 %v724
    %1188 = vmatprep.subr.bf16.mxu0 0
    %1189 = vmatpush1.bf16.xpose.msra.mxu0 0
    %1190 = vmatprep.subr.bf16.mxu0 0
    %1191 = vmatpush1.bf16.xpose.msra.mxu0 0
    %1192 = vmatprep.subr.bf16.mxu0 0
    %1193 = vmatpush1.bf16.xpose.msra.mxu0 0
    %1194 = vmatprep.subr.bf16.mxu0 0
    %1195 = vmatpush1.bf16.xpose.msra.mxu0 0
    %1196 = vmatprep.subr.bf16.mxu0 0
    %1197 = vmatpush1.bf16.xpose.msra.mxu0 0
    %1198 = vmatprep.subr.bf16.mxu0 0
    %1199 = vmatpush1.bf16.xpose.msra.mxu0 0
    %1200 = vmatprep.subr.bf16.mxu0 0
    %1201 = vmatpush1.bf16.xpose.msra.mxu0 0
    %1202 = vmatprep.subr.bf16.mxu0 0
    %1203 = vmatpush1.bf16.xpose.msra.mxu0 0
    %1204 = vmatprep.subr.bf16.mxu0 0
    %1205 = vmatpush1.bf16.xpose.msra.mxu0 0
    %1206 = vmatprep.subr.bf16.mxu0 0
    %1207 = vmatpush1.bf16.xpose.msra.mxu0 0
    %1208 = vmatprep.subr.bf16.mxu0 0
    %1209 = vmatpush1.bf16.xpose.msra.mxu0 0
    %1210 = vmatprep.subr.bf16.mxu0 0
    %1211 = vmatpush1.bf16.xpose.msra.mxu0 0
    %1212 = vmatprep.subr.bf16.mxu0 0
    %1213 = vmatpush1.bf16.xpose.msra.mxu0 0
    %1214 = vmatprep.subr.bf16.mxu0 0
    %1215 = vmatpush1.bf16.xpose.msra.mxu0 0
    %1216 = vmatprep.subr.bf16.mxu0 0
    %1217 = vmatpush1.bf16.xpose.msra.mxu0 0
    %1218 = vmatprep.mubr.bf16.mxu0 %v244
    %1219 = vmatmul.mubr.bf16.gmra.mrb[0].mxu0 %v242
    %v1220 = vpop.f32.mrb[0].mxu0
    %v1221 = vadd.f32 %v1181, %v1220
    %v1222 = vpop.f32.mrb[0].mxu0
    %v1223 = vpop.f32.mrb[0].mxu0
    %v1224 = vpop.f32.mrb[0].mxu0
    %1225 = vdwg.mxu0
    %1226 = vmatprep.subr.bf16.mxu0 %v727
    %1227 = vmatpush1.bf16.xpose.msra.mxu0 %v726
    %1228 = vmatprep.subr.bf16.mxu0 0
    %1229 = vmatpush1.bf16.xpose.msra.mxu0 0
    %1230 = vmatprep.subr.bf16.mxu0 0
    %1231 = vmatpush1.bf16.xpose.msra.mxu0 0
    %1232 = vmatprep.subr.bf16.mxu0 0
    %1233 = vmatpush1.bf16.xpose.msra.mxu0 0
    %1234 = vmatprep.subr.bf16.mxu0 0
    %1235 = vmatpush1.bf16.xpose.msra.mxu0 0
    %1236 = vmatprep.subr.bf16.mxu0 0
    %1237 = vmatpush1.bf16.xpose.msra.mxu0 0
    %1238 = vmatprep.subr.bf16.mxu0 0
    %1239 = vmatpush1.bf16.xpose.msra.mxu0 0
    %1240 = vmatprep.subr.bf16.mxu0 0
    %1241 = vmatpush1.bf16.xpose.msra.mxu0 0
    %1242 = vmatprep.subr.bf16.mxu0 0
    %1243 = vmatpush1.bf16.xpose.msra.mxu0 0
    %1244 = vmatprep.subr.bf16.mxu0 0
    %1245 = vmatpush1.bf16.xpose.msra.mxu0 0
    %1246 = vmatprep.subr.bf16.mxu0 0
    %1247 = vmatpush1.bf16.xpose.msra.mxu0 0
    %1248 = vmatprep.subr.bf16.mxu0 0
    %1249 = vmatpush1.bf16.xpose.msra.mxu0 0
    %1250 = vmatprep.subr.bf16.mxu0 0
    %1251 = vmatpush1.bf16.xpose.msra.mxu0 0
    %1252 = vmatprep.subr.bf16.mxu0 0
    %1253 = vmatpush1.bf16.xpose.msra.mxu0 0
    %1254 = vmatprep.subr.bf16.mxu0 0
    %1255 = vmatpush1.bf16.xpose.msra.mxu0 0
    %1256 = vmatprep.subr.bf16.mxu0 0
    %1257 = vmatpush1.bf16.xpose.msra.mxu0 0
    %1258 = vmatprep.mubr.bf16.mxu0 %v241
    %1259 = vmatmul.mubr.bf16.gmra.mrb[0].mxu0 %v227
    %v1260 = vpop.f32.mrb[0].mxu0
    %v1261 = vadd.f32 %v1221, %v1260
    %v1262 = vpop.f32.mrb[0].mxu0
    %v1263 = vpop.f32.mrb[0].mxu0
    %v1264 = vpop.f32.mrb[0].mxu0
    %1265 = vdwg.mxu0
    %1266 = vmatprep.subr.bf16.mxu0 %v729
    %1267 = vmatpush1.bf16.xpose.msra.mxu0 %v728
    %1268 = vmatprep.subr.bf16.mxu0 0
    %1269 = vmatpush1.bf16.xpose.msra.mxu0 0
    %1270 = vmatprep.subr.bf16.mxu0 0
    %1271 = vmatpush1.bf16.xpose.msra.mxu0 0
    %1272 = vmatprep.subr.bf16.mxu0 0
    %1273 = vmatpush1.bf16.xpose.msra.mxu0 0
    %1274 = vmatprep.subr.bf16.mxu0 0
    %1275 = vmatpush1.bf16.xpose.msra.mxu0 0
    %1276 = vmatprep.subr.bf16.mxu0 0
    %1277 = vmatpush1.bf16.xpose.msra.mxu0 0
    %1278 = vmatprep.subr.bf16.mxu0 0
    %1279 = vmatpush1.bf16.xpose.msra.mxu0 0
    %1280 = vmatprep.subr.bf16.mxu0 0
    %1281 = vmatpush1.bf16.xpose.msra.mxu0 0
    %1282 = vmatprep.subr.bf16.mxu0 0
    %1283 = vmatpush1.bf16.xpose.msra.mxu0 0
    %1284 = vmatprep.subr.bf16.mxu0 0
    %1285 = vmatpush1.bf16.xpose.msra.mxu0 0
    %1286 = vmatprep.subr.bf16.mxu0 0
    %1287 = vmatpush1.bf16.xpose.msra.mxu0 0
    %1288 = vmatprep.subr.bf16.mxu0 0
    %1289 = vmatpush1.bf16.xpose.msra.mxu0 0
    %1290 = vmatprep.subr.bf16.mxu0 0
    %1291 = vmatpush1.bf16.xpose.msra.mxu0 0
    %1292 = vmatprep.subr.bf16.mxu0 0
    %1293 = vmatpush1.bf16.xpose.msra.mxu0 0
    %1294 = vmatprep.subr.bf16.mxu0 0
    %1295 = vmatpush1.bf16.xpose.msra.mxu0 0
    %1296 = vmatprep.subr.bf16.mxu0 0
    %1297 = vmatpush1.bf16.xpose.msra.mxu0 0
    %1298 = vmatprep.mubr.bf16.mxu0 %v245
    %1299 = vmatmul.mubr.bf16.gmra.mrb[0].mxu0 %v243
    %v1300 = vpop.f32.mrb[0].mxu0
    %v1301 = vadd.f32 %v1261, %v1300
    %v1302 = vpop.f32.mrb[0].mxu0
    %v1303 = vpop.f32.mrb[0].mxu0
    %v1304 = vpop.f32.mrb[0].mxu0
    %1305 = vdwg.mxu0
    %1306 = vmatprep.subr.bf16.mxu0 %v731
    %1307 = vmatpush1.bf16.xpose.msra.mxu0 %v730
    %1308 = vmatprep.subr.bf16.mxu0 0
    %1309 = vmatpush1.bf16.xpose.msra.mxu0 0
    %1310 = vmatprep.subr.bf16.mxu0 0
    %1311 = vmatpush1.bf16.xpose.msra.mxu0 0
    %1312 = vmatprep.subr.bf16.mxu0 0
    %1313 = vmatpush1.bf16.xpose.msra.mxu0 0
    %1314 = vmatprep.subr.bf16.mxu0 0
    %1315 = vmatpush1.bf16.xpose.msra.mxu0 0
    %1316 = vmatprep.subr.bf16.mxu0 0
    %1317 = vmatpush1.bf16.xpose.msra.mxu0 0
    %1318 = vmatprep.subr.bf16.mxu0 0
    %1319 = vmatpush1.bf16.xpose.msra.mxu0 0
    %1320 = vmatprep.subr.bf16.mxu0 0
    %1321 = vmatpush1.bf16.xpose.msra.mxu0 0
    %1322 = vmatprep.subr.bf16.mxu0 0
    %1323 = vmatpush1.bf16.xpose.msra.mxu0 0
    %1324 = vmatprep.subr.bf16.mxu0 0
    %1325 = vmatpush1.bf16.xpose.msra.mxu0 0
    %1326 = vmatprep.subr.bf16.mxu0 0
    %1327 = vmatpush1.bf16.xpose.msra.mxu0 0
    %1328 = vmatprep.subr.bf16.mxu0 0
    %1329 = vmatpush1.bf16.xpose.msra.mxu0 0
    %1330 = vmatprep.subr.bf16.mxu0 0
    %1331 = vmatpush1.bf16.xpose.msra.mxu0 0
    %1332 = vmatprep.subr.bf16.mxu0 0
    %1333 = vmatpush1.bf16.xpose.msra.mxu0 0
    %1334 = vmatprep.subr.bf16.mxu0 0
    %1335 = vmatpush1.bf16.xpose.msra.mxu0 0
    %1336 = vmatprep.subr.bf16.mxu0 0
    %1337 = vmatpush1.bf16.xpose.msra.mxu0 0
    %1338 = vmatprep.mubr.bf16.mxu0 %v283
    %1339 = vmatmul.mubr.bf16.gmra.mrb[0].mxu0 %v269
    %v1340 = vpop.f32.mrb[0].mxu0
    %v1341 = vadd.f32 %v1301, %v1340
    %v1342 = vpop.f32.mrb[0].mxu0
    %v1343 = vpop.f32.mrb[0].mxu0
    %v1344 = vpop.f32.mrb[0].mxu0
    %1345 = vdwg.mxu0
    %1346 = vmatprep.subr.bf16.mxu0 %v733
    %1347 = vmatpush1.bf16.xpose.msra.mxu0 %v732
    %1348 = vmatprep.subr.bf16.mxu0 0
    %1349 = vmatpush1.bf16.xpose.msra.mxu0 0
    %1350 = vmatprep.subr.bf16.mxu0 0
    %1351 = vmatpush1.bf16.xpose.msra.mxu0 0
    %1352 = vmatprep.subr.bf16.mxu0 0
    %1353 = vmatpush1.bf16.xpose.msra.mxu0 0
    %1354 = vmatprep.subr.bf16.mxu0 0
    %1355 = vmatpush1.bf16.xpose.msra.mxu0 0
    %1356 = vmatprep.subr.bf16.mxu0 0
    %1357 = vmatpush1.bf16.xpose.msra.mxu0 0
    %1358 = vmatprep.subr.bf16.mxu0 0
    %1359 = vmatpush1.bf16.xpose.msra.mxu0 0
    %1360 = vmatprep.subr.bf16.mxu0 0
    %1361 = vmatpush1.bf16.xpose.msra.mxu0 0
    %1362 = vmatprep.subr.bf16.mxu0 0
    %1363 = vmatpush1.bf16.xpose.msra.mxu0 0
    %1364 = vmatprep.subr.bf16.mxu0 0
    %1365 = vmatpush1.bf16.xpose.msra.mxu0 0
    %1366 = vmatprep.subr.bf16.mxu0 0
    %1367 = vmatpush1.bf16.xpose.msra.mxu0 0
    %1368 = vmatprep.subr.bf16.mxu0 0
    %1369 = vmatpush1.bf16.xpose.msra.mxu0 0
    %1370 = vmatprep.subr.bf16.mxu0 0
    %1371 = vmatpush1.bf16.xpose.msra.mxu0 0
    %1372 = vmatprep.subr.bf16.mxu0 0
    %1373 = vmatpush1.bf16.xpose.msra.mxu0 0
    %1374 = vmatprep.subr.bf16.mxu0 0
    %1375 = vmatpush1.bf16.xpose.msra.mxu0 0
    %1376 = vmatprep.subr.bf16.mxu0 0
    %1377 = vmatpush1.bf16.xpose.msra.mxu0 0
    %1378 = vmatprep.mubr.bf16.mxu0 %v293
    %1379 = vmatmul.mubr.bf16.gmra.mrb[0].mxu0 %v291
    %v1380 = vpop.f32.mrb[0].mxu0
    %v1381 = vadd.f32 %v1341, %v1380
    %v1382 = vpop.f32.mrb[0].mxu0
    %v1383 = vpop.f32.mrb[0].mxu0
    %v1384 = vpop.f32.mrb[0].mxu0
    %1385 = vdwg.mxu0
    %1386 = vmatprep.subr.bf16.mxu0 %v735
    %1387 = vmatpush1.bf16.xpose.msra.mxu0 %v734
    %1388 = vmatprep.subr.bf16.mxu0 0
    %1389 = vmatpush1.bf16.xpose.msra.mxu0 0
    %1390 = vmatprep.subr.bf16.mxu0 0
    %1391 = vmatpush1.bf16.xpose.msra.mxu0 0
    %1392 = vmatprep.subr.bf16.mxu0 0
    %1393 = vmatpush1.bf16.xpose.msra.mxu0 0
    %1394 = vmatprep.subr.bf16.mxu0 0
    %1395 = vmatpush1.bf16.xpose.msra.mxu0 0
    %1396 = vmatprep.subr.bf16.mxu0 0
    %1397 = vmatpush1.bf16.xpose.msra.mxu0 0
    %1398 = vmatprep.subr.bf16.mxu0 0
    %1399 = vmatpush1.bf16.xpose.msra.mxu0 0
    %1400 = vmatprep.subr.bf16.mxu0 0
    %1401 = vmatpush1.bf16.xpose.msra.mxu0 0
    %1402 = vmatprep.subr.bf16.mxu0 0
    %1403 = vmatpush1.bf16.xpose.msra.mxu0 0
    %1404 = vmatprep.subr.bf16.mxu0 0
    %1405 = vmatpush1.bf16.xpose.msra.mxu0 0
    %1406 = vmatprep.subr.bf16.mxu0 0
    %1407 = vmatpush1.bf16.xpose.msra.mxu0 0
    %1408 = vmatprep.subr.bf16.mxu0 0
    %1409 = vmatpush1.bf16.xpose.msra.mxu0 0
    %1410 = vmatprep.subr.bf16.mxu0 0
    %1411 = vmatpush1.bf16.xpose.msra.mxu0 0
    %1412 = vmatprep.subr.bf16.mxu0 0
    %1413 = vmatpush1.bf16.xpose.msra.mxu0 0
    %1414 = vmatprep.subr.bf16.mxu0 0
    %1415 = vmatpush1.bf16.xpose.msra.mxu0 0
    %1416 = vmatprep.subr.bf16.mxu0 0
    %1417 = vmatpush1.bf16.xpose.msra.mxu0 0
    %1418 = vmatprep.mubr.bf16.mxu0 %v290
    %1419 = vmatmul.mubr.bf16.gmra.mrb[0].mxu0 %v276
    %v1420 = vpop.f32.mrb[0].mxu0
    %v1421 = vadd.f32 %v1381, %v1420
    %v1422 = vpop.f32.mrb[0].mxu0
    %v1423 = vpop.f32.mrb[0].mxu0
    %v1424 = vpop.f32.mrb[0].mxu0
    %1425 = vdwg.mxu0
    %1426 = vmatprep.subr.bf16.mxu0 %v737
    %1427 = vmatpush1.bf16.xpose.msra.mxu0 %v736
    %1428 = vmatprep.subr.bf16.mxu0 0
    %1429 = vmatpush1.bf16.xpose.msra.mxu0 0
    %1430 = vmatprep.subr.bf16.mxu0 0
    %1431 = vmatpush1.bf16.xpose.msra.mxu0 0
    %1432 = vmatprep.subr.bf16.mxu0 0
    %1433 = vmatpush1.bf16.xpose.msra.mxu0 0
    %1434 = vmatprep.subr.bf16.mxu0 0
    %1435 = vmatpush1.bf16.xpose.msra.mxu0 0
    %1436 = vmatprep.subr.bf16.mxu0 0
    %1437 = vmatpush1.bf16.xpose.msra.mxu0 0
    %1438 = vmatprep.subr.bf16.mxu0 0
    %1439 = vmatpush1.bf16.xpose.msra.mxu0 0
    %1440 = vmatprep.subr.bf16.mxu0 0
    %1441 = vmatpush1.bf16.xpose.msra.mxu0 0
    %1442 = vmatprep.subr.bf16.mxu0 0
    %1443 = vmatpush1.bf16.xpose.msra.mxu0 0
    %1444 = vmatprep.subr.bf16.mxu0 0
    %1445 = vmatpush1.bf16.xpose.msra.mxu0 0
    %1446 = vmatprep.subr.bf16.mxu0 0
    %1447 = vmatpush1.bf16.xpose.msra.mxu0 0
    %1448 = vmatprep.subr.bf16.mxu0 0
    %1449 = vmatpush1.bf16.xpose.msra.mxu0 0
    %1450 = vmatprep.subr.bf16.mxu0 0
    %1451 = vmatpush1.bf16.xpose.msra.mxu0 0
    %1452 = vmatprep.subr.bf16.mxu0 0
    %1453 = vmatpush1.bf16.xpose.msra.mxu0 0
    %1454 = vmatprep.subr.bf16.mxu0 0
    %1455 = vmatpush1.bf16.xpose.msra.mxu0 0
    %1456 = vmatprep.subr.bf16.mxu0 0
    %1457 = vmatpush1.bf16.xpose.msra.mxu0 0
    %1458 = vmatprep.mubr.bf16.mxu0 %v294
    %1459 = vmatmul.mubr.bf16.gmra.mrb[0].mxu0 %v292
    %v1460 = vpop.f32.mrb[0].mxu0
    %v1461 = vadd.f32 %v1421, %v1460
    %v1462 = vpop.f32.mrb[0].mxu0
    %v1463 = vpop.f32.mrb[0].mxu0
    %v1464 = vpop.f32.mrb[0].mxu0
    %1465 = vdwg.mxu0
    %1466 = vmatprep.subr.bf16.mxu0 %v739
    %1467 = vmatpush1.bf16.xpose.msra.mxu0 %v738
    %1468 = vmatprep.subr.bf16.mxu0 0
    %1469 = vmatpush1.bf16.xpose.msra.mxu0 0
    %1470 = vmatprep.subr.bf16.mxu0 0
    %1471 = vmatpush1.bf16.xpose.msra.mxu0 0
    %1472 = vmatprep.subr.bf16.mxu0 0
    %1473 = vmatpush1.bf16.xpose.msra.mxu0 0
    %1474 = vmatprep.subr.bf16.mxu0 0
    %1475 = vmatpush1.bf16.xpose.msra.mxu0 0
    %1476 = vmatprep.subr.bf16.mxu0 0
    %1477 = vmatpush1.bf16.xpose.msra.mxu0 0
    %1478 = vmatprep.subr.bf16.mxu0 0
    %1479 = vmatpush1.bf16.xpose.msra.mxu0 0
    %1480 = vmatprep.subr.bf16.mxu0 0
    %1481 = vmatpush1.bf16.xpose.msra.mxu0 0
    %1482 = vmatprep.subr.bf16.mxu0 0
    %1483 = vmatpush1.bf16.xpose.msra.mxu0 0
    %1484 = vmatprep.subr.bf16.mxu0 0
    %1485 = vmatpush1.bf16.xpose.msra.mxu0 0
    %1486 = vmatprep.subr.bf16.mxu0 0
    %1487 = vmatpush1.bf16.xpose.msra.mxu0 0
    %1488 = vmatprep.subr.bf16.mxu0 0
    %1489 = vmatpush1.bf16.xpose.msra.mxu0 0
    %1490 = vmatprep.subr.bf16.mxu0 0
    %1491 = vmatpush1.bf16.xpose.msra.mxu0 0
    %1492 = vmatprep.subr.bf16.mxu0 0
    %1493 = vmatpush1.bf16.xpose.msra.mxu0 0
    %1494 = vmatprep.subr.bf16.mxu0 0
    %1495 = vmatpush1.bf16.xpose.msra.mxu0 0
    %1496 = vmatprep.subr.bf16.mxu0 0
    %1497 = vmatpush1.bf16.xpose.msra.mxu0 0
    %1498 = vmatprep.mubr.bf16.mxu0 %v332
    %1499 = vmatmul.mubr.bf16.gmra.mrb[0].mxu0 %v318
    %v1500 = vpop.f32.mrb[0].mxu0
    %v1501 = vadd.f32 %v1461, %v1500
    %v1502 = vpop.f32.mrb[0].mxu0
    %v1503 = vpop.f32.mrb[0].mxu0
    %v1504 = vpop.f32.mrb[0].mxu0
    %1505 = vdwg.mxu0
    %1506 = vmatprep.subr.bf16.mxu0 %v741
    %1507 = vmatpush1.bf16.xpose.msra.mxu0 %v740
    %1508 = vmatprep.subr.bf16.mxu0 0
    %1509 = vmatpush1.bf16.xpose.msra.mxu0 0
    %1510 = vmatprep.subr.bf16.mxu0 0
    %1511 = vmatpush1.bf16.xpose.msra.mxu0 0
    %1512 = vmatprep.subr.bf16.mxu0 0
    %1513 = vmatpush1.bf16.xpose.msra.mxu0 0
    %1514 = vmatprep.subr.bf16.mxu0 0
    %1515 = vmatpush1.bf16.xpose.msra.mxu0 0
    %1516 = vmatprep.subr.bf16.mxu0 0
    %1517 = vmatpush1.bf16.xpose.msra.mxu0 0
    %1518 = vmatprep.subr.bf16.mxu0 0
    %1519 = vmatpush1.bf16.xpose.msra.mxu0 0
    %1520 = vmatprep.subr.bf16.mxu0 0
    %1521 = vmatpush1.bf16.xpose.msra.mxu0 0
    %1522 = vmatprep.subr.bf16.mxu0 0
    %1523 = vmatpush1.bf16.xpose.msra.mxu0 0
    %1524 = vmatprep.subr.bf16.mxu0 0
    %1525 = vmatpush1.bf16.xpose.msra.mxu0 0
    %1526 = vmatprep.subr.bf16.mxu0 0
    %1527 = vmatpush1.bf16.xpose.msra.mxu0 0
    %1528 = vmatprep.subr.bf16.mxu0 0
    %1529 = vmatpush1.bf16.xpose.msra.mxu0 0
    %1530 = vmatprep.subr.bf16.mxu0 0
    %1531 = vmatpush1.bf16.xpose.msra.mxu0 0
    %1532 = vmatprep.subr.bf16.mxu0 0
    %1533 = vmatpush1.bf16.xpose.msra.mxu0 0
    %1534 = vmatprep.subr.bf16.mxu0 0
    %1535 = vmatpush1.bf16.xpose.msra.mxu0 0
    %1536 = vmatprep.subr.bf16.mxu0 0
    %1537 = vmatpush1.bf16.xpose.msra.mxu0 0
    %1538 = vmatprep.mubr.bf16.mxu0 %v342
    %1539 = vmatmul.mubr.bf16.gmra.mrb[0].mxu0 %v340
    %v1540 = vpop.f32.mrb[0].mxu0
    %v1541 = vadd.f32 %v1501, %v1540
    %v1542 = vpop.f32.mrb[0].mxu0
    %v1543 = vpop.f32.mrb[0].mxu0
    %v1544 = vpop.f32.mrb[0].mxu0
    %1545 = vdwg.mxu0
    %1546 = vmatprep.subr.bf16.mxu0 %v743
    %1547 = vmatpush1.bf16.xpose.msra.mxu0 %v742
    %1548 = vmatprep.subr.bf16.mxu0 0
    %1549 = vmatpush1.bf16.xpose.msra.mxu0 0
    %1550 = vmatprep.subr.bf16.mxu0 0
    %1551 = vmatpush1.bf16.xpose.msra.mxu0 0
    %1552 = vmatprep.subr.bf16.mxu0 0
    %1553 = vmatpush1.bf16.xpose.msra.mxu0 0
    %1554 = vmatprep.subr.bf16.mxu0 0
    %1555 = vmatpush1.bf16.xpose.msra.mxu0 0
    %1556 = vmatprep.subr.bf16.mxu0 0
    %1557 = vmatpush1.bf16.xpose.msra.mxu0 0
    %1558 = vmatprep.subr.bf16.mxu0 0
    %1559 = vmatpush1.bf16.xpose.msra.mxu0 0
    %1560 = vmatprep.subr.bf16.mxu0 0
    %1561 = vmatpush1.bf16.xpose.msra.mxu0 0
    %1562 = vmatprep.subr.bf16.mxu0 0
    %1563 = vmatpush1.bf16.xpose.msra.mxu0 0
    %1564 = vmatprep.subr.bf16.mxu0 0
    %1565 = vmatpush1.bf16.xpose.msra.mxu0 0
    %1566 = vmatprep.subr.bf16.mxu0 0
    %1567 = vmatpush1.bf16.xpose.msra.mxu0 0
    %1568 = vmatprep.subr.bf16.mxu0 0
    %1569 = vmatpush1.bf16.xpose.msra.mxu0 0
    %1570 = vmatprep.subr.bf16.mxu0 0
    %1571 = vmatpush1.bf16.xpose.msra.mxu0 0
    %1572 = vmatprep.subr.bf16.mxu0 0
    %1573 = vmatpush1.bf16.xpose.msra.mxu0 0
    %1574 = vmatprep.subr.bf16.mxu0 0
    %1575 = vmatpush1.bf16.xpose.msra.mxu0 0
    %1576 = vmatprep.subr.bf16.mxu0 0
    %1577 = vmatpush1.bf16.xpose.msra.mxu0 0
    %1578 = vmatprep.mubr.bf16.mxu0 %v339
    %1579 = vmatmul.mubr.bf16.gmra.mrb[0].mxu0 %v325
    %v1580 = vpop.f32.mrb[0].mxu0
    %v1581 = vadd.f32 %v1541, %v1580
    %v1582 = vpop.f32.mrb[0].mxu0
    %v1583 = vpop.f32.mrb[0].mxu0
    %v1584 = vpop.f32.mrb[0].mxu0
    %1585 = vdwg.mxu0
    %1586 = vmatprep.subr.bf16.mxu0 %v745
    %1587 = vmatpush1.bf16.xpose.msra.mxu0 %v744
    %1588 = vmatprep.subr.bf16.mxu0 0
    %1589 = vmatpush1.bf16.xpose.msra.mxu0 0
    %1590 = vmatprep.subr.bf16.mxu0 0
    %1591 = vmatpush1.bf16.xpose.msra.mxu0 0
    %1592 = vmatprep.subr.bf16.mxu0 0
    %1593 = vmatpush1.bf16.xpose.msra.mxu0 0
    %1594 = vmatprep.subr.bf16.mxu0 0
    %1595 = vmatpush1.bf16.xpose.msra.mxu0 0
    %1596 = vmatprep.subr.bf16.mxu0 0
    %1597 = vmatpush1.bf16.xpose.msra.mxu0 0
    %1598 = vmatprep.subr.bf16.mxu0 0
    %1599 = vmatpush1.bf16.xpose.msra.mxu0 0
    %1600 = vmatprep.subr.bf16.mxu0 0
    %1601 = vmatpush1.bf16.xpose.msra.mxu0 0
    %1602 = vmatprep.subr.bf16.mxu0 0
    %1603 = vmatpush1.bf16.xpose.msra.mxu0 0
    %1604 = vmatprep.subr.bf16.mxu0 0
    %1605 = vmatpush1.bf16.xpose.msra.mxu0 0
    %1606 = vmatprep.subr.bf16.mxu0 0
    %1607 = vmatpush1.bf16.xpose.msra.mxu0 0
    %1608 = vmatprep.subr.bf16.mxu0 0
    %1609 = vmatpush1.bf16.xpose.msra.mxu0 0
    %1610 = vmatprep.subr.bf16.mxu0 0
    %1611 = vmatpush1.bf16.xpose.msra.mxu0 0
    %1612 = vmatprep.subr.bf16.mxu0 0
    %1613 = vmatpush1.bf16.xpose.msra.mxu0 0
    %1614 = vmatprep.subr.bf16.mxu0 0
    %1615 = vmatpush1.bf16.xpose.msra.mxu0 0
    %1616 = vmatprep.subr.bf16.mxu0 0
    %1617 = vmatpush1.bf16.xpose.msra.mxu0 0
    %1618 = vmatprep.mubr.bf16.mxu0 %v343
    %1619 = vmatmul.mubr.bf16.gmra.mrb[0].mxu0 %v341
    %v1620 = vpop.f32.mrb[0].mxu0
    %v1621 = vadd.f32 %v1581, %v1620
    %v1622 = vpop.f32.mrb[0].mxu0
    %v1623 = vpop.f32.mrb[0].mxu0
    %v1624 = vpop.f32.mrb[0].mxu0
    %1625 = vdwg.mxu0
    %1626 = vmatprep.subr.bf16.mxu0 %v747
    %1627 = vmatpush1.bf16.xpose.msra.mxu0 %v746
    %1628 = vmatprep.subr.bf16.mxu0 0
    %1629 = vmatpush1.bf16.xpose.msra.mxu0 0
    %1630 = vmatprep.subr.bf16.mxu0 0
    %1631 = vmatpush1.bf16.xpose.msra.mxu0 0
    %1632 = vmatprep.subr.bf16.mxu0 0
    %1633 = vmatpush1.bf16.xpose.msra.mxu0 0
    %1634 = vmatprep.subr.bf16.mxu0 0
    %1635 = vmatpush1.bf16.xpose.msra.mxu0 0
    %1636 = vmatprep.subr.bf16.mxu0 0
    %1637 = vmatpush1.bf16.xpose.msra.mxu0 0
    %1638 = vmatprep.subr.bf16.mxu0 0
    %1639 = vmatpush1.bf16.xpose.msra.mxu0 0
    %1640 = vmatprep.subr.bf16.mxu0 0
    %1641 = vmatpush1.bf16.xpose.msra.mxu0 0
    %1642 = vmatprep.subr.bf16.mxu0 0
    %1643 = vmatpush1.bf16.xpose.msra.mxu0 0
    %1644 = vmatprep.subr.bf16.mxu0 0
    %1645 = vmatpush1.bf16.xpose.msra.mxu0 0
    %1646 = vmatprep.subr.bf16.mxu0 0
    %1647 = vmatpush1.bf16.xpose.msra.mxu0 0
    %1648 = vmatprep.subr.bf16.mxu0 0
    %1649 = vmatpush1.bf16.xpose.msra.mxu0 0
    %1650 = vmatprep.subr.bf16.mxu0 0
    %1651 = vmatpush1.bf16.xpose.msra.mxu0 0
    %1652 = vmatprep.subr.bf16.mxu0 0
    %1653 = vmatpush1.bf16.xpose.msra.mxu0 0
    %1654 = vmatprep.subr.bf16.mxu0 0
    %1655 = vmatpush1.bf16.xpose.msra.mxu0 0
    %1656 = vmatprep.subr.bf16.mxu0 0
    %1657 = vmatpush1.bf16.xpose.msra.mxu0 0
    %1658 = vmatprep.mubr.bf16.mxu0 %v381
    %1659 = vmatmul.mubr.bf16.gmra.mrb[0].mxu0 %v367
    %v1660 = vpop.f32.mrb[0].mxu0
    %v1661 = vadd.f32 %v1621, %v1660
    %v1662 = vpop.f32.mrb[0].mxu0
    %v1663 = vpop.f32.mrb[0].mxu0
    %v1664 = vpop.f32.mrb[0].mxu0
    %1665 = vdwg.mxu0
    %1666 = vmatprep.subr.bf16.mxu0 %v749
    %1667 = vmatpush1.bf16.xpose.msra.mxu0 %v748
    %1668 = vmatprep.subr.bf16.mxu0 0
    %1669 = vmatpush1.bf16.xpose.msra.mxu0 0
    %1670 = vmatprep.subr.bf16.mxu0 0
    %1671 = vmatpush1.bf16.xpose.msra.mxu0 0
    %1672 = vmatprep.subr.bf16.mxu0 0
    %1673 = vmatpush1.bf16.xpose.msra.mxu0 0
    %1674 = vmatprep.subr.bf16.mxu0 0
    %1675 = vmatpush1.bf16.xpose.msra.mxu0 0
    %1676 = vmatprep.subr.bf16.mxu0 0
    %1677 = vmatpush1.bf16.xpose.msra.mxu0 0
    %1678 = vmatprep.subr.bf16.mxu0 0
    %1679 = vmatpush1.bf16.xpose.msra.mxu0 0
    %1680 = vmatprep.subr.bf16.mxu0 0
    %1681 = vmatpush1.bf16.xpose.msra.mxu0 0
    %1682 = vmatprep.subr.bf16.mxu0 0
    %1683 = vmatpush1.bf16.xpose.msra.mxu0 0
    %1684 = vmatprep.subr.bf16.mxu0 0
    %1685 = vmatpush1.bf16.xpose.msra.mxu0 0
    %1686 = vmatprep.subr.bf16.mxu0 0
    %1687 = vmatpush1.bf16.xpose.msra.mxu0 0
    %1688 = vmatprep.subr.bf16.mxu0 0
    %1689 = vmatpush1.bf16.xpose.msra.mxu0 0
    %1690 = vmatprep.subr.bf16.mxu0 0
    %1691 = vmatpush1.bf16.xpose.msra.mxu0 0
    %1692 = vmatprep.subr.bf16.mxu0 0
    %1693 = vmatpush1.bf16.xpose.msra.mxu0 0
    %1694 = vmatprep.subr.bf16.mxu0 0
    %1695 = vmatpush1.bf16.xpose.msra.mxu0 0
    %1696 = vmatprep.subr.bf16.mxu0 0
    %1697 = vmatpush1.bf16.xpose.msra.mxu0 0
    %1698 = vmatprep.mubr.bf16.mxu0 %v391
    %1699 = vmatmul.mubr.bf16.gmra.mrb[0].mxu0 %v389
    %v1700 = vpop.f32.mrb[0].mxu0
    %v1701 = vadd.f32 %v1661, %v1700
    %v1702 = vpop.f32.mrb[0].mxu0
    %v1703 = vpop.f32.mrb[0].mxu0
    %v1704 = vpop.f32.mrb[0].mxu0
    %1705 = vdwg.mxu0
    %1706 = vmatprep.subr.bf16.mxu0 %v751
    %1707 = vmatpush1.bf16.xpose.msra.mxu0 %v750
    %1708 = vmatprep.subr.bf16.mxu0 0
    %1709 = vmatpush1.bf16.xpose.msra.mxu0 0
    %1710 = vmatprep.subr.bf16.mxu0 0
    %1711 = vmatpush1.bf16.xpose.msra.mxu0 0
    %1712 = vmatprep.subr.bf16.mxu0 0
    %1713 = vmatpush1.bf16.xpose.msra.mxu0 0
    %1714 = vmatprep.subr.bf16.mxu0 0
    %1715 = vmatpush1.bf16.xpose.msra.mxu0 0
    %1716 = vmatprep.subr.bf16.mxu0 0
    %1717 = vmatpush1.bf16.xpose.msra.mxu0 0
    %1718 = vmatprep.subr.bf16.mxu0 0
    %1719 = vmatpush1.bf16.xpose.msra.mxu0 0
    %1720 = vmatprep.subr.bf16.mxu0 0
    %1721 = vmatpush1.bf16.xpose.msra.mxu0 0
    %1722 = vmatprep.subr.bf16.mxu0 0
    %1723 = vmatpush1.bf16.xpose.msra.mxu0 0
    %1724 = vmatprep.subr.bf16.mxu0 0
    %1725 = vmatpush1.bf16.xpose.msra.mxu0 0
    %1726 = vmatprep.subr.bf16.mxu0 0
    %1727 = vmatpush1.bf16.xpose.msra.mxu0 0
    %1728 = vmatprep.subr.bf16.mxu0 0
    %1729 = vmatpush1.bf16.xpose.msra.mxu0 0
    %1730 = vmatprep.subr.bf16.mxu0 0
    %1731 = vmatpush1.bf16.xpose.msra.mxu0 0
    %1732 = vmatprep.subr.bf16.mxu0 0
    %1733 = vmatpush1.bf16.xpose.msra.mxu0 0
    %1734 = vmatprep.subr.bf16.mxu0 0
    %1735 = vmatpush1.bf16.xpose.msra.mxu0 0
    %1736 = vmatprep.subr.bf16.mxu0 0
    %1737 = vmatpush1.bf16.xpose.msra.mxu0 0
    %1738 = vmatprep.mubr.bf16.mxu0 %v388
    %1739 = vmatmul.mubr.bf16.gmra.mrb[0].mxu0 %v374
    %v1740 = vpop.f32.mrb[0].mxu0
    %v1741 = vadd.f32 %v1701, %v1740
    %v1742 = vpop.f32.mrb[0].mxu0
    %v1743 = vpop.f32.mrb[0].mxu0
    %v1744 = vpop.f32.mrb[0].mxu0
    %1745 = vdwg.mxu0
    %1746 = vmatprep.subr.bf16.mxu0 %v753
    %1747 = vmatpush1.bf16.xpose.msra.mxu0 %v752
    %1748 = vmatprep.subr.bf16.mxu0 0
    %1749 = vmatpush1.bf16.xpose.msra.mxu0 0
    %1750 = vmatprep.subr.bf16.mxu0 0
    %1751 = vmatpush1.bf16.xpose.msra.mxu0 0
    %1752 = vmatprep.subr.bf16.mxu0 0
    %1753 = vmatpush1.bf16.xpose.msra.mxu0 0
    %1754 = vmatprep.subr.bf16.mxu0 0
    %1755 = vmatpush1.bf16.xpose.msra.mxu0 0
    %1756 = vmatprep.subr.bf16.mxu0 0
    %1757 = vmatpush1.bf16.xpose.msra.mxu0 0
    %1758 = vmatprep.subr.bf16.mxu0 0
    %1759 = vmatpush1.bf16.xpose.msra.mxu0 0
    %1760 = vmatprep.subr.bf16.mxu0 0
    %1761 = vmatpush1.bf16.xpose.msra.mxu0 0
    %1762 = vmatprep.subr.bf16.mxu0 0
    %1763 = vmatpush1.bf16.xpose.msra.mxu0 0
    %1764 = vmatprep.subr.bf16.mxu0 0
    %1765 = vmatpush1.bf16.xpose.msra.mxu0 0
    %1766 = vmatprep.subr.bf16.mxu0 0
    %1767 = vmatpush1.bf16.xpose.msra.mxu0 0
    %1768 = vmatprep.subr.bf16.mxu0 0
    %1769 = vmatpush1.bf16.xpose.msra.mxu0 0
    %1770 = vmatprep.subr.bf16.mxu0 0
    %1771 = vmatpush1.bf16.xpose.msra.mxu0 0
    %1772 = vmatprep.subr.bf16.mxu0 0
    %1773 = vmatpush1.bf16.xpose.msra.mxu0 0
    %1774 = vmatprep.subr.bf16.mxu0 0
    %1775 = vmatpush1.bf16.xpose.msra.mxu0 0
    %1776 = vmatprep.subr.bf16.mxu0 0
    %1777 = vmatpush1.bf16.xpose.msra.mxu0 0
    %1778 = vmatprep.mubr.bf16.mxu0 %v392
    %1779 = vmatmul.mubr.bf16.gmra.mrb[0].mxu0 %v390
    %v1780 = vpop.f32.mrb[0].mxu0
    %v1781 = vadd.f32 %v1741, %v1780
    %v1782 = vpop.f32.mrb[0].mxu0
    %v1783 = vpop.f32.mrb[0].mxu0
    %v1784 = vpop.f32.mrb[0].mxu0
    %1785 = vdwg.mxu0
    %1786 = vmatprep.subr.bf16.mxu0 %v755
    %1787 = vmatpush1.bf16.xpose.msra.mxu0 %v754
    %1788 = vmatprep.subr.bf16.mxu0 0
    %1789 = vmatpush1.bf16.xpose.msra.mxu0 0
    %1790 = vmatprep.subr.bf16.mxu0 0
    %1791 = vmatpush1.bf16.xpose.msra.mxu0 0
    %1792 = vmatprep.subr.bf16.mxu0 0
    %1793 = vmatpush1.bf16.xpose.msra.mxu0 0
    %1794 = vmatprep.subr.bf16.mxu0 0
    %1795 = vmatpush1.bf16.xpose.msra.mxu0 0
    %1796 = vmatprep.subr.bf16.mxu0 0
    %1797 = vmatpush1.bf16.xpose.msra.mxu0 0
    %1798 = vmatprep.subr.bf16.mxu0 0
    %1799 = vmatpush1.bf16.xpose.msra.mxu0 0
    %1800 = vmatprep.subr.bf16.mxu0 0
    %1801 = vmatpush1.bf16.xpose.msra.mxu0 0
    %1802 = vmatprep.subr.bf16.mxu0 0
    %1803 = vmatpush1.bf16.xpose.msra.mxu0 0
    %1804 = vmatprep.subr.bf16.mxu0 0
    %1805 = vmatpush1.bf16.xpose.msra.mxu0 0
    %1806 = vmatprep.subr.bf16.mxu0 0
    %1807 = vmatpush1.bf16.xpose.msra.mxu0 0
    %1808 = vmatprep.subr.bf16.mxu0 0
    %1809 = vmatpush1.bf16.xpose.msra.mxu0 0
    %1810 = vmatprep.subr.bf16.mxu0 0
    %1811 = vmatpush1.bf16.xpose.msra.mxu0 0
    %1812 = vmatprep.subr.bf16.mxu0 0
    %1813 = vmatpush1.bf16.xpose.msra.mxu0 0
    %1814 = vmatprep.subr.bf16.mxu0 0
    %1815 = vmatpush1.bf16.xpose.msra.mxu0 0
    %1816 = vmatprep.subr.bf16.mxu0 0
    %1817 = vmatpush1.bf16.xpose.msra.mxu0 0
    %1818 = vmatprep.mubr.bf16.mxu0 %v430
    %1819 = vmatmul.mubr.bf16.gmra.mrb[0].mxu0 %v416
    %v1820 = vpop.f32.mrb[0].mxu0
    %v1821 = vadd.f32 %v1781, %v1820
    %v1822 = vpop.f32.mrb[0].mxu0
    %v1823 = vpop.f32.mrb[0].mxu0
    %v1824 = vpop.f32.mrb[0].mxu0
    %1825 = vdwg.mxu0
    %1826 = vmatprep.subr.bf16.mxu0 %v757
    %1827 = vmatpush1.bf16.xpose.msra.mxu0 %v756
    %1828 = vmatprep.subr.bf16.mxu0 0
    %1829 = vmatpush1.bf16.xpose.msra.mxu0 0
    %1830 = vmatprep.subr.bf16.mxu0 0
    %1831 = vmatpush1.bf16.xpose.msra.mxu0 0
    %1832 = vmatprep.subr.bf16.mxu0 0
    %1833 = vmatpush1.bf16.xpose.msra.mxu0 0
    %1834 = vmatprep.subr.bf16.mxu0 0
    %1835 = vmatpush1.bf16.xpose.msra.mxu0 0
    %1836 = vmatprep.subr.bf16.mxu0 0
    %1837 = vmatpush1.bf16.xpose.msra.mxu0 0
    %1838 = vmatprep.subr.bf16.mxu0 0
    %1839 = vmatpush1.bf16.xpose.msra.mxu0 0
    %1840 = vmatprep.subr.bf16.mxu0 0
    %1841 = vmatpush1.bf16.xpose.msra.mxu0 0
    %1842 = vmatprep.subr.bf16.mxu0 0
    %1843 = vmatpush1.bf16.xpose.msra.mxu0 0
    %1844 = vmatprep.subr.bf16.mxu0 0
    %1845 = vmatpush1.bf16.xpose.msra.mxu0 0
    %1846 = vmatprep.subr.bf16.mxu0 0
    %1847 = vmatpush1.bf16.xpose.msra.mxu0 0
    %1848 = vmatprep.subr.bf16.mxu0 0
    %1849 = vmatpush1.bf16.xpose.msra.mxu0 0
    %1850 = vmatprep.subr.bf16.mxu0 0
    %1851 = vmatpush1.bf16.xpose.msra.mxu0 0
    %1852 = vmatprep.subr.bf16.mxu0 0
    %1853 = vmatpush1.bf16.xpose.msra.mxu0 0
    %1854 = vmatprep.subr.bf16.mxu0 0
    %1855 = vmatpush1.bf16.xpose.msra.mxu0 0
    %1856 = vmatprep.subr.bf16.mxu0 0
    %1857 = vmatpush1.bf16.xpose.msra.mxu0 0
    %1858 = vmatprep.mubr.bf16.mxu0 %v440
    %1859 = vmatmul.mubr.bf16.gmra.mrb[0].mxu0 %v438
    %v1860 = vpop.f32.mrb[0].mxu0
    %v1861 = vadd.f32 %v1821, %v1860
    %v1862 = vpop.f32.mrb[0].mxu0
    %v1863 = vpop.f32.mrb[0].mxu0
    %v1864 = vpop.f32.mrb[0].mxu0
    %1865 = vdwg.mxu0
    %1866 = vmatprep.subr.bf16.mxu0 %v759
    %1867 = vmatpush1.bf16.xpose.msra.mxu0 %v758
    %1868 = vmatprep.subr.bf16.mxu0 0
    %1869 = vmatpush1.bf16.xpose.msra.mxu0 0
    %1870 = vmatprep.subr.bf16.mxu0 0
    %1871 = vmatpush1.bf16.xpose.msra.mxu0 0
    %1872 = vmatprep.subr.bf16.mxu0 0
    %1873 = vmatpush1.bf16.xpose.msra.mxu0 0
    %1874 = vmatprep.subr.bf16.mxu0 0
    %1875 = vmatpush1.bf16.xpose.msra.mxu0 0
    %1876 = vmatprep.subr.bf16.mxu0 0
    %1877 = vmatpush1.bf16.xpose.msra.mxu0 0
    %1878 = vmatprep.subr.bf16.mxu0 0
    %1879 = vmatpush1.bf16.xpose.msra.mxu0 0
    %1880 = vmatprep.subr.bf16.mxu0 0
    %1881 = vmatpush1.bf16.xpose.msra.mxu0 0
    %1882 = vmatprep.subr.bf16.mxu0 0
    %1883 = vmatpush1.bf16.xpose.msra.mxu0 0
    %1884 = vmatprep.subr.bf16.mxu0 0
    %1885 = vmatpush1.bf16.xpose.msra.mxu0 0
    %1886 = vmatprep.subr.bf16.mxu0 0
    %1887 = vmatpush1.bf16.xpose.msra.mxu0 0
    %1888 = vmatprep.subr.bf16.mxu0 0
    %1889 = vmatpush1.bf16.xpose.msra.mxu0 0
    %1890 = vmatprep.subr.bf16.mxu0 0
    %1891 = vmatpush1.bf16.xpose.msra.mxu0 0
    %1892 = vmatprep.subr.bf16.mxu0 0
    %1893 = vmatpush1.bf16.xpose.msra.mxu0 0
    %1894 = vmatprep.subr.bf16.mxu0 0
    %1895 = vmatpush1.bf16.xpose.msra.mxu0 0
    %1896 = vmatprep.subr.bf16.mxu0 0
    %1897 = vmatpush1.bf16.xpose.msra.mxu0 0
    %1898 = vmatprep.mubr.bf16.mxu0 %v437
    %1899 = vmatmul.mubr.bf16.gmra.mrb[0].mxu0 %v423
    %v1900 = vpop.f32.mrb[0].mxu0
    %v1901 = vadd.f32 %v1861, %v1900
    %v1902 = vpop.f32.mrb[0].mxu0
    %v1903 = vpop.f32.mrb[0].mxu0
    %v1904 = vpop.f32.mrb[0].mxu0
    %1905 = vdwg.mxu0
    %1906 = vmatprep.subr.bf16.mxu0 %v761
    %1907 = vmatpush1.bf16.xpose.msra.mxu0 %v760
    %1908 = vmatprep.subr.bf16.mxu0 0
    %1909 = vmatpush1.bf16.xpose.msra.mxu0 0
    %1910 = vmatprep.subr.bf16.mxu0 0
    %1911 = vmatpush1.bf16.xpose.msra.mxu0 0
    %1912 = vmatprep.subr.bf16.mxu0 0
    %1913 = vmatpush1.bf16.xpose.msra.mxu0 0
    %1914 = vmatprep.subr.bf16.mxu0 0
    %1915 = vmatpush1.bf16.xpose.msra.mxu0 0
    %1916 = vmatprep.subr.bf16.mxu0 0
    %1917 = vmatpush1.bf16.xpose.msra.mxu0 0
    %1918 = vmatprep.subr.bf16.mxu0 0
    %1919 = vmatpush1.bf16.xpose.msra.mxu0 0
    %1920 = vmatprep.subr.bf16.mxu0 0
    %1921 = vmatpush1.bf16.xpose.msra.mxu0 0
    %1922 = vmatprep.subr.bf16.mxu0 0
    %1923 = vmatpush1.bf16.xpose.msra.mxu0 0
    %1924 = vmatprep.subr.bf16.mxu0 0
    %1925 = vmatpush1.bf16.xpose.msra.mxu0 0
    %1926 = vmatprep.subr.bf16.mxu0 0
    %1927 = vmatpush1.bf16.xpose.msra.mxu0 0
    %1928 = vmatprep.subr.bf16.mxu0 0
    %1929 = vmatpush1.bf16.xpose.msra.mxu0 0
    %1930 = vmatprep.subr.bf16.mxu0 0
    %1931 = vmatpush1.bf16.xpose.msra.mxu0 0
    %1932 = vmatprep.subr.bf16.mxu0 0
    %1933 = vmatpush1.bf16.xpose.msra.mxu0 0
    %1934 = vmatprep.subr.bf16.mxu0 0
    %1935 = vmatpush1.bf16.xpose.msra.mxu0 0
    %1936 = vmatprep.subr.bf16.mxu0 0
    %1937 = vmatpush1.bf16.xpose.msra.mxu0 0
    %1938 = vmatprep.mubr.bf16.mxu0 %v441
    %1939 = vmatmul.mubr.bf16.gmra.mrb[0].mxu0 %v439
    %v1940 = vpop.f32.mrb[0].mxu0
    %v1941 = vadd.f32 %v1901, %v1940
    %v1942 = vpop.f32.mrb[0].mxu0
    %v1943 = vpop.f32.mrb[0].mxu0
    %v1944 = vpop.f32.mrb[0].mxu0
    %1945 = vdwg.mxu0
    %1946 = vmatprep.subr.bf16.mxu0 %v763
    %1947 = vmatpush1.bf16.xpose.msra.mxu0 %v762
    %1948 = vmatprep.subr.bf16.mxu0 0
    %1949 = vmatpush1.bf16.xpose.msra.mxu0 0
    %1950 = vmatprep.subr.bf16.mxu0 0
    %1951 = vmatpush1.bf16.xpose.msra.mxu0 0
    %1952 = vmatprep.subr.bf16.mxu0 0
    %1953 = vmatpush1.bf16.xpose.msra.mxu0 0
    %1954 = vmatprep.subr.bf16.mxu0 0
    %1955 = vmatpush1.bf16.xpose.msra.mxu0 0
    %1956 = vmatprep.subr.bf16.mxu0 0
    %1957 = vmatpush1.bf16.xpose.msra.mxu0 0
    %1958 = vmatprep.subr.bf16.mxu0 0
    %1959 = vmatpush1.bf16.xpose.msra.mxu0 0
    %1960 = vmatprep.subr.bf16.mxu0 0
    %1961 = vmatpush1.bf16.xpose.msra.mxu0 0
    %1962 = vmatprep.subr.bf16.mxu0 0
    %1963 = vmatpush1.bf16.xpose.msra.mxu0 0
    %1964 = vmatprep.subr.bf16.mxu0 0
    %1965 = vmatpush1.bf16.xpose.msra.mxu0 0
    %1966 = vmatprep.subr.bf16.mxu0 0
    %1967 = vmatpush1.bf16.xpose.msra.mxu0 0
    %1968 = vmatprep.subr.bf16.mxu0 0
    %1969 = vmatpush1.bf16.xpose.msra.mxu0 0
    %1970 = vmatprep.subr.bf16.mxu0 0
    %1971 = vmatpush1.bf16.xpose.msra.mxu0 0
    %1972 = vmatprep.subr.bf16.mxu0 0
    %1973 = vmatpush1.bf16.xpose.msra.mxu0 0
    %1974 = vmatprep.subr.bf16.mxu0 0
    %1975 = vmatpush1.bf16.xpose.msra.mxu0 0
    %1976 = vmatprep.subr.bf16.mxu0 0
    %1977 = vmatpush1.bf16.xpose.msra.mxu0 0
    %1978 = vmatprep.mubr.bf16.mxu0 %v463
    %1979 = vmatmul.mubr.bf16.gmra.mrb[0].mxu0 %v456
    %v1980 = vpop.f32.mrb[0].mxu0
    %v1981 = vadd.f32 %v1941, %v1980
    %v1982 = vpop.f32.mrb[0].mxu0
    %v1983 = vpop.f32.mrb[0].mxu0
    %v1984 = vpop.f32.mrb[0].mxu0
    %1985 = vdwg.mxu0
    %1986 = vmatprep.subr.bf16.mxu0 %v765
    %1987 = vmatpush1.bf16.xpose.msra.mxu0 %v764
    %1988 = vmatprep.subr.bf16.mxu0 0
    %1989 = vmatpush1.bf16.xpose.msra.mxu0 0
    %1990 = vmatprep.subr.bf16.mxu0 0
    %1991 = vmatpush1.bf16.xpose.msra.mxu0 0
    %1992 = vmatprep.subr.bf16.mxu0 0
    %1993 = vmatpush1.bf16.xpose.msra.mxu0 0
    %1994 = vmatprep.subr.bf16.mxu0 0
    %1995 = vmatpush1.bf16.xpose.msra.mxu0 0
    %1996 = vmatprep.subr.bf16.mxu0 0
    %1997 = vmatpush1.bf16.xpose.msra.mxu0 0
    %1998 = vmatprep.subr.bf16.mxu0 0
    %1999 = vmatpush1.bf16.xpose.msra.mxu0 0
    %2000 = vmatprep.subr.bf16.mxu0 0
    %2001 = vmatpush1.bf16.xpose.msra.mxu0 0
    %2002 = vmatprep.subr.bf16.mxu0 0
    %2003 = vmatpush1.bf16.xpose.msra.mxu0 0
    %2004 = vmatprep.subr.bf16.mxu0 0
    %2005 = vmatpush1.bf16.xpose.msra.mxu0 0
    %2006 = vmatprep.subr.bf16.mxu0 0
    %2007 = vmatpush1.bf16.xpose.msra.mxu0 0
    %2008 = vmatprep.subr.bf16.mxu0 0
    %2009 = vmatpush1.bf16.xpose.msra.mxu0 0
    %2010 = vmatprep.subr.bf16.mxu0 0
    %2011 = vmatpush1.bf16.xpose.msra.mxu0 0
    %2012 = vmatprep.subr.bf16.mxu0 0
    %2013 = vmatpush1.bf16.xpose.msra.mxu0 0
    %2014 = vmatprep.subr.bf16.mxu0 0
    %2015 = vmatpush1.bf16.xpose.msra.mxu0 0
    %2016 = vmatprep.subr.bf16.mxu0 0
    %2017 = vmatpush1.bf16.xpose.msra.mxu0 0
    %2018 = vmatprep.mubr.bf16.mxu0 %v465
    %2019 = vmatmul.mubr.bf16.gmra.mrb[0].mxu0 %v464
    %v2020 = vpop.f32.mrb[0].mxu0
    %v2021 = vadd.f32 %v1981, %v2020
    %v2022 = vpop.f32.mrb[0].mxu0
    %v2023 = vpop.f32.mrb[0].mxu0
    %v2024 = vpop.f32.mrb[0].mxu0
    %2025 = vdwg.mxu0
    %vm2026 = vcmask 74752
    %v2027 = vsel %vm2026, %v2021, -inf
    %2028 = vmax.xlane.f32.xlu0 %v2027
    %v2029 = vpop.xlane.xlu0 %2028
    %v2030 = vsub.f32 %v2021, %v2029
    %v2031 = vmul.f32 %v2030, 1.442695
    %v2032 = vpow.pop %v2031
    %v2033 = vsel %vm2026, %v2032, 0.0
    %2034 = vadd.xlane.f32.xlu0 %v2033
    %v2035 = vpop.xlane.xlu0 %2034
    %v2036 = vrcp.pop %v2035
    %v2037 = vmul.f32 %v2032, %v2036
    %2038 = vst.msk [vmem:[#allocation2] sm:$0x3] %vm2026, %v2037
    // Predicated region
    $region14: #{convnet_forward.5} parent=1 // pred_check
      _
    $region15: #{convnet_forward.5} parent=1 // pred_check_branch
      %2040 = sbr.rel (0) target = $region17
    $region16: #{convnet_forward.5} parent=1 // pred_region
      %s2042 = ssub.s32 32, 32
      %2043 = vsyncadd [#allocation3], %s2042
      %s2045 = sshll.u32 [#allocation2], 4
      %s2046 = int_to_ptr.vmem [resolvable:$true] %s2045
      %2048 = dma.vmem_to_hbm [thread:$0]  %s2046, 32, %s3, [#allocation3]
    $region17: #{convnet_forward.5} parent=1 // pred_fallthru
      _
    // Predicated region
    $region18: #{convnet_forward.5} parent=1 // pred_check
      _
    $region19: #{convnet_forward.5} parent=1 // pred_check_branch
      %2050 = sbr.rel (0) target = $region21
    $region20: #{convnet_forward.5} parent=1 // pred_region
      %2051 = dma.done [#allocation3], 32
    $region21: #{convnet_forward.5} parent=1 // pred_fallthru
      _
    %2052 = vsyncpa [#allocation3], 1

</llo_original>
